<compile_context>
chip_gen: v7x
topology: tpu7x:2x2x1
jax: 0.10.0
libtpu: 0.0.40
codegen_flags: <defaults>
</compile_context>

<pallas_src>
import functools

import jax
import jax.numpy as jnp
from jax.experimental import pallas as pl
from jax.experimental.pallas import tpu as pltpu

K = 7     # conv kernel size
P = 3     # conv padding
ROWS = 8  # channels per inner VPU step (one f32 sublane tile)


def spatial_attention_kernel(x_ref, w_ref, o_ref, sum_ref, max_ref, pad_ref, *,
                             C, c_tile, H, W):
    """One grid step = (one batch element) x (one channel chunk).

    x_ref  : (1, c_tile, H*W)  lane-dense channel chunk (VMEM)
    w_ref  : (2*K*K,)          conv taps, scalars in SMEM
    o_ref  : (1, 1, H*W)       lane-dense attention map (written on last chunk)
    sum_ref: (1, H*W) f32      running channel sum  (VMEM scratch)
    max_ref: (1, H*W) f32      running channel max  (VMEM scratch)
    pad_ref: (2, H+2P, W+2P)   zero-halo conv scratch (VMEM)
    """
    HW = H * W
    c_idx = pl.program_id(1)
    n_c = pl.num_programs(1)

    # ---- init running accumulators at the first channel chunk of each image.
    @pl.when(c_idx == 0)
    def _init():
        sum_ref[...] = jnp.zeros_like(sum_ref)
        max_ref[...] = jnp.full_like(max_ref, -jnp.inf)

    # ---- channel reduction on the lane-dense (c_tile, H*W) chunk.
    # Elementwise (ROWS, HW) accumulators -> one cross-sublane reduce per chunk.
    need_mask = (C % c_tile) != 0   # last/padded chunk contains garbage rows

    def body(g, carry):
        s, m = carry
        r0 = pl.multiple_of(g * ROWS, ROWS)
        blk = x_ref[0, pl.ds(r0, ROWS), :].astype(jnp.float32)   # (ROWS, HW)
        if need_mask:
            ch = (c_idx * c_tile + r0
                  + jax.lax.broadcasted_iota(jnp.int32, (ROWS, HW), 0))
            valid = ch < C
            s = s + jnp.where(valid, blk, 0.0)
            m = jnp.maximum(m, jnp.where(valid, blk, -jnp.inf))
        else:
            s = s + blk
            m = jnp.maximum(m, blk)
        return s, m

    n_groups = c_tile // ROWS
    s0 = jnp.zeros((ROWS, HW), jnp.float32)
    m0 = jnp.full((ROWS, HW), -jnp.inf, jnp.float32)
    s, m = jax.lax.fori_loop(0, n_groups, body, (s0, m0),
                             unroll=True if n_groups <= 8 else 8)

    sum_ref[...] = sum_ref[...] + jnp.sum(s, axis=0, keepdims=True)
    max_ref[...] = jnp.maximum(max_ref[...], jnp.max(m, axis=0, keepdims=True))

    # ---- finalize: reform pooled maps, 7x7 conv, sigmoid (once per image).
    @pl.when(c_idx == n_c - 1)
    def _finalize():
        inv_c = jnp.float32(1.0 / C)

        # Zero only the 3-wide halo border (interior is fully overwritten below).
        # Done every image: per-core scratch is uninitialized under megacore
        # 'parallel' sharding, so a one-time program_id==0 init would be wrong.
        for cin in range(2):
            pad_ref[cin, 0:P, :] = jnp.zeros((P, W + 2 * P), jnp.float32)
            pad_ref[cin, P + H:H + 2 * P, :] = jnp.zeros((P, W + 2 * P), jnp.float32)
            pad_ref[cin, :, 0:P] = jnp.zeros((H + 2 * P, P), jnp.float32)
            pad_ref[cin, :, P + W:W + 2 * P] = jnp.zeros((H + 2 * P, P), jnp.float32)

        # Reform the two tiny flat pooled maps into the 2-D padded conv scratch.
        for h in range(H):
            cols = slice(h * W, (h + 1) * W)
            pad_ref[0, P + h:P + h + 1, P:P + W] = sum_ref[:, cols] * inv_c
            pad_ref[1, P + h:P + h + 1, P:P + W] = max_ref[:, cols]

        # 7x7 conv (2 -> 1 channel, no bias): 98 scalar-broadcast FMAs on the VPU.
        # kw lane-shift hoisted out of the kh loop: 14 lane slices instead of 98.
        acc = jnp.zeros((H, W), jnp.float32)
        for cin in range(2):
            for kw in range(K):
                col = pad_ref[cin, :, kw:kw + W]              # (H+2P, W), one lane shift
                for kh in range(K):
                    tap = w_ref[cin * K * K + kh * K + kw]    # scalar from SMEM
                    acc = acc + col[kh:kh + H, :] * tap

        # Exact sigmoid (exp runs on the otherwise-idle EUP slot).
        out = 1.0 / (1.0 + jnp.exp(-acc))

        # Store into the lane-dense (1, 1, H*W) output block, row by row.
        for h in range(H):
            o_ref[0, :, h * W:(h + 1) * W] = out[h:h + 1, :].astype(o_ref.dtype)


def spatial_attention_forward(x, weight):
    """x: (B, C, H, W); weight: (1, 2, K, K) (PyTorch OIHW). Returns (B, 1, H, W)."""
    B, C, H, W = x.shape
    assert weight.shape == (1, 2, K, K)
    HW = H * W
    itemsize = jnp.dtype(x.dtype).itemsize

    # Lane-dense spatial layout: metadata-only reshape on a contiguous array.
    x_flat = x.reshape(B, C, HW)
    w_flat = weight.reshape(2 * K * K).astype(jnp.float32)   # row-major: cin, kh, kw

    # Channel chunk: multiple of 8 sublanes, bounded so one double-buffered input
    # block stays well inside v7x's smaller VMEM; v5e/v6e just get larger chunks.
    per_buf_budget = 8 * 1024 * 1024
    max_c_tile = max(ROWS, min(256, (per_buf_budget // max(1, HW * itemsize)) // ROWS * ROWS))
    c_tile = min(C, max_c_tile)
    c_tile = ((c_tile + ROWS - 1) // ROWS) * ROWS
    n_c = pl.cdiv(C, c_tile)

    scratch_bytes = 4 * (2 * HW + 2 * (H + 2 * P) * (W + 2 * P))
    needed = 2 * c_tile * HW * itemsize + 2 * HW * itemsize + scratch_bytes
    vmem_limit = int(min(max(4 * needed, 16 * 1024 * 1024), 96 * 1024 * 1024))

    kernel = functools.partial(spatial_attention_kernel,
                               C=C, c_tile=c_tile, H=H, W=W)

    out_flat = pl.pallas_call(
        kernel,
        out_shape=jax.ShapeDtypeStruct((B, 1, HW), x.dtype),
        grid_spec=pltpu.PrefetchScalarGridSpec(
            num_scalar_prefetch=0,
            grid=(B, n_c),                                 # reduction (channel) axis last
            in_specs=[
                pl.BlockSpec((1, c_tile, HW), lambda b, c: (b, c, 0)),
                pl.BlockSpec(memory_space=pltpu.MemorySpace.SMEM),
            ],
            out_specs=pl.BlockSpec((1, 1, HW), lambda b, c: (b, 0, 0)),
            scratch_shapes=[
                pltpu.VMEM((1, HW), jnp.float32),                      # running sum
                pltpu.VMEM((1, HW), jnp.float32),                      # running max
                pltpu.VMEM((2, H + 2 * P, W + 2 * P), jnp.float32),    # conv halo
            ],
        ),
        compiler_params=pltpu.CompilerParams(
            # Batch axis parallel (megacore / v7x 2-TC); channel chunks sequential.
            dimension_semantics=("parallel", "arbitrary"),
            vmem_limit_bytes=vmem_limit,
        ),
    )(x_flat, w_flat)

    return out_flat.reshape(B, 1, H, W)


def spatial_attention_reference(x, weight):
    """Pure-JAX reference (same shifted-slice math) for the correctness check."""
    B, C, H, W = x.shape
    xf = x.astype(jnp.float32)
    avg = jnp.mean(xf, axis=1)                                  # (B, H, W)
    mx = jnp.max(xf, axis=1)                                    # (B, H, W)
    y = jnp.stack([avg, mx], axis=1)                            # (B, 2, H, W)
    ypad = jnp.pad(y, ((0, 0), (0, 0), (P, P), (P, P)))
    w = weight.astype(jnp.float32)
    acc = jnp.zeros((B, H, W), jnp.float32)
    for cin in range(2):
        for kh in range(K):
            for kw in range(K):
                acc = acc + ypad[:, cin, kh:kh + H, kw:kw + W] * w[0, cin, kh, kw]
    out = 1.0 / (1.0 + jnp.exp(-acc))
    return out[:, None, :, :].astype(x.dtype)


if __name__ == "__main__":
    # Small shapes consistent with the forward: x is (B, C, H, W).
    B, C, H, W = 2, 32, 16, 16

    key = jax.random.PRNGKey(0)
    kx, kw = jax.random.split(key, 2)

    x = jax.random.normal(kx, (B, C, H, W), dtype=jnp.float32)
    # Deterministic synthetic Conv2d(2, 1, 7, bias=False) weight, OIHW like PyTorch.
    bound = 1.0 / (2.0 * K * K) ** 0.5
    weight = jax.random.uniform(kw, (1, 2, K, K), minval=-bound, maxval=bound,
                                dtype=jnp.float32)

    out = spatial_attention_forward(x, weight)
    out = jax.block_until_ready(out)

    ref = spatial_attention_reference(x, weight)
    assert out.shape == (B, 1, H, W)
    assert jnp.allclose(out, ref, atol=1e-5, rtol=1e-5)

    print("KERNEL_OK")
</pallas_src>

<mosaic_0001>
module attributes {stable_mosaic.version = 11 : i64} {
  func.func @spatial_attention_kernel(%arg0: i32, %arg1: i32, %arg2: memref<1x32x256xf32, #tpu.memory_space<vmem>>, %arg3: memref<98xf32, #tpu.memory_space<smem>>, %arg4: memref<1x1x256xf32, #tpu.memory_space<vmem>>, %arg5: memref<1x256xf32, #tpu.memory_space<vmem>>, %arg6: memref<1x256xf32, #tpu.memory_space<vmem>>, %arg7: memref<2x22x22xf32, #tpu.memory_space<vmem>>) attributes {dimension_semantics = [#tpu.dimension_semantics<parallel>, #tpu.dimension_semantics<arbitrary>], iteration_bounds = array<i64: 2, 1>, scalar_prefetch = 0 : i64, scratch_operands = 3 : i64, tpu.core_type = #tpu.core_type<tc>, window_params = [{transform_indices = @transform_0, window_bounds = array<i64: 1, 32, 256>}, {transform_indices = @transform_1, window_bounds = array<i64: 98>}, {transform_indices = @transform_2, window_bounds = array<i64: 1, 1, 256>}]} {
    %c0_i32 = arith.constant 0 : i32
    %0 = arith.cmpi eq, %arg1, %c0_i32 : i32
    %1 = arith.extui %0 : i1 to i32
    %c0_i32_0 = arith.constant 0 : i32
    %2 = arith.cmpi ne, %1, %c0_i32_0 : i32
    scf.if %2 {
      %cst_25 = arith.constant 0.000000e+00 : f32
      %46 = vector.broadcast %cst_25 : f32 to vector<1x256xf32>
      %c0_26 = arith.constant 0 : index
      %c0_27 = arith.constant 0 : index
      %47 = vector.load %arg5[%c0_26, %c0_27] : memref<1x256xf32, #tpu.memory_space<vmem>>, vector<1x256xf32>
      tpu.vector_store %arg5[%c0_26, %c0_27], %46 {strides = array<i32>} : memref<1x256xf32, #tpu.memory_space<vmem>>, vector<1x256xf32>,
      %cst_28 = arith.constant 0xFF800000 : f32
      %48 = vector.broadcast %cst_28 : f32 to vector<1x256xf32>
      %c0_29 = arith.constant 0 : index
      %c0_30 = arith.constant 0 : index
      %49 = vector.load %arg6[%c0_29, %c0_30] : memref<1x256xf32, #tpu.memory_space<vmem>>, vector<1x256xf32>
      tpu.vector_store %arg6[%c0_29, %c0_30], %48 {strides = array<i32>} : memref<1x256xf32, #tpu.memory_space<vmem>>, vector<1x256xf32>,
    } else {
    }
    %cst = arith.constant 0.000000e+00 : f32
    %3 = vector.broadcast %cst : f32 to vector<8x256xf32>
    %cst_1 = arith.constant 0xFF800000 : f32
    %4 = vector.broadcast %cst_1 : f32 to vector<8x256xf32>
    %c0_i32_2 = arith.constant 0 : i32
    %c8_i32 = arith.constant 8 : i32
    %5 = arith.muli %c0_i32_2, %c8_i32 : i32
    %6 = tpu.assume_multiple %5, 8 : i32
    %c0 = arith.constant 0 : index
    %7 = arith.index_cast %6 : i32 to index
    %c0_3 = arith.constant 0 : index
    %8 = vector.load %arg2[%c0, %7, %c0_3] : memref<1x32x256xf32, #tpu.memory_space<vmem>>, vector<1x8x256xf32>
    %9 = vector.shape_cast %8 : vector<1x8x256xf32> to vector<8x256xf32>
    %10 = arith.addf %3, %9 : vector<8x256xf32>
    %11 = arith.maximumf %4, %9 : vector<8x256xf32>
    %c1_i32 = arith.constant 1 : i32
    %c8_i32_4 = arith.constant 8 : i32
    %12 = arith.muli %c1_i32, %c8_i32_4 : i32
    %13 = tpu.assume_multiple %12, 8 : i32
    %c0_5 = arith.constant 0 : index
    %14 = arith.index_cast %13 : i32 to index
    %c0_6 = arith.constant 0 : index
    %15 = vector.load %arg2[%c0_5, %14, %c0_6] : memref<1x32x256xf32, #tpu.memory_space<vmem>>, vector<1x8x256xf32>
    %16 = vector.shape_cast %15 : vector<1x8x256xf32> to vector<8x256xf32>
    %17 = arith.addf %10, %16 : vector<8x256xf32>
    %18 = arith.maximumf %11, %16 : vector<8x256xf32>
    %c2_i32 = arith.constant 2 : i32
    %c8_i32_7 = arith.constant 8 : i32
    %19 = arith.muli %c2_i32, %c8_i32_7 : i32
    %20 = tpu.assume_multiple %19, 8 : i32
    %c0_8 = arith.constant 0 : index
    %21 = arith.index_cast %20 : i32 to index
    %c0_9 = arith.constant 0 : index
    %22 = vector.load %arg2[%c0_8, %21, %c0_9] : memref<1x32x256xf32, #tpu.memory_space<vmem>>, vector<1x8x256xf32>
    %23 = vector.shape_cast %22 : vector<1x8x256xf32> to vector<8x256xf32>
    %24 = arith.addf %17, %23 : vector<8x256xf32>
    %25 = arith.maximumf %18, %23 : vector<8x256xf32>
    %c3_i32 = arith.constant 3 : i32
    %c8_i32_10 = arith.constant 8 : i32
    %26 = arith.muli %c3_i32, %c8_i32_10 : i32
    %27 = tpu.assume_multiple %26, 8 : i32
    %c0_11 = arith.constant 0 : index
    %28 = arith.index_cast %27 : i32 to index
    %c0_12 = arith.constant 0 : index
    %29 = vector.load %arg2[%c0_11, %28, %c0_12] : memref<1x32x256xf32, #tpu.memory_space<vmem>>, vector<1x8x256xf32>
    %30 = vector.shape_cast %29 : vector<1x8x256xf32> to vector<8x256xf32>
    %31 = arith.addf %24, %30 : vector<8x256xf32>
    %32 = arith.maximumf %25, %30 : vector<8x256xf32>
    %c4_i32 = arith.constant 4 : i32
    %c0_13 = arith.constant 0 : index
    %c0_14 = arith.constant 0 : index
    %33 = vector.load %arg5[%c0_13, %c0_14] : memref<1x256xf32, #tpu.memory_space<vmem>>, vector<1x256xf32>
    %cst_15 = arith.constant dense<0.000000e+00> : vector<256xf32>
    %34 = vector.multi_reduction <add>, %31, %cst_15 [0] : vector<8x256xf32> to vector<256xf32>
    %35 = vector.shape_cast %34 : vector<256xf32> to vector<1x256xf32>
    %36 = arith.addf %33, %35 : vector<1x256xf32>
    %c0_16 = arith.constant 0 : index
    %c0_17 = arith.constant 0 : index
    %37 = vector.load %arg5[%c0_16, %c0_17] : memref<1x256xf32, #tpu.memory_space<vmem>>, vector<1x256xf32>
    tpu.vector_store %arg5[%c0_16, %c0_17], %36 {strides = array<i32>} : memref<1x256xf32, #tpu.memory_space<vmem>>, vector<1x256xf32>,
    %c0_18 = arith.constant 0 : index
    %c0_19 = arith.constant 0 : index
    %38 = vector.load %arg6[%c0_18, %c0_19] : memref<1x256xf32, #tpu.memory_space<vmem>>, vector<1x256xf32>
    %cst_20 = arith.constant dense<0xFF800000> : vector<256xf32>
    %39 = vector.multi_reduction <maximumf>, %32, %cst_20 [0] : vector<8x256xf32> to vector<256xf32>
    %40 = vector.shape_cast %39 : vector<256xf32> to vector<1x256xf32>
    %41 = arith.maximumf %38, %40 : vector<1x256xf32>
    %c0_21 = arith.constant 0 : index
    %c0_22 = arith.constant 0 : index
    %42 = vector.load %arg6[%c0_21, %c0_22] : memref<1x256xf32, #tpu.memory_space<vmem>>, vector<1x256xf32>
    tpu.vector_store %arg6[%c0_21, %c0_22], %41 {strides = array<i32>} : memref<1x256xf32, #tpu.memory_space<vmem>>, vector<1x256xf32>,
    %c0_i32_23 = arith.constant 0 : i32
    %43 = arith.cmpi eq, %arg1, %c0_i32_23 : i32
    %44 = arith.extui %43 : i1 to i32
    %c0_i32_24 = arith.constant 0 : i32
    %45 = arith.cmpi ne, %44, %c0_i32_24 : i32
    scf.if %45 {
      %cst_25 = arith.constant 0.000000e+00 : f32
      %46 = vector.broadcast %cst_25 : f32 to vector<3x22xf32>
      %c0_26 = arith.constant 0 : index
      %c0_27 = arith.constant 0 : index
      %c0_28 = arith.constant 0 : index
      %47 = vector.load %arg7[%c0_26, %c0_27, %c0_28] : memref<2x22x22xf32, #tpu.memory_space<vmem>>, vector<1x3x22xf32>
      %48 = vector.shape_cast %47 : vector<1x3x22xf32> to vector<3x22xf32>
      %49 = vector.shape_cast %46 : vector<3x22xf32> to vector<1x3x22xf32>
      tpu.vector_store %arg7[%c0_26, %c0_27, %c0_28], %49 {strides = array<i32>} : memref<2x22x22xf32, #tpu.memory_space<vmem>>, vector<1x3x22xf32>,
      %cst_29 = arith.constant 0.000000e+00 : f32
      %50 = vector.broadcast %cst_29 : f32 to vector<3x22xf32>
      %c0_30 = arith.constant 0 : index
      %c19 = arith.constant 19 : index
      %c0_31 = arith.constant 0 : index
      %51 = vector.load %arg7[%c0_30, %c19, %c0_31] : memref<2x22x22xf32, #tpu.memory_space<vmem>>, vector<1x3x22xf32>
      %52 = vector.shape_cast %51 : vector<1x3x22xf32> to vector<3x22xf32>
      %53 = vector.shape_cast %50 : vector<3x22xf32> to vector<1x3x22xf32>
      tpu.vector_store %arg7[%c0_30, %c19, %c0_31], %53 {strides = array<i32>} : memref<2x22x22xf32, #tpu.memory_space<vmem>>, vector<1x3x22xf32>,
      %cst_32 = arith.constant 0.000000e+00 : f32
      %54 = vector.broadcast %cst_32 : f32 to vector<22x3xf32>
      %c0_33 = arith.constant 0 : index
      %c0_34 = arith.constant 0 : index
      %c0_35 = arith.constant 0 : index
      %55 = vector.load %arg7[%c0_33, %c0_34, %c0_35] : memref<2x22x22xf32, #tpu.memory_space<vmem>>, vector<1x22x3xf32>
      %56 = vector.shape_cast %55 : vector<1x22x3xf32> to vector<22x3xf32>
      %57 = vector.shape_cast %54 : vector<22x3xf32> to vector<1x22x3xf32>
      tpu.vector_store %arg7[%c0_33, %c0_34, %c0_35], %57 {strides = array<i32>} : memref<2x22x22xf32, #tpu.memory_space<vmem>>, vector<1x22x3xf32>,
      %cst_36 = arith.constant 0.000000e+00 : f32
      %58 = vector.broadcast %cst_36 : f32 to vector<22x3xf32>
      %c0_37 = arith.constant 0 : index
      %c0_38 = arith.constant 0 : index
      %c19_39 = arith.constant 19 : index
      %59 = vector.load %arg7[%c0_37, %c0_38, %c19_39] : memref<2x22x22xf32, #tpu.memory_space<vmem>>, vector<1x22x3xf32>
      %60 = vector.shape_cast %59 : vector<1x22x3xf32> to vector<22x3xf32>
      %61 = vector.shape_cast %58 : vector<22x3xf32> to vector<1x22x3xf32>
      tpu.vector_store %arg7[%c0_37, %c0_38, %c19_39], %61 {strides = array<i32>} : memref<2x22x22xf32, #tpu.memory_space<vmem>>, vector<1x22x3xf32>,
      %cst_40 = arith.constant 0.000000e+00 : f32
      %62 = vector.broadcast %cst_40 : f32 to vector<3x22xf32>
      %c1 = arith.constant 1 : index
      %c0_41 = arith.constant 0 : index
      %c0_42 = arith.constant 0 : index
      %63 = vector.load %arg7[%c1, %c0_41, %c0_42] : memref<2x22x22xf32, #tpu.memory_space<vmem>>, vector<1x3x22xf32>
      %64 = vector.shape_cast %63 : vector<1x3x22xf32> to vector<3x22xf32>
      %65 = vector.shape_cast %62 : vector<3x22xf32> to vector<1x3x22xf32>
      tpu.vector_store %arg7[%c1, %c0_41, %c0_42], %65 {strides = array<i32>} : memref<2x22x22xf32, #tpu.memory_space<vmem>>, vector<1x3x22xf32>,
      %cst_43 = arith.constant 0.000000e+00 : f32
      %66 = vector.broadcast %cst_43 : f32 to vector<3x22xf32>
      %c1_44 = arith.constant 1 : index
      %c19_45 = arith.constant 19 : index
      %c0_46 = arith.constant 0 : index
      %67 = vector.load %arg7[%c1_44, %c19_45, %c0_46] : memref<2x22x22xf32, #tpu.memory_space<vmem>>, vector<1x3x22xf32>
      %68 = vector.shape_cast %67 : vector<1x3x22xf32> to vector<3x22xf32>
      %69 = vector.shape_cast %66 : vector<3x22xf32> to vector<1x3x22xf32>
      tpu.vector_store %arg7[%c1_44, %c19_45, %c0_46], %69 {strides = array<i32>} : memref<2x22x22xf32, #tpu.memory_space<vmem>>, vector<1x3x22xf32>,
      %cst_47 = arith.constant 0.000000e+00 : f32
      %70 = vector.broadcast %cst_47 : f32 to vector<22x3xf32>
      %c1_48 = arith.constant 1 : index
      %c0_49 = arith.constant 0 : index
      %c0_50 = arith.constant 0 : index
      %71 = vector.load %arg7[%c1_48, %c0_49, %c0_50] : memref<2x22x22xf32, #tpu.memory_space<vmem>>, vector<1x22x3xf32>
      %72 = vector.shape_cast %71 : vector<1x22x3xf32> to vector<22x3xf32>
      %73 = vector.shape_cast %70 : vector<22x3xf32> to vector<1x22x3xf32>
      tpu.vector_store %arg7[%c1_48, %c0_49, %c0_50], %73 {strides = array<i32>} : memref<2x22x22xf32, #tpu.memory_space<vmem>>, vector<1x22x3xf32>,
      %cst_51 = arith.constant 0.000000e+00 : f32
      %74 = vector.broadcast %cst_51 : f32 to vector<22x3xf32>
      %c1_52 = arith.constant 1 : index
      %c0_53 = arith.constant 0 : index
      %c19_54 = arith.constant 19 : index
      %75 = vector.load %arg7[%c1_52, %c0_53, %c19_54] : memref<2x22x22xf32, #tpu.memory_space<vmem>>, vector<1x22x3xf32>
      %76 = vector.shape_cast %75 : vector<1x22x3xf32> to vector<22x3xf32>
      %77 = vector.shape_cast %74 : vector<22x3xf32> to vector<1x22x3xf32>
      tpu.vector_store %arg7[%c1_52, %c0_53, %c19_54], %77 {strides = array<i32>} : memref<2x22x22xf32, #tpu.memory_space<vmem>>, vector<1x22x3xf32>,
      %c0_55 = arith.constant 0 : index
      %c0_56 = arith.constant 0 : index
      %78 = vector.load %arg5[%c0_55, %c0_56] : memref<1x256xf32, #tpu.memory_space<vmem>>, vector<1x16xf32>
      %cst_57 = arith.constant 3.125000e-02 : f32
      %79 = vector.broadcast %cst_57 : f32 to vector<1x16xf32>
      %80 = arith.mulf %78, %79 : vector<1x16xf32>
      %c0_58 = arith.constant 0 : index
      %c3 = arith.constant 3 : index
      %c3_59 = arith.constant 3 : index
      %81 = vector.load %arg7[%c0_58, %c3, %c3_59] : memref<2x22x22xf32, #tpu.memory_space<vmem>>, vector<1x1x16xf32>
      %82 = vector.shape_cast %81 : vector<1x1x16xf32> to vector<1x16xf32>
      %83 = vector.shape_cast %80 : vector<1x16xf32> to vector<1x1x16xf32>
      tpu.vector_store %arg7[%c0_58, %c3, %c3_59], %83 {strides = array<i32>} : memref<2x22x22xf32, #tpu.memory_space<vmem>>, vector<1x1x16xf32>,
      %c0_60 = arith.constant 0 : index
      %c0_61 = arith.constant 0 : index
      %84 = vector.load %arg6[%c0_60, %c0_61] : memref<1x256xf32, #tpu.memory_space<vmem>>, vector<1x16xf32>
      %c1_62 = arith.constant 1 : index
      %c3_63 = arith.constant 3 : index
      %c3_64 = arith.constant 3 : index
      %85 = vector.load %arg7[%c1_62, %c3_63, %c3_64] : memref<2x22x22xf32, #tpu.memory_space<vmem>>, vector<1x1x16xf32>
      %86 = vector.shape_cast %85 : vector<1x1x16xf32> to vector<1x16xf32>
      %87 = vector.shape_cast %84 : vector<1x16xf32> to vector<1x1x16xf32>
      tpu.vector_store %arg7[%c1_62, %c3_63, %c3_64], %87 {strides = array<i32>} : memref<2x22x22xf32, #tpu.memory_space<vmem>>, vector<1x1x16xf32>,
      %c0_65 = arith.constant 0 : index
      %c16 = arith.constant 16 : index
      %88 = vector.load %arg5[%c0_65, %c16] : memref<1x256xf32, #tpu.memory_space<vmem>>, vector<1x16xf32>
      %cst_66 = arith.constant 3.125000e-02 : f32
      %89 = vector.broadcast %cst_66 : f32 to vector<1x16xf32>
      %90 = arith.mulf %88, %89 : vector<1x16xf32>
      %c0_67 = arith.constant 0 : index
      %c4 = arith.constant 4 : index
      %c3_68 = arith.constant 3 : index
      %91 = vector.load %arg7[%c0_67, %c4, %c3_68] : memref<2x22x22xf32, #tpu.memory_space<vmem>>, vector<1x1x16xf32>
      %92 = vector.shape_cast %91 : vector<1x1x16xf32> to vector<1x16xf32>
      %93 = vector.shape_cast %90 : vector<1x16xf32> to vector<1x1x16xf32>
      tpu.vector_store %arg7[%c0_67, %c4, %c3_68], %93 {strides = array<i32>} : memref<2x22x22xf32, #tpu.memory_space<vmem>>, vector<1x1x16xf32>,
      %c0_69 = arith.constant 0 : index
      %c16_70 = arith.constant 16 : index
      %94 = vector.load %arg6[%c0_69, %c16_70] : memref<1x256xf32, #tpu.memory_space<vmem>>, vector<1x16xf32>
      %c1_71 = arith.constant 1 : index
      %c4_72 = arith.constant 4 : index
      %c3_73 = arith.constant 3 : index
      %95 = vector.load %arg7[%c1_71, %c4_72, %c3_73] : memref<2x22x22xf32, #tpu.memory_space<vmem>>, vector<1x1x16xf32>
      %96 = vector.shape_cast %95 : vector<1x1x16xf32> to vector<1x16xf32>
      %97 = vector.shape_cast %94 : vector<1x16xf32> to vector<1x1x16xf32>
      tpu.vector_store %arg7[%c1_71, %c4_72, %c3_73], %97 {strides = array<i32>} : memref<2x22x22xf32, #tpu.memory_space<vmem>>, vector<1x1x16xf32>,
      %c0_74 = arith.constant 0 : index
      %c32 = arith.constant 32 : index
      %98 = vector.load %arg5[%c0_74, %c32] : memref<1x256xf32, #tpu.memory_space<vmem>>, vector<1x16xf32>
      %cst_75 = arith.constant 3.125000e-02 : f32
      %99 = vector.broadcast %cst_75 : f32 to vector<1x16xf32>
      %100 = arith.mulf %98, %99 : vector<1x16xf32>
      %c0_76 = arith.constant 0 : index
      %c5 = arith.constant 5 : index
      %c3_77 = arith.constant 3 : index
      %101 = vector.load %arg7[%c0_76, %c5, %c3_77] : memref<2x22x22xf32, #tpu.memory_space<vmem>>, vector<1x1x16xf32>
      %102 = vector.shape_cast %101 : vector<1x1x16xf32> to vector<1x16xf32>
      %103 = vector.shape_cast %100 : vector<1x16xf32> to vector<1x1x16xf32>
      tpu.vector_store %arg7[%c0_76, %c5, %c3_77], %103 {strides = array<i32>} : memref<2x22x22xf32, #tpu.memory_space<vmem>>, vector<1x1x16xf32>,
      %c0_78 = arith.constant 0 : index
      %c32_79 = arith.constant 32 : index
      %104 = vector.load %arg6[%c0_78, %c32_79] : memref<1x256xf32, #tpu.memory_space<vmem>>, vector<1x16xf32>
      %c1_80 = arith.constant 1 : index
      %c5_81 = arith.constant 5 : index
      %c3_82 = arith.constant 3 : index
      %105 = vector.load %arg7[%c1_80, %c5_81, %c3_82] : memref<2x22x22xf32, #tpu.memory_space<vmem>>, vector<1x1x16xf32>
      %106 = vector.shape_cast %105 : vector<1x1x16xf32> to vector<1x16xf32>
      %107 = vector.shape_cast %104 : vector<1x16xf32> to vector<1x1x16xf32>
      tpu.vector_store %arg7[%c1_80, %c5_81, %c3_82], %107 {strides = array<i32>} : memref<2x22x22xf32, #tpu.memory_space<vmem>>, vector<1x1x16xf32>,
      %c0_83 = arith.constant 0 : index
      %c48 = arith.constant 48 : index
      %108 = vector.load %arg5[%c0_83, %c48] : memref<1x256xf32, #tpu.memory_space<vmem>>, vector<1x16xf32>
      %cst_84 = arith.constant 3.125000e-02 : f32
      %109 = vector.broadcast %cst_84 : f32 to vector<1x16xf32>
      %110 = arith.mulf %108, %109 : vector<1x16xf32>
      %c0_85 = arith.constant 0 : index
      %c6 = arith.constant 6 : index
      %c3_86 = arith.constant 3 : index
      %111 = vector.load %arg7[%c0_85, %c6, %c3_86] : memref<2x22x22xf32, #tpu.memory_space<vmem>>, vector<1x1x16xf32>
      %112 = vector.shape_cast %111 : vector<1x1x16xf32> to vector<1x16xf32>
      %113 = vector.shape_cast %110 : vector<1x16xf32> to vector<1x1x16xf32>
      tpu.vector_store %arg7[%c0_85, %c6, %c3_86], %113 {strides = array<i32>} : memref<2x22x22xf32, #tpu.memory_space<vmem>>, vector<1x1x16xf32>,
      %c0_87 = arith.constant 0 : index
      %c48_88 = arith.constant 48 : index
      %114 = vector.load %arg6[%c0_87, %c48_88] : memref<1x256xf32, #tpu.memory_space<vmem>>, vector<1x16xf32>
      %c1_89 = arith.constant 1 : index
      %c6_90 = arith.constant 6 : index
      %c3_91 = arith.constant 3 : index
      %115 = vector.load %arg7[%c1_89, %c6_90, %c3_91] : memref<2x22x22xf32, #tpu.memory_space<vmem>>, vector<1x1x16xf32>
      %116 = vector.shape_cast %115 : vector<1x1x16xf32> to vector<1x16xf32>
      %117 = vector.shape_cast %114 : vector<1x16xf32> to vector<1x1x16xf32>
      tpu.vector_store %arg7[%c1_89, %c6_90, %c3_91], %117 {strides = array<i32>} : memref<2x22x22xf32, #tpu.memory_space<vmem>>, vector<1x1x16xf32>,
      %c0_92 = arith.constant 0 : index
      %c64 = arith.constant 64 : index
      %118 = vector.load %arg5[%c0_92, %c64] : memref<1x256xf32, #tpu.memory_space<vmem>>, vector<1x16xf32>
      %cst_93 = arith.constant 3.125000e-02 : f32
      %119 = vector.broadcast %cst_93 : f32 to vector<1x16xf32>
      %120 = arith.mulf %118, %119 : vector<1x16xf32>
      %c0_94 = arith.constant 0 : index
      %c7 = arith.constant 7 : index
      %c3_95 = arith.constant 3 : index
      %121 = vector.load %arg7[%c0_94, %c7, %c3_95] : memref<2x22x22xf32, #tpu.memory_space<vmem>>, vector<1x1x16xf32>
      %122 = vector.shape_cast %121 : vector<1x1x16xf32> to vector<1x16xf32>
      %123 = vector.shape_cast %120 : vector<1x16xf32> to vector<1x1x16xf32>
      tpu.vector_store %arg7[%c0_94, %c7, %c3_95], %123 {strides = array<i32>} : memref<2x22x22xf32, #tpu.memory_space<vmem>>, vector<1x1x16xf32>,
      %c0_96 = arith.constant 0 : index
      %c64_97 = arith.constant 64 : index
      %124 = vector.load %arg6[%c0_96, %c64_97] : memref<1x256xf32, #tpu.memory_space<vmem>>, vector<1x16xf32>
      %c1_98 = arith.constant 1 : index
      %c7_99 = arith.constant 7 : index
      %c3_100 = arith.constant 3 : index
      %125 = vector.load %arg7[%c1_98, %c7_99, %c3_100] : memref<2x22x22xf32, #tpu.memory_space<vmem>>, vector<1x1x16xf32>
      %126 = vector.shape_cast %125 : vector<1x1x16xf32> to vector<1x16xf32>
      %127 = vector.shape_cast %124 : vector<1x16xf32> to vector<1x1x16xf32>
      tpu.vector_store %arg7[%c1_98, %c7_99, %c3_100], %127 {strides = array<i32>} : memref<2x22x22xf32, #tpu.memory_space<vmem>>, vector<1x1x16xf32>,
      %c0_101 = arith.constant 0 : index
      %c80 = arith.constant 80 : index
      %128 = vector.load %arg5[%c0_101, %c80] : memref<1x256xf32, #tpu.memory_space<vmem>>, vector<1x16xf32>
      %cst_102 = arith.constant 3.125000e-02 : f32
      %129 = vector.broadcast %cst_102 : f32 to vector<1x16xf32>
      %130 = arith.mulf %128, %129 : vector<1x16xf32>
      %c0_103 = arith.constant 0 : index
      %c8 = arith.constant 8 : index
      %c3_104 = arith.constant 3 : index
      %131 = vector.load %arg7[%c0_103, %c8, %c3_104] : memref<2x22x22xf32, #tpu.memory_space<vmem>>, vector<1x1x16xf32>
      %132 = vector.shape_cast %131 : vector<1x1x16xf32> to vector<1x16xf32>
      %133 = vector.shape_cast %130 : vector<1x16xf32> to vector<1x1x16xf32>
      tpu.vector_store %arg7[%c0_103, %c8, %c3_104], %133 {strides = array<i32>} : memref<2x22x22xf32, #tpu.memory_space<vmem>>, vector<1x1x16xf32>,
      %c0_105 = arith.constant 0 : index
      %c80_106 = arith.constant 80 : index
      %134 = vector.load %arg6[%c0_105, %c80_106] : memref<1x256xf32, #tpu.memory_space<vmem>>, vector<1x16xf32>
      %c1_107 = arith.constant 1 : index
      %c8_108 = arith.constant 8 : index
      %c3_109 = arith.constant 3 : index
      %135 = vector.load %arg7[%c1_107, %c8_108, %c3_109] : memref<2x22x22xf32, #tpu.memory_space<vmem>>, vector<1x1x16xf32>
      %136 = vector.shape_cast %135 : vector<1x1x16xf32> to vector<1x16xf32>
      %137 = vector.shape_cast %134 : vector<1x16xf32> to vector<1x1x16xf32>
      tpu.vector_store %arg7[%c1_107, %c8_108, %c3_109], %137 {strides = array<i32>} : memref<2x22x22xf32, #tpu.memory_space<vmem>>, vector<1x1x16xf32>,
      %c0_110 = arith.constant 0 : index
      %c96 = arith.constant 96 : index
      %138 = vector.load %arg5[%c0_110, %c96] : memref<1x256xf32, #tpu.memory_space<vmem>>, vector<1x16xf32>
      %cst_111 = arith.constant 3.125000e-02 : f32
      %139 = vector.broadcast %cst_111 : f32 to vector<1x16xf32>
      %140 = arith.mulf %138, %139 : vector<1x16xf32>
      %c0_112 = arith.constant 0 : index
      %c9 = arith.constant 9 : index
      %c3_113 = arith.constant 3 : index
      %141 = vector.load %arg7[%c0_112, %c9, %c3_113] : memref<2x22x22xf32, #tpu.memory_space<vmem>>, vector<1x1x16xf32>
      %142 = vector.shape_cast %141 : vector<1x1x16xf32> to vector<1x16xf32>
      %143 = vector.shape_cast %140 : vector<1x16xf32> to vector<1x1x16xf32>
      tpu.vector_store %arg7[%c0_112, %c9, %c3_113], %143 {strides = array<i32>} : memref<2x22x22xf32, #tpu.memory_space<vmem>>, vector<1x1x16xf32>,
      %c0_114 = arith.constant 0 : index
      %c96_115 = arith.constant 96 : index
      %144 = vector.load %arg6[%c0_114, %c96_115] : memref<1x256xf32, #tpu.memory_space<vmem>>, vector<1x16xf32>
      %c1_116 = arith.constant 1 : index
      %c9_117 = arith.constant 9 : index
      %c3_118 = arith.constant 3 : index
      %145 = vector.load %arg7[%c1_116, %c9_117, %c3_118] : memref<2x22x22xf32, #tpu.memory_space<vmem>>, vector<1x1x16xf32>
      %146 = vector.shape_cast %145 : vector<1x1x16xf32> to vector<1x16xf32>
      %147 = vector.shape_cast %144 : vector<1x16xf32> to vector<1x1x16xf32>
      tpu.vector_store %arg7[%c1_116, %c9_117, %c3_118], %147 {strides = array<i32>} : memref<2x22x22xf32, #tpu.memory_space<vmem>>, vector<1x1x16xf32>,
      %c0_119 = arith.constant 0 : index
      %c112 = arith.constant 112 : index
      %148 = vector.load %arg5[%c0_119, %c112] : memref<1x256xf32, #tpu.memory_space<vmem>>, vector<1x16xf32>
      %cst_120 = arith.constant 3.125000e-02 : f32
      %149 = vector.broadcast %cst_120 : f32 to vector<1x16xf32>
      %150 = arith.mulf %148, %149 : vector<1x16xf32>
      %c0_121 = arith.constant 0 : index
      %c10 = arith.constant 10 : index
      %c3_122 = arith.constant 3 : index
      %151 = vector.load %arg7[%c0_121, %c10, %c3_122] : memref<2x22x22xf32, #tpu.memory_space<vmem>>, vector<1x1x16xf32>
      %152 = vector.shape_cast %151 : vector<1x1x16xf32> to vector<1x16xf32>
      %153 = vector.shape_cast %150 : vector<1x16xf32> to vector<1x1x16xf32>
      tpu.vector_store %arg7[%c0_121, %c10, %c3_122], %153 {strides = array<i32>} : memref<2x22x22xf32, #tpu.memory_space<vmem>>, vector<1x1x16xf32>,
      %c0_123 = arith.constant 0 : index
      %c112_124 = arith.constant 112 : index
      %154 = vector.load %arg6[%c0_123, %c112_124] : memref<1x256xf32, #tpu.memory_space<vmem>>, vector<1x16xf32>
      %c1_125 = arith.constant 1 : index
      %c10_126 = arith.constant 10 : index
      %c3_127 = arith.constant 3 : index
      %155 = vector.load %arg7[%c1_125, %c10_126, %c3_127] : memref<2x22x22xf32, #tpu.memory_space<vmem>>, vector<1x1x16xf32>
      %156 = vector.shape_cast %155 : vector<1x1x16xf32> to vector<1x16xf32>
      %157 = vector.shape_cast %154 : vector<1x16xf32> to vector<1x1x16xf32>
      tpu.vector_store %arg7[%c1_125, %c10_126, %c3_127], %157 {strides = array<i32>} : memref<2x22x22xf32, #tpu.memory_space<vmem>>, vector<1x1x16xf32>,
      %c0_128 = arith.constant 0 : index
      %c128 = arith.constant 128 : index
      %158 = vector.load %arg5[%c0_128, %c128] : memref<1x256xf32, #tpu.memory_space<vmem>>, vector<1x16xf32>
      %cst_129 = arith.constant 3.125000e-02 : f32
      %159 = vector.broadcast %cst_129 : f32 to vector<1x16xf32>
      %160 = arith.mulf %158, %159 : vector<1x16xf32>
      %c0_130 = arith.constant 0 : index
      %c11 = arith.constant 11 : index
      %c3_131 = arith.constant 3 : index
      %161 = vector.load %arg7[%c0_130, %c11, %c3_131] : memref<2x22x22xf32, #tpu.memory_space<vmem>>, vector<1x1x16xf32>
      %162 = vector.shape_cast %161 : vector<1x1x16xf32> to vector<1x16xf32>
      %163 = vector.shape_cast %160 : vector<1x16xf32> to vector<1x1x16xf32>
      tpu.vector_store %arg7[%c0_130, %c11, %c3_131], %163 {strides = array<i32>} : memref<2x22x22xf32, #tpu.memory_space<vmem>>, vector<1x1x16xf32>,
      %c0_132 = arith.constant 0 : index
      %c128_133 = arith.constant 128 : index
      %164 = vector.load %arg6[%c0_132, %c128_133] : memref<1x256xf32, #tpu.memory_space<vmem>>, vector<1x16xf32>
      %c1_134 = arith.constant 1 : index
      %c11_135 = arith.constant 11 : index
      %c3_136 = arith.constant 3 : index
      %165 = vector.load %arg7[%c1_134, %c11_135, %c3_136] : memref<2x22x22xf32, #tpu.memory_space<vmem>>, vector<1x1x16xf32>
      %166 = vector.shape_cast %165 : vector<1x1x16xf32> to vector<1x16xf32>
      %167 = vector.shape_cast %164 : vector<1x16xf32> to vector<1x1x16xf32>
      tpu.vector_store %arg7[%c1_134, %c11_135, %c3_136], %167 {strides = array<i32>} : memref<2x22x22xf32, #tpu.memory_space<vmem>>, vector<1x1x16xf32>,
      %c0_137 = arith.constant 0 : index
      %c144 = arith.constant 144 : index
      %168 = vector.load %arg5[%c0_137, %c144] : memref<1x256xf32, #tpu.memory_space<vmem>>, vector<1x16xf32>
      %cst_138 = arith.constant 3.125000e-02 : f32
      %169 = vector.broadcast %cst_138 : f32 to vector<1x16xf32>
      %170 = arith.mulf %168, %169 : vector<1x16xf32>
      %c0_139 = arith.constant 0 : index
      %c12 = arith.constant 12 : index
      %c3_140 = arith.constant 3 : index
      %171 = vector.load %arg7[%c0_139, %c12, %c3_140] : memref<2x22x22xf32, #tpu.memory_space<vmem>>, vector<1x1x16xf32>
      %172 = vector.shape_cast %171 : vector<1x1x16xf32> to vector<1x16xf32>
      %173 = vector.shape_cast %170 : vector<1x16xf32> to vector<1x1x16xf32>
      tpu.vector_store %arg7[%c0_139, %c12, %c3_140], %173 {strides = array<i32>} : memref<2x22x22xf32, #tpu.memory_space<vmem>>, vector<1x1x16xf32>,
      %c0_141 = arith.constant 0 : index
      %c144_142 = arith.constant 144 : index
      %174 = vector.load %arg6[%c0_141, %c144_142] : memref<1x256xf32, #tpu.memory_space<vmem>>, vector<1x16xf32>
      %c1_143 = arith.constant 1 : index
      %c12_144 = arith.constant 12 : index
      %c3_145 = arith.constant 3 : index
      %175 = vector.load %arg7[%c1_143, %c12_144, %c3_145] : memref<2x22x22xf32, #tpu.memory_space<vmem>>, vector<1x1x16xf32>
      %176 = vector.shape_cast %175 : vector<1x1x16xf32> to vector<1x16xf32>
      %177 = vector.shape_cast %174 : vector<1x16xf32> to vector<1x1x16xf32>
      tpu.vector_store %arg7[%c1_143, %c12_144, %c3_145], %177 {strides = array<i32>} : memref<2x22x22xf32, #tpu.memory_space<vmem>>, vector<1x1x16xf32>,
      %c0_146 = arith.constant 0 : index
      %c160 = arith.constant 160 : index
      %178 = vector.load %arg5[%c0_146, %c160] : memref<1x256xf32, #tpu.memory_space<vmem>>, vector<1x16xf32>
      %cst_147 = arith.constant 3.125000e-02 : f32
      %179 = vector.broadcast %cst_147 : f32 to vector<1x16xf32>
      %180 = arith.mulf %178, %179 : vector<1x16xf32>
      %c0_148 = arith.constant 0 : index
      %c13 = arith.constant 13 : index
      %c3_149 = arith.constant 3 : index
      %181 = vector.load %arg7[%c0_148, %c13, %c3_149] : memref<2x22x22xf32, #tpu.memory_space<vmem>>, vector<1x1x16xf32>
      %182 = vector.shape_cast %181 : vector<1x1x16xf32> to vector<1x16xf32>
      %183 = vector.shape_cast %180 : vector<1x16xf32> to vector<1x1x16xf32>
      tpu.vector_store %arg7[%c0_148, %c13, %c3_149], %183 {strides = array<i32>} : memref<2x22x22xf32, #tpu.memory_space<vmem>>, vector<1x1x16xf32>,
      %c0_150 = arith.constant 0 : index
      %c160_151 = arith.constant 160 : index
      %184 = vector.load %arg6[%c0_150, %c160_151] : memref<1x256xf32, #tpu.memory_space<vmem>>, vector<1x16xf32>
      %c1_152 = arith.constant 1 : index
      %c13_153 = arith.constant 13 : index
      %c3_154 = arith.constant 3 : index
      %185 = vector.load %arg7[%c1_152, %c13_153, %c3_154] : memref<2x22x22xf32, #tpu.memory_space<vmem>>, vector<1x1x16xf32>
      %186 = vector.shape_cast %185 : vector<1x1x16xf32> to vector<1x16xf32>
      %187 = vector.shape_cast %184 : vector<1x16xf32> to vector<1x1x16xf32>
      tpu.vector_store %arg7[%c1_152, %c13_153, %c3_154], %187 {strides = array<i32>} : memref<2x22x22xf32, #tpu.memory_space<vmem>>, vector<1x1x16xf32>,
      %c0_155 = arith.constant 0 : index
      %c176 = arith.constant 176 : index
      %188 = vector.load %arg5[%c0_155, %c176] : memref<1x256xf32, #tpu.memory_space<vmem>>, vector<1x16xf32>
      %cst_156 = arith.constant 3.125000e-02 : f32
      %189 = vector.broadcast %cst_156 : f32 to vector<1x16xf32>
      %190 = arith.mulf %188, %189 : vector<1x16xf32>
      %c0_157 = arith.constant 0 : index
      %c14 = arith.constant 14 : index
      %c3_158 = arith.constant 3 : index
      %191 = vector.load %arg7[%c0_157, %c14, %c3_158] : memref<2x22x22xf32, #tpu.memory_space<vmem>>, vector<1x1x16xf32>
      %192 = vector.shape_cast %191 : vector<1x1x16xf32> to vector<1x16xf32>
      %193 = vector.shape_cast %190 : vector<1x16xf32> to vector<1x1x16xf32>
      tpu.vector_store %arg7[%c0_157, %c14, %c3_158], %193 {strides = array<i32>} : memref<2x22x22xf32, #tpu.memory_space<vmem>>, vector<1x1x16xf32>,
      %c0_159 = arith.constant 0 : index
      %c176_160 = arith.constant 176 : index
      %194 = vector.load %arg6[%c0_159, %c176_160] : memref<1x256xf32, #tpu.memory_space<vmem>>, vector<1x16xf32>
      %c1_161 = arith.constant 1 : index
      %c14_162 = arith.constant 14 : index
      %c3_163 = arith.constant 3 : index
      %195 = vector.load %arg7[%c1_161, %c14_162, %c3_163] : memref<2x22x22xf32, #tpu.memory_space<vmem>>, vector<1x1x16xf32>
      %196 = vector.shape_cast %195 : vector<1x1x16xf32> to vector<1x16xf32>
      %197 = vector.shape_cast %194 : vector<1x16xf32> to vector<1x1x16xf32>
      tpu.vector_store %arg7[%c1_161, %c14_162, %c3_163], %197 {strides = array<i32>} : memref<2x22x22xf32, #tpu.memory_space<vmem>>, vector<1x1x16xf32>,
      %c0_164 = arith.constant 0 : index
      %c192 = arith.constant 192 : index
      %198 = vector.load %arg5[%c0_164, %c192] : memref<1x256xf32, #tpu.memory_space<vmem>>, vector<1x16xf32>
      %cst_165 = arith.constant 3.125000e-02 : f32
      %199 = vector.broadcast %cst_165 : f32 to vector<1x16xf32>
      %200 = arith.mulf %198, %199 : vector<1x16xf32>
      %c0_166 = arith.constant 0 : index
      %c15 = arith.constant 15 : index
      %c3_167 = arith.constant 3 : index
      %201 = vector.load %arg7[%c0_166, %c15, %c3_167] : memref<2x22x22xf32, #tpu.memory_space<vmem>>, vector<1x1x16xf32>
      %202 = vector.shape_cast %201 : vector<1x1x16xf32> to vector<1x16xf32>
      %203 = vector.shape_cast %200 : vector<1x16xf32> to vector<1x1x16xf32>
      tpu.vector_store %arg7[%c0_166, %c15, %c3_167], %203 {strides = array<i32>} : memref<2x22x22xf32, #tpu.memory_space<vmem>>, vector<1x1x16xf32>,
      %c0_168 = arith.constant 0 : index
      %c192_169 = arith.constant 192 : index
      %204 = vector.load %arg6[%c0_168, %c192_169] : memref<1x256xf32, #tpu.memory_space<vmem>>, vector<1x16xf32>
      %c1_170 = arith.constant 1 : index
      %c15_171 = arith.constant 15 : index
      %c3_172 = arith.constant 3 : index
      %205 = vector.load %arg7[%c1_170, %c15_171, %c3_172] : memref<2x22x22xf32, #tpu.memory_space<vmem>>, vector<1x1x16xf32>
      %206 = vector.shape_cast %205 : vector<1x1x16xf32> to vector<1x16xf32>
      %207 = vector.shape_cast %204 : vector<1x16xf32> to vector<1x1x16xf32>
      tpu.vector_store %arg7[%c1_170, %c15_171, %c3_172], %207 {strides = array<i32>} : memref<2x22x22xf32, #tpu.memory_space<vmem>>, vector<1x1x16xf32>,
      %c0_173 = arith.constant 0 : index
      %c208 = arith.constant 208 : index
      %208 = vector.load %arg5[%c0_173, %c208] : memref<1x256xf32, #tpu.memory_space<vmem>>, vector<1x16xf32>
      %cst_174 = arith.constant 3.125000e-02 : f32
      %209 = vector.broadcast %cst_174 : f32 to vector<1x16xf32>
      %210 = arith.mulf %208, %209 : vector<1x16xf32>
      %c0_175 = arith.constant 0 : index
      %c16_176 = arith.constant 16 : index
      %c3_177 = arith.constant 3 : index
      %211 = vector.load %arg7[%c0_175, %c16_176, %c3_177] : memref<2x22x22xf32, #tpu.memory_space<vmem>>, vector<1x1x16xf32>
      %212 = vector.shape_cast %211 : vector<1x1x16xf32> to vector<1x16xf32>
      %213 = vector.shape_cast %210 : vector<1x16xf32> to vector<1x1x16xf32>
      tpu.vector_store %arg7[%c0_175, %c16_176, %c3_177], %213 {strides = array<i32>} : memref<2x22x22xf32, #tpu.memory_space<vmem>>, vector<1x1x16xf32>,
      %c0_178 = arith.constant 0 : index
      %c208_179 = arith.constant 208 : index
      %214 = vector.load %arg6[%c0_178, %c208_179] : memref<1x256xf32, #tpu.memory_space<vmem>>, vector<1x16xf32>
      %c1_180 = arith.constant 1 : index
      %c16_181 = arith.constant 16 : index
      %c3_182 = arith.constant 3 : index
      %215 = vector.load %arg7[%c1_180, %c16_181, %c3_182] : memref<2x22x22xf32, #tpu.memory_space<vmem>>, vector<1x1x16xf32>
      %216 = vector.shape_cast %215 : vector<1x1x16xf32> to vector<1x16xf32>
      %217 = vector.shape_cast %214 : vector<1x16xf32> to vector<1x1x16xf32>
      tpu.vector_store %arg7[%c1_180, %c16_181, %c3_182], %217 {strides = array<i32>} : memref<2x22x22xf32, #tpu.memory_space<vmem>>, vector<1x1x16xf32>,
      %c0_183 = arith.constant 0 : index
      %c224 = arith.constant 224 : index
      %218 = vector.load %arg5[%c0_183, %c224] : memref<1x256xf32, #tpu.memory_space<vmem>>, vector<1x16xf32>
      %cst_184 = arith.constant 3.125000e-02 : f32
      %219 = vector.broadcast %cst_184 : f32 to vector<1x16xf32>
      %220 = arith.mulf %218, %219 : vector<1x16xf32>
      %c0_185 = arith.constant 0 : index
      %c17 = arith.constant 17 : index
      %c3_186 = arith.constant 3 : index
      %221 = vector.load %arg7[%c0_185, %c17, %c3_186] : memref<2x22x22xf32, #tpu.memory_space<vmem>>, vector<1x1x16xf32>
      %222 = vector.shape_cast %221 : vector<1x1x16xf32> to vector<1x16xf32>
      %223 = vector.shape_cast %220 : vector<1x16xf32> to vector<1x1x16xf32>
      tpu.vector_store %arg7[%c0_185, %c17, %c3_186], %223 {strides = array<i32>} : memref<2x22x22xf32, #tpu.memory_space<vmem>>, vector<1x1x16xf32>,
      %c0_187 = arith.constant 0 : index
      %c224_188 = arith.constant 224 : index
      %224 = vector.load %arg6[%c0_187, %c224_188] : memref<1x256xf32, #tpu.memory_space<vmem>>, vector<1x16xf32>
      %c1_189 = arith.constant 1 : index
      %c17_190 = arith.constant 17 : index
      %c3_191 = arith.constant 3 : index
      %225 = vector.load %arg7[%c1_189, %c17_190, %c3_191] : memref<2x22x22xf32, #tpu.memory_space<vmem>>, vector<1x1x16xf32>
      %226 = vector.shape_cast %225 : vector<1x1x16xf32> to vector<1x16xf32>
      %227 = vector.shape_cast %224 : vector<1x16xf32> to vector<1x1x16xf32>
      tpu.vector_store %arg7[%c1_189, %c17_190, %c3_191], %227 {strides = array<i32>} : memref<2x22x22xf32, #tpu.memory_space<vmem>>, vector<1x1x16xf32>,
      %c0_192 = arith.constant 0 : index
      %c240 = arith.constant 240 : index
      %228 = vector.load %arg5[%c0_192, %c240] : memref<1x256xf32, #tpu.memory_space<vmem>>, vector<1x16xf32>
      %cst_193 = arith.constant 3.125000e-02 : f32
      %229 = vector.broadcast %cst_193 : f32 to vector<1x16xf32>
      %230 = arith.mulf %228, %229 : vector<1x16xf32>
      %c0_194 = arith.constant 0 : index
      %c18 = arith.constant 18 : index
      %c3_195 = arith.constant 3 : index
      %231 = vector.load %arg7[%c0_194, %c18, %c3_195] : memref<2x22x22xf32, #tpu.memory_space<vmem>>, vector<1x1x16xf32>
      %232 = vector.shape_cast %231 : vector<1x1x16xf32> to vector<1x16xf32>
      %233 = vector.shape_cast %230 : vector<1x16xf32> to vector<1x1x16xf32>
      tpu.vector_store %arg7[%c0_194, %c18, %c3_195], %233 {strides = array<i32>} : memref<2x22x22xf32, #tpu.memory_space<vmem>>, vector<1x1x16xf32>,
      %c0_196 = arith.constant 0 : index
      %c240_197 = arith.constant 240 : index
      %234 = vector.load %arg6[%c0_196, %c240_197] : memref<1x256xf32, #tpu.memory_space<vmem>>, vector<1x16xf32>
      %c1_198 = arith.constant 1 : index
      %c18_199 = arith.constant 18 : index
      %c3_200 = arith.constant 3 : index
      %235 = vector.load %arg7[%c1_198, %c18_199, %c3_200] : memref<2x22x22xf32, #tpu.memory_space<vmem>>, vector<1x1x16xf32>
      %236 = vector.shape_cast %235 : vector<1x1x16xf32> to vector<1x16xf32>
      %237 = vector.shape_cast %234 : vector<1x16xf32> to vector<1x1x16xf32>
      tpu.vector_store %arg7[%c1_198, %c18_199, %c3_200], %237 {strides = array<i32>} : memref<2x22x22xf32, #tpu.memory_space<vmem>>, vector<1x1x16xf32>,
      %cst_201 = arith.constant 0.000000e+00 : f32
      %238 = vector.broadcast %cst_201 : f32 to vector<16x16xf32>
      %c0_202 = arith.constant 0 : index
      %c0_203 = arith.constant 0 : index
      %c0_204 = arith.constant 0 : index
      %239 = vector.load %arg7[%c0_202, %c0_203, %c0_204] : memref<2x22x22xf32, #tpu.memory_space<vmem>>, vector<1x22x16xf32>
      %240 = vector.shape_cast %239 : vector<1x22x16xf32> to vector<22x16xf32>
      %c0_205 = arith.constant 0 : index
      %241 = memref.load %arg3[%c0_205] : memref<98xf32, #tpu.memory_space<smem>>
      %242 = vector.extract_strided_slice %240 {offsets = [0, 0], sizes = [16, 16], strides = [1, 1]} : vector<22x16xf32> to vector<16x16xf32>
      %243 = vector.broadcast %241 : f32 to vector<16x16xf32>
      %244 = arith.mulf %242, %243 : vector<16x16xf32>
      %245 = arith.addf %238, %244 : vector<16x16xf32>
      %c7_206 = arith.constant 7 : index
      %246 = memref.load %arg3[%c7_206] : memref<98xf32, #tpu.memory_space<smem>>
      %247 = vector.extract_strided_slice %240 {offsets = [1, 0], sizes = [16, 16], strides = [1, 1]} : vector<22x16xf32> to vector<16x16xf32>
      %248 = vector.broadcast %246 : f32 to vector<16x16xf32>
      %249 = arith.mulf %247, %248 : vector<16x16xf32>
      %250 = arith.addf %245, %249 : vector<16x16xf32>
      %c14_207 = arith.constant 14 : index
      %251 = memref.load %arg3[%c14_207] : memref<98xf32, #tpu.memory_space<smem>>
      %252 = vector.extract_strided_slice %240 {offsets = [2, 0], sizes = [16, 16], strides = [1, 1]} : vector<22x16xf32> to vector<16x16xf32>
      %253 = vector.broadcast %251 : f32 to vector<16x16xf32>
      %254 = arith.mulf %252, %253 : vector<16x16xf32>
      %255 = arith.addf %250, %254 : vector<16x16xf32>
      %c21 = arith.constant 21 : index
      %256 = memref.load %arg3[%c21] : memref<98xf32, #tpu.memory_space<smem>>
      %257 = vector.extract_strided_slice %240 {offsets = [3, 0], sizes = [16, 16], strides = [1, 1]} : vector<22x16xf32> to vector<16x16xf32>
      %258 = vector.broadcast %256 : f32 to vector<16x16xf32>
      %259 = arith.mulf %257, %258 : vector<16x16xf32>
      %260 = arith.addf %255, %259 : vector<16x16xf32>
      %c28 = arith.constant 28 : index
      %261 = memref.load %arg3[%c28] : memref<98xf32, #tpu.memory_space<smem>>
      %262 = vector.extract_strided_slice %240 {offsets = [4, 0], sizes = [16, 16], strides = [1, 1]} : vector<22x16xf32> to vector<16x16xf32>
      %263 = vector.broadcast %261 : f32 to vector<16x16xf32>
      %264 = arith.mulf %262, %263 : vector<16x16xf32>
      %265 = arith.addf %260, %264 : vector<16x16xf32>
      %c35 = arith.constant 35 : index
      %266 = memref.load %arg3[%c35] : memref<98xf32, #tpu.memory_space<smem>>
      %267 = vector.extract_strided_slice %240 {offsets = [5, 0], sizes = [16, 16], strides = [1, 1]} : vector<22x16xf32> to vector<16x16xf32>
      %268 = vector.broadcast %266 : f32 to vector<16x16xf32>
      %269 = arith.mulf %267, %268 : vector<16x16xf32>
      %270 = arith.addf %265, %269 : vector<16x16xf32>
      %c42 = arith.constant 42 : index
      %271 = memref.load %arg3[%c42] : memref<98xf32, #tpu.memory_space<smem>>
      %272 = vector.extract_strided_slice %240 {offsets = [6, 0], sizes = [16, 16], strides = [1, 1]} : vector<22x16xf32> to vector<16x16xf32>
      %273 = vector.broadcast %271 : f32 to vector<16x16xf32>
      %274 = arith.mulf %272, %273 : vector<16x16xf32>
      %275 = arith.addf %270, %274 : vector<16x16xf32>
      %c0_208 = arith.constant 0 : index
      %c0_209 = arith.constant 0 : index
      %c1_210 = arith.constant 1 : index
      %276 = vector.load %arg7[%c0_208, %c0_209, %c1_210] : memref<2x22x22xf32, #tpu.memory_space<vmem>>, vector<1x22x16xf32>
      %277 = vector.shape_cast %276 : vector<1x22x16xf32> to vector<22x16xf32>
      %c1_211 = arith.constant 1 : index
      %278 = memref.load %arg3[%c1_211] : memref<98xf32, #tpu.memory_space<smem>>
      %279 = vector.extract_strided_slice %277 {offsets = [0, 0], sizes = [16, 16], strides = [1, 1]} : vector<22x16xf32> to vector<16x16xf32>
      %280 = vector.broadcast %278 : f32 to vector<16x16xf32>
      %281 = arith.mulf %279, %280 : vector<16x16xf32>
      %282 = arith.addf %275, %281 : vector<16x16xf32>
      %c8_212 = arith.constant 8 : index
      %283 = memref.load %arg3[%c8_212] : memref<98xf32, #tpu.memory_space<smem>>
      %284 = vector.extract_strided_slice %277 {offsets = [1, 0], sizes = [16, 16], strides = [1, 1]} : vector<22x16xf32> to vector<16x16xf32>
      %285 = vector.broadcast %283 : f32 to vector<16x16xf32>
      %286 = arith.mulf %284, %285 : vector<16x16xf32>
      %287 = arith.addf %282, %286 : vector<16x16xf32>
      %c15_213 = arith.constant 15 : index
      %288 = memref.load %arg3[%c15_213] : memref<98xf32, #tpu.memory_space<smem>>
      %289 = vector.extract_strided_slice %277 {offsets = [2, 0], sizes = [16, 16], strides = [1, 1]} : vector<22x16xf32> to vector<16x16xf32>
      %290 = vector.broadcast %288 : f32 to vector<16x16xf32>
      %291 = arith.mulf %289, %290 : vector<16x16xf32>
      %292 = arith.addf %287, %291 : vector<16x16xf32>
      %c22 = arith.constant 22 : index
      %293 = memref.load %arg3[%c22] : memref<98xf32, #tpu.memory_space<smem>>
      %294 = vector.extract_strided_slice %277 {offsets = [3, 0], sizes = [16, 16], strides = [1, 1]} : vector<22x16xf32> to vector<16x16xf32>
      %295 = vector.broadcast %293 : f32 to vector<16x16xf32>
      %296 = arith.mulf %294, %295 : vector<16x16xf32>
      %297 = arith.addf %292, %296 : vector<16x16xf32>
      %c29 = arith.constant 29 : index
      %298 = memref.load %arg3[%c29] : memref<98xf32, #tpu.memory_space<smem>>
      %299 = vector.extract_strided_slice %277 {offsets = [4, 0], sizes = [16, 16], strides = [1, 1]} : vector<22x16xf32> to vector<16x16xf32>
      %300 = vector.broadcast %298 : f32 to vector<16x16xf32>
      %301 = arith.mulf %299, %300 : vector<16x16xf32>
      %302 = arith.addf %297, %301 : vector<16x16xf32>
      %c36 = arith.constant 36 : index
      %303 = memref.load %arg3[%c36] : memref<98xf32, #tpu.memory_space<smem>>
      %304 = vector.extract_strided_slice %277 {offsets = [5, 0], sizes = [16, 16], strides = [1, 1]} : vector<22x16xf32> to vector<16x16xf32>
      %305 = vector.broadcast %303 : f32 to vector<16x16xf32>
      %306 = arith.mulf %304, %305 : vector<16x16xf32>
      %307 = arith.addf %302, %306 : vector<16x16xf32>
      %c43 = arith.constant 43 : index
      %308 = memref.load %arg3[%c43] : memref<98xf32, #tpu.memory_space<smem>>
      %309 = vector.extract_strided_slice %277 {offsets = [6, 0], sizes = [16, 16], strides = [1, 1]} : vector<22x16xf32> to vector<16x16xf32>
      %310 = vector.broadcast %308 : f32 to vector<16x16xf32>
      %311 = arith.mulf %309, %310 : vector<16x16xf32>
      %312 = arith.addf %307, %311 : vector<16x16xf32>
      %c0_214 = arith.constant 0 : index
      %c0_215 = arith.constant 0 : index
      %c2 = arith.constant 2 : index
      %313 = vector.load %arg7[%c0_214, %c0_215, %c2] : memref<2x22x22xf32, #tpu.memory_space<vmem>>, vector<1x22x16xf32>
      %314 = vector.shape_cast %313 : vector<1x22x16xf32> to vector<22x16xf32>
      %c2_216 = arith.constant 2 : index
      %315 = memref.load %arg3[%c2_216] : memref<98xf32, #tpu.memory_space<smem>>
      %316 = vector.extract_strided_slice %314 {offsets = [0, 0], sizes = [16, 16], strides = [1, 1]} : vector<22x16xf32> to vector<16x16xf32>
      %317 = vector.broadcast %315 : f32 to vector<16x16xf32>
      %318 = arith.mulf %316, %317 : vector<16x16xf32>
      %319 = arith.addf %312, %318 : vector<16x16xf32>
      %c9_217 = arith.constant 9 : index
      %320 = memref.load %arg3[%c9_217] : memref<98xf32, #tpu.memory_space<smem>>
      %321 = vector.extract_strided_slice %314 {offsets = [1, 0], sizes = [16, 16], strides = [1, 1]} : vector<22x16xf32> to vector<16x16xf32>
      %322 = vector.broadcast %320 : f32 to vector<16x16xf32>
      %323 = arith.mulf %321, %322 : vector<16x16xf32>
      %324 = arith.addf %319, %323 : vector<16x16xf32>
      %c16_218 = arith.constant 16 : index
      %325 = memref.load %arg3[%c16_218] : memref<98xf32, #tpu.memory_space<smem>>
      %326 = vector.extract_strided_slice %314 {offsets = [2, 0], sizes = [16, 16], strides = [1, 1]} : vector<22x16xf32> to vector<16x16xf32>
      %327 = vector.broadcast %325 : f32 to vector<16x16xf32>
      %328 = arith.mulf %326, %327 : vector<16x16xf32>
      %329 = arith.addf %324, %328 : vector<16x16xf32>
      %c23 = arith.constant 23 : index
      %330 = memref.load %arg3[%c23] : memref<98xf32, #tpu.memory_space<smem>>
      %331 = vector.extract_strided_slice %314 {offsets = [3, 0], sizes = [16, 16], strides = [1, 1]} : vector<22x16xf32> to vector<16x16xf32>
      %332 = vector.broadcast %330 : f32 to vector<16x16xf32>
      %333 = arith.mulf %331, %332 : vector<16x16xf32>
      %334 = arith.addf %329, %333 : vector<16x16xf32>
      %c30 = arith.constant 30 : index
      %335 = memref.load %arg3[%c30] : memref<98xf32, #tpu.memory_space<smem>>
      %336 = vector.extract_strided_slice %314 {offsets = [4, 0], sizes = [16, 16], strides = [1, 1]} : vector<22x16xf32> to vector<16x16xf32>
      %337 = vector.broadcast %335 : f32 to vector<16x16xf32>
      %338 = arith.mulf %336, %337 : vector<16x16xf32>
      %339 = arith.addf %334, %338 : vector<16x16xf32>
      %c37 = arith.constant 37 : index
      %340 = memref.load %arg3[%c37] : memref<98xf32, #tpu.memory_space<smem>>
      %341 = vector.extract_strided_slice %314 {offsets = [5, 0], sizes = [16, 16], strides = [1, 1]} : vector<22x16xf32> to vector<16x16xf32>
      %342 = vector.broadcast %340 : f32 to vector<16x16xf32>
      %343 = arith.mulf %341, %342 : vector<16x16xf32>
      %344 = arith.addf %339, %343 : vector<16x16xf32>
      %c44 = arith.constant 44 : index
      %345 = memref.load %arg3[%c44] : memref<98xf32, #tpu.memory_space<smem>>
      %346 = vector.extract_strided_slice %314 {offsets = [6, 0], sizes = [16, 16], strides = [1, 1]} : vector<22x16xf32> to vector<16x16xf32>
      %347 = vector.broadcast %345 : f32 to vector<16x16xf32>
      %348 = arith.mulf %346, %347 : vector<16x16xf32>
      %349 = arith.addf %344, %348 : vector<16x16xf32>
      %c0_219 = arith.constant 0 : index
      %c0_220 = arith.constant 0 : index
      %c3_221 = arith.constant 3 : index
      %350 = vector.load %arg7[%c0_219, %c0_220, %c3_221] : memref<2x22x22xf32, #tpu.memory_space<vmem>>, vector<1x22x16xf32>
      %351 = vector.shape_cast %350 : vector<1x22x16xf32> to vector<22x16xf32>
      %c3_222 = arith.constant 3 : index
      %352 = memref.load %arg3[%c3_222] : memref<98xf32, #tpu.memory_space<smem>>
      %353 = vector.extract_strided_slice %351 {offsets = [0, 0], sizes = [16, 16], strides = [1, 1]} : vector<22x16xf32> to vector<16x16xf32>
      %354 = vector.broadcast %352 : f32 to vector<16x16xf32>
      %355 = arith.mulf %353, %354 : vector<16x16xf32>
      %356 = arith.addf %349, %355 : vector<16x16xf32>
      %c10_223 = arith.constant 10 : index
      %357 = memref.load %arg3[%c10_223] : memref<98xf32, #tpu.memory_space<smem>>
      %358 = vector.extract_strided_slice %351 {offsets = [1, 0], sizes = [16, 16], strides = [1, 1]} : vector<22x16xf32> to vector<16x16xf32>
      %359 = vector.broadcast %357 : f32 to vector<16x16xf32>
      %360 = arith.mulf %358, %359 : vector<16x16xf32>
      %361 = arith.addf %356, %360 : vector<16x16xf32>
      %c17_224 = arith.constant 17 : index
      %362 = memref.load %arg3[%c17_224] : memref<98xf32, #tpu.memory_space<smem>>
      %363 = vector.extract_strided_slice %351 {offsets = [2, 0], sizes = [16, 16], strides = [1, 1]} : vector<22x16xf32> to vector<16x16xf32>
      %364 = vector.broadcast %362 : f32 to vector<16x16xf32>
      %365 = arith.mulf %363, %364 : vector<16x16xf32>
      %366 = arith.addf %361, %365 : vector<16x16xf32>
      %c24 = arith.constant 24 : index
      %367 = memref.load %arg3[%c24] : memref<98xf32, #tpu.memory_space<smem>>
      %368 = vector.extract_strided_slice %351 {offsets = [3, 0], sizes = [16, 16], strides = [1, 1]} : vector<22x16xf32> to vector<16x16xf32>
      %369 = vector.broadcast %367 : f32 to vector<16x16xf32>
      %370 = arith.mulf %368, %369 : vector<16x16xf32>
      %371 = arith.addf %366, %370 : vector<16x16xf32>
      %c31 = arith.constant 31 : index
      %372 = memref.load %arg3[%c31] : memref<98xf32, #tpu.memory_space<smem>>
      %373 = vector.extract_strided_slice %351 {offsets = [4, 0], sizes = [16, 16], strides = [1, 1]} : vector<22x16xf32> to vector<16x16xf32>
      %374 = vector.broadcast %372 : f32 to vector<16x16xf32>
      %375 = arith.mulf %373, %374 : vector<16x16xf32>
      %376 = arith.addf %371, %375 : vector<16x16xf32>
      %c38 = arith.constant 38 : index
      %377 = memref.load %arg3[%c38] : memref<98xf32, #tpu.memory_space<smem>>
      %378 = vector.extract_strided_slice %351 {offsets = [5, 0], sizes = [16, 16], strides = [1, 1]} : vector<22x16xf32> to vector<16x16xf32>
      %379 = vector.broadcast %377 : f32 to vector<16x16xf32>
      %380 = arith.mulf %378, %379 : vector<16x16xf32>
      %381 = arith.addf %376, %380 : vector<16x16xf32>
      %c45 = arith.constant 45 : index
      %382 = memref.load %arg3[%c45] : memref<98xf32, #tpu.memory_space<smem>>
      %383 = vector.extract_strided_slice %351 {offsets = [6, 0], sizes = [16, 16], strides = [1, 1]} : vector<22x16xf32> to vector<16x16xf32>
      %384 = vector.broadcast %382 : f32 to vector<16x16xf32>
      %385 = arith.mulf %383, %384 : vector<16x16xf32>
      %386 = arith.addf %381, %385 : vector<16x16xf32>
      %c0_225 = arith.constant 0 : index
      %c0_226 = arith.constant 0 : index
      %c4_227 = arith.constant 4 : index
      %387 = vector.load %arg7[%c0_225, %c0_226, %c4_227] : memref<2x22x22xf32, #tpu.memory_space<vmem>>, vector<1x22x16xf32>
      %388 = vector.shape_cast %387 : vector<1x22x16xf32> to vector<22x16xf32>
      %c4_228 = arith.constant 4 : index
      %389 = memref.load %arg3[%c4_228] : memref<98xf32, #tpu.memory_space<smem>>
      %390 = vector.extract_strided_slice %388 {offsets = [0, 0], sizes = [16, 16], strides = [1, 1]} : vector<22x16xf32> to vector<16x16xf32>
      %391 = vector.broadcast %389 : f32 to vector<16x16xf32>
      %392 = arith.mulf %390, %391 : vector<16x16xf32>
      %393 = arith.addf %386, %392 : vector<16x16xf32>
      %c11_229 = arith.constant 11 : index
      %394 = memref.load %arg3[%c11_229] : memref<98xf32, #tpu.memory_space<smem>>
      %395 = vector.extract_strided_slice %388 {offsets = [1, 0], sizes = [16, 16], strides = [1, 1]} : vector<22x16xf32> to vector<16x16xf32>
      %396 = vector.broadcast %394 : f32 to vector<16x16xf32>
      %397 = arith.mulf %395, %396 : vector<16x16xf32>
      %398 = arith.addf %393, %397 : vector<16x16xf32>
      %c18_230 = arith.constant 18 : index
      %399 = memref.load %arg3[%c18_230] : memref<98xf32, #tpu.memory_space<smem>>
      %400 = vector.extract_strided_slice %388 {offsets = [2, 0], sizes = [16, 16], strides = [1, 1]} : vector<22x16xf32> to vector<16x16xf32>
      %401 = vector.broadcast %399 : f32 to vector<16x16xf32>
      %402 = arith.mulf %400, %401 : vector<16x16xf32>
      %403 = arith.addf %398, %402 : vector<16x16xf32>
      %c25 = arith.constant 25 : index
      %404 = memref.load %arg3[%c25] : memref<98xf32, #tpu.memory_space<smem>>
      %405 = vector.extract_strided_slice %388 {offsets = [3, 0], sizes = [16, 16], strides = [1, 1]} : vector<22x16xf32> to vector<16x16xf32>
      %406 = vector.broadcast %404 : f32 to vector<16x16xf32>
      %407 = arith.mulf %405, %406 : vector<16x16xf32>
      %408 = arith.addf %403, %407 : vector<16x16xf32>
      %c32_231 = arith.constant 32 : index
      %409 = memref.load %arg3[%c32_231] : memref<98xf32, #tpu.memory_space<smem>>
      %410 = vector.extract_strided_slice %388 {offsets = [4, 0], sizes = [16, 16], strides = [1, 1]} : vector<22x16xf32> to vector<16x16xf32>
      %411 = vector.broadcast %409 : f32 to vector<16x16xf32>
      %412 = arith.mulf %410, %411 : vector<16x16xf32>
      %413 = arith.addf %408, %412 : vector<16x16xf32>
      %c39 = arith.constant 39 : index
      %414 = memref.load %arg3[%c39] : memref<98xf32, #tpu.memory_space<smem>>
      %415 = vector.extract_strided_slice %388 {offsets = [5, 0], sizes = [16, 16], strides = [1, 1]} : vector<22x16xf32> to vector<16x16xf32>
      %416 = vector.broadcast %414 : f32 to vector<16x16xf32>
      %417 = arith.mulf %415, %416 : vector<16x16xf32>
      %418 = arith.addf %413, %417 : vector<16x16xf32>
      %c46 = arith.constant 46 : index
      %419 = memref.load %arg3[%c46] : memref<98xf32, #tpu.memory_space<smem>>
      %420 = vector.extract_strided_slice %388 {offsets = [6, 0], sizes = [16, 16], strides = [1, 1]} : vector<22x16xf32> to vector<16x16xf32>
      %421 = vector.broadcast %419 : f32 to vector<16x16xf32>
      %422 = arith.mulf %420, %421 : vector<16x16xf32>
      %423 = arith.addf %418, %422 : vector<16x16xf32>
      %c0_232 = arith.constant 0 : index
      %c0_233 = arith.constant 0 : index
      %c5_234 = arith.constant 5 : index
      %424 = vector.load %arg7[%c0_232, %c0_233, %c5_234] : memref<2x22x22xf32, #tpu.memory_space<vmem>>, vector<1x22x16xf32>
      %425 = vector.shape_cast %424 : vector<1x22x16xf32> to vector<22x16xf32>
      %c5_235 = arith.constant 5 : index
      %426 = memref.load %arg3[%c5_235] : memref<98xf32, #tpu.memory_space<smem>>
      %427 = vector.extract_strided_slice %425 {offsets = [0, 0], sizes = [16, 16], strides = [1, 1]} : vector<22x16xf32> to vector<16x16xf32>
      %428 = vector.broadcast %426 : f32 to vector<16x16xf32>
      %429 = arith.mulf %427, %428 : vector<16x16xf32>
      %430 = arith.addf %423, %429 : vector<16x16xf32>
      %c12_236 = arith.constant 12 : index
      %431 = memref.load %arg3[%c12_236] : memref<98xf32, #tpu.memory_space<smem>>
      %432 = vector.extract_strided_slice %425 {offsets = [1, 0], sizes = [16, 16], strides = [1, 1]} : vector<22x16xf32> to vector<16x16xf32>
      %433 = vector.broadcast %431 : f32 to vector<16x16xf32>
      %434 = arith.mulf %432, %433 : vector<16x16xf32>
      %435 = arith.addf %430, %434 : vector<16x16xf32>
      %c19_237 = arith.constant 19 : index
      %436 = memref.load %arg3[%c19_237] : memref<98xf32, #tpu.memory_space<smem>>
      %437 = vector.extract_strided_slice %425 {offsets = [2, 0], sizes = [16, 16], strides = [1, 1]} : vector<22x16xf32> to vector<16x16xf32>
      %438 = vector.broadcast %436 : f32 to vector<16x16xf32>
      %439 = arith.mulf %437, %438 : vector<16x16xf32>
      %440 = arith.addf %435, %439 : vector<16x16xf32>
      %c26 = arith.constant 26 : index
      %441 = memref.load %arg3[%c26] : memref<98xf32, #tpu.memory_space<smem>>
      %442 = vector.extract_strided_slice %425 {offsets = [3, 0], sizes = [16, 16], strides = [1, 1]} : vector<22x16xf32> to vector<16x16xf32>
      %443 = vector.broadcast %441 : f32 to vector<16x16xf32>
      %444 = arith.mulf %442, %443 : vector<16x16xf32>
      %445 = arith.addf %440, %444 : vector<16x16xf32>
      %c33 = arith.constant 33 : index
      %446 = memref.load %arg3[%c33] : memref<98xf32, #tpu.memory_space<smem>>
      %447 = vector.extract_strided_slice %425 {offsets = [4, 0], sizes = [16, 16], strides = [1, 1]} : vector<22x16xf32> to vector<16x16xf32>
      %448 = vector.broadcast %446 : f32 to vector<16x16xf32>
      %449 = arith.mulf %447, %448 : vector<16x16xf32>
      %450 = arith.addf %445, %449 : vector<16x16xf32>
      %c40 = arith.constant 40 : index
      %451 = memref.load %arg3[%c40] : memref<98xf32, #tpu.memory_space<smem>>
      %452 = vector.extract_strided_slice %425 {offsets = [5, 0], sizes = [16, 16], strides = [1, 1]} : vector<22x16xf32> to vector<16x16xf32>
      %453 = vector.broadcast %451 : f32 to vector<16x16xf32>
      %454 = arith.mulf %452, %453 : vector<16x16xf32>
      %455 = arith.addf %450, %454 : vector<16x16xf32>
      %c47 = arith.constant 47 : index
      %456 = memref.load %arg3[%c47] : memref<98xf32, #tpu.memory_space<smem>>
      %457 = vector.extract_strided_slice %425 {offsets = [6, 0], sizes = [16, 16], strides = [1, 1]} : vector<22x16xf32> to vector<16x16xf32>
      %458 = vector.broadcast %456 : f32 to vector<16x16xf32>
      %459 = arith.mulf %457, %458 : vector<16x16xf32>
      %460 = arith.addf %455, %459 : vector<16x16xf32>
      %c0_238 = arith.constant 0 : index
      %c0_239 = arith.constant 0 : index
      %c6_240 = arith.constant 6 : index
      %461 = vector.load %arg7[%c0_238, %c0_239, %c6_240] : memref<2x22x22xf32, #tpu.memory_space<vmem>>, vector<1x22x16xf32>
      %462 = vector.shape_cast %461 : vector<1x22x16xf32> to vector<22x16xf32>
      %c6_241 = arith.constant 6 : index
      %463 = memref.load %arg3[%c6_241] : memref<98xf32, #tpu.memory_space<smem>>
      %464 = vector.extract_strided_slice %462 {offsets = [0, 0], sizes = [16, 16], strides = [1, 1]} : vector<22x16xf32> to vector<16x16xf32>
      %465 = vector.broadcast %463 : f32 to vector<16x16xf32>
      %466 = arith.mulf %464, %465 : vector<16x16xf32>
      %467 = arith.addf %460, %466 : vector<16x16xf32>
      %c13_242 = arith.constant 13 : index
      %468 = memref.load %arg3[%c13_242] : memref<98xf32, #tpu.memory_space<smem>>
      %469 = vector.extract_strided_slice %462 {offsets = [1, 0], sizes = [16, 16], strides = [1, 1]} : vector<22x16xf32> to vector<16x16xf32>
      %470 = vector.broadcast %468 : f32 to vector<16x16xf32>
      %471 = arith.mulf %469, %470 : vector<16x16xf32>
      %472 = arith.addf %467, %471 : vector<16x16xf32>
      %c20 = arith.constant 20 : index
      %473 = memref.load %arg3[%c20] : memref<98xf32, #tpu.memory_space<smem>>
      %474 = vector.extract_strided_slice %462 {offsets = [2, 0], sizes = [16, 16], strides = [1, 1]} : vector<22x16xf32> to vector<16x16xf32>
      %475 = vector.broadcast %473 : f32 to vector<16x16xf32>
      %476 = arith.mulf %474, %475 : vector<16x16xf32>
      %477 = arith.addf %472, %476 : vector<16x16xf32>
      %c27 = arith.constant 27 : index
      %478 = memref.load %arg3[%c27] : memref<98xf32, #tpu.memory_space<smem>>
      %479 = vector.extract_strided_slice %462 {offsets = [3, 0], sizes = [16, 16], strides = [1, 1]} : vector<22x16xf32> to vector<16x16xf32>
      %480 = vector.broadcast %478 : f32 to vector<16x16xf32>
      %481 = arith.mulf %479, %480 : vector<16x16xf32>
      %482 = arith.addf %477, %481 : vector<16x16xf32>
      %c34 = arith.constant 34 : index
      %483 = memref.load %arg3[%c34] : memref<98xf32, #tpu.memory_space<smem>>
      %484 = vector.extract_strided_slice %462 {offsets = [4, 0], sizes = [16, 16], strides = [1, 1]} : vector<22x16xf32> to vector<16x16xf32>
      %485 = vector.broadcast %483 : f32 to vector<16x16xf32>
      %486 = arith.mulf %484, %485 : vector<16x16xf32>
      %487 = arith.addf %482, %486 : vector<16x16xf32>
      %c41 = arith.constant 41 : index
      %488 = memref.load %arg3[%c41] : memref<98xf32, #tpu.memory_space<smem>>
      %489 = vector.extract_strided_slice %462 {offsets = [5, 0], sizes = [16, 16], strides = [1, 1]} : vector<22x16xf32> to vector<16x16xf32>
      %490 = vector.broadcast %488 : f32 to vector<16x16xf32>
      %491 = arith.mulf %489, %490 : vector<16x16xf32>
      %492 = arith.addf %487, %491 : vector<16x16xf32>
      %c48_243 = arith.constant 48 : index
      %493 = memref.load %arg3[%c48_243] : memref<98xf32, #tpu.memory_space<smem>>
      %494 = vector.extract_strided_slice %462 {offsets = [6, 0], sizes = [16, 16], strides = [1, 1]} : vector<22x16xf32> to vector<16x16xf32>
      %495 = vector.broadcast %493 : f32 to vector<16x16xf32>
      %496 = arith.mulf %494, %495 : vector<16x16xf32>
      %497 = arith.addf %492, %496 : vector<16x16xf32>
      %c1_244 = arith.constant 1 : index
      %c0_245 = arith.constant 0 : index
      %c0_246 = arith.constant 0 : index
      %498 = vector.load %arg7[%c1_244, %c0_245, %c0_246] : memref<2x22x22xf32, #tpu.memory_space<vmem>>, vector<1x22x16xf32>
      %499 = vector.shape_cast %498 : vector<1x22x16xf32> to vector<22x16xf32>
      %c49 = arith.constant 49 : index
      %500 = memref.load %arg3[%c49] : memref<98xf32, #tpu.memory_space<smem>>
      %501 = vector.extract_strided_slice %499 {offsets = [0, 0], sizes = [16, 16], strides = [1, 1]} : vector<22x16xf32> to vector<16x16xf32>
      %502 = vector.broadcast %500 : f32 to vector<16x16xf32>
      %503 = arith.mulf %501, %502 : vector<16x16xf32>
      %504 = arith.addf %497, %503 : vector<16x16xf32>
      %c56 = arith.constant 56 : index
      %505 = memref.load %arg3[%c56] : memref<98xf32, #tpu.memory_space<smem>>
      %506 = vector.extract_strided_slice %499 {offsets = [1, 0], sizes = [16, 16], strides = [1, 1]} : vector<22x16xf32> to vector<16x16xf32>
      %507 = vector.broadcast %505 : f32 to vector<16x16xf32>
      %508 = arith.mulf %506, %507 : vector<16x16xf32>
      %509 = arith.addf %504, %508 : vector<16x16xf32>
      %c63 = arith.constant 63 : index
      %510 = memref.load %arg3[%c63] : memref<98xf32, #tpu.memory_space<smem>>
      %511 = vector.extract_strided_slice %499 {offsets = [2, 0], sizes = [16, 16], strides = [1, 1]} : vector<22x16xf32> to vector<16x16xf32>
      %512 = vector.broadcast %510 : f32 to vector<16x16xf32>
      %513 = arith.mulf %511, %512 : vector<16x16xf32>
      %514 = arith.addf %509, %513 : vector<16x16xf32>
      %c70 = arith.constant 70 : index
      %515 = memref.load %arg3[%c70] : memref<98xf32, #tpu.memory_space<smem>>
      %516 = vector.extract_strided_slice %499 {offsets = [3, 0], sizes = [16, 16], strides = [1, 1]} : vector<22x16xf32> to vector<16x16xf32>
      %517 = vector.broadcast %515 : f32 to vector<16x16xf32>
      %518 = arith.mulf %516, %517 : vector<16x16xf32>
      %519 = arith.addf %514, %518 : vector<16x16xf32>
      %c77 = arith.constant 77 : index
      %520 = memref.load %arg3[%c77] : memref<98xf32, #tpu.memory_space<smem>>
      %521 = vector.extract_strided_slice %499 {offsets = [4, 0], sizes = [16, 16], strides = [1, 1]} : vector<22x16xf32> to vector<16x16xf32>
      %522 = vector.broadcast %520 : f32 to vector<16x16xf32>
      %523 = arith.mulf %521, %522 : vector<16x16xf32>
      %524 = arith.addf %519, %523 : vector<16x16xf32>
      %c84 = arith.constant 84 : index
      %525 = memref.load %arg3[%c84] : memref<98xf32, #tpu.memory_space<smem>>
      %526 = vector.extract_strided_slice %499 {offsets = [5, 0], sizes = [16, 16], strides = [1, 1]} : vector<22x16xf32> to vector<16x16xf32>
      %527 = vector.broadcast %525 : f32 to vector<16x16xf32>
      %528 = arith.mulf %526, %527 : vector<16x16xf32>
      %529 = arith.addf %524, %528 : vector<16x16xf32>
      %c91 = arith.constant 91 : index
      %530 = memref.load %arg3[%c91] : memref<98xf32, #tpu.memory_space<smem>>
      %531 = vector.extract_strided_slice %499 {offsets = [6, 0], sizes = [16, 16], strides = [1, 1]} : vector<22x16xf32> to vector<16x16xf32>
      %532 = vector.broadcast %530 : f32 to vector<16x16xf32>
      %533 = arith.mulf %531, %532 : vector<16x16xf32>
      %534 = arith.addf %529, %533 : vector<16x16xf32>
      %c1_247 = arith.constant 1 : index
      %c0_248 = arith.constant 0 : index
      %c1_249 = arith.constant 1 : index
      %535 = vector.load %arg7[%c1_247, %c0_248, %c1_249] : memref<2x22x22xf32, #tpu.memory_space<vmem>>, vector<1x22x16xf32>
      %536 = vector.shape_cast %535 : vector<1x22x16xf32> to vector<22x16xf32>
      %c50 = arith.constant 50 : index
      %537 = memref.load %arg3[%c50] : memref<98xf32, #tpu.memory_space<smem>>
      %538 = vector.extract_strided_slice %536 {offsets = [0, 0], sizes = [16, 16], strides = [1, 1]} : vector<22x16xf32> to vector<16x16xf32>
      %539 = vector.broadcast %537 : f32 to vector<16x16xf32>
      %540 = arith.mulf %538, %539 : vector<16x16xf32>
      %541 = arith.addf %534, %540 : vector<16x16xf32>
      %c57 = arith.constant 57 : index
      %542 = memref.load %arg3[%c57] : memref<98xf32, #tpu.memory_space<smem>>
      %543 = vector.extract_strided_slice %536 {offsets = [1, 0], sizes = [16, 16], strides = [1, 1]} : vector<22x16xf32> to vector<16x16xf32>
      %544 = vector.broadcast %542 : f32 to vector<16x16xf32>
      %545 = arith.mulf %543, %544 : vector<16x16xf32>
      %546 = arith.addf %541, %545 : vector<16x16xf32>
      %c64_250 = arith.constant 64 : index
      %547 = memref.load %arg3[%c64_250] : memref<98xf32, #tpu.memory_space<smem>>
      %548 = vector.extract_strided_slice %536 {offsets = [2, 0], sizes = [16, 16], strides = [1, 1]} : vector<22x16xf32> to vector<16x16xf32>
      %549 = vector.broadcast %547 : f32 to vector<16x16xf32>
      %550 = arith.mulf %548, %549 : vector<16x16xf32>
      %551 = arith.addf %546, %550 : vector<16x16xf32>
      %c71 = arith.constant 71 : index
      %552 = memref.load %arg3[%c71] : memref<98xf32, #tpu.memory_space<smem>>
      %553 = vector.extract_strided_slice %536 {offsets = [3, 0], sizes = [16, 16], strides = [1, 1]} : vector<22x16xf32> to vector<16x16xf32>
      %554 = vector.broadcast %552 : f32 to vector<16x16xf32>
      %555 = arith.mulf %553, %554 : vector<16x16xf32>
      %556 = arith.addf %551, %555 : vector<16x16xf32>
      %c78 = arith.constant 78 : index
      %557 = memref.load %arg3[%c78] : memref<98xf32, #tpu.memory_space<smem>>
      %558 = vector.extract_strided_slice %536 {offsets = [4, 0], sizes = [16, 16], strides = [1, 1]} : vector<22x16xf32> to vector<16x16xf32>
      %559 = vector.broadcast %557 : f32 to vector<16x16xf32>
      %560 = arith.mulf %558, %559 : vector<16x16xf32>
      %561 = arith.addf %556, %560 : vector<16x16xf32>
      %c85 = arith.constant 85 : index
      %562 = memref.load %arg3[%c85] : memref<98xf32, #tpu.memory_space<smem>>
      %563 = vector.extract_strided_slice %536 {offsets = [5, 0], sizes = [16, 16], strides = [1, 1]} : vector<22x16xf32> to vector<16x16xf32>
      %564 = vector.broadcast %562 : f32 to vector<16x16xf32>
      %565 = arith.mulf %563, %564 : vector<16x16xf32>
      %566 = arith.addf %561, %565 : vector<16x16xf32>
      %c92 = arith.constant 92 : index
      %567 = memref.load %arg3[%c92] : memref<98xf32, #tpu.memory_space<smem>>
      %568 = vector.extract_strided_slice %536 {offsets = [6, 0], sizes = [16, 16], strides = [1, 1]} : vector<22x16xf32> to vector<16x16xf32>
      %569 = vector.broadcast %567 : f32 to vector<16x16xf32>
      %570 = arith.mulf %568, %569 : vector<16x16xf32>
      %571 = arith.addf %566, %570 : vector<16x16xf32>
      %c1_251 = arith.constant 1 : index
      %c0_252 = arith.constant 0 : index
      %c2_253 = arith.constant 2 : index
      %572 = vector.load %arg7[%c1_251, %c0_252, %c2_253] : memref<2x22x22xf32, #tpu.memory_space<vmem>>, vector<1x22x16xf32>
      %573 = vector.shape_cast %572 : vector<1x22x16xf32> to vector<22x16xf32>
      %c51 = arith.constant 51 : index
      %574 = memref.load %arg3[%c51] : memref<98xf32, #tpu.memory_space<smem>>
      %575 = vector.extract_strided_slice %573 {offsets = [0, 0], sizes = [16, 16], strides = [1, 1]} : vector<22x16xf32> to vector<16x16xf32>
      %576 = vector.broadcast %574 : f32 to vector<16x16xf32>
      %577 = arith.mulf %575, %576 : vector<16x16xf32>
      %578 = arith.addf %571, %577 : vector<16x16xf32>
      %c58 = arith.constant 58 : index
      %579 = memref.load %arg3[%c58] : memref<98xf32, #tpu.memory_space<smem>>
      %580 = vector.extract_strided_slice %573 {offsets = [1, 0], sizes = [16, 16], strides = [1, 1]} : vector<22x16xf32> to vector<16x16xf32>
      %581 = vector.broadcast %579 : f32 to vector<16x16xf32>
      %582 = arith.mulf %580, %581 : vector<16x16xf32>
      %583 = arith.addf %578, %582 : vector<16x16xf32>
      %c65 = arith.constant 65 : index
      %584 = memref.load %arg3[%c65] : memref<98xf32, #tpu.memory_space<smem>>
      %585 = vector.extract_strided_slice %573 {offsets = [2, 0], sizes = [16, 16], strides = [1, 1]} : vector<22x16xf32> to vector<16x16xf32>
      %586 = vector.broadcast %584 : f32 to vector<16x16xf32>
      %587 = arith.mulf %585, %586 : vector<16x16xf32>
      %588 = arith.addf %583, %587 : vector<16x16xf32>
      %c72 = arith.constant 72 : index
      %589 = memref.load %arg3[%c72] : memref<98xf32, #tpu.memory_space<smem>>
      %590 = vector.extract_strided_slice %573 {offsets = [3, 0], sizes = [16, 16], strides = [1, 1]} : vector<22x16xf32> to vector<16x16xf32>
      %591 = vector.broadcast %589 : f32 to vector<16x16xf32>
      %592 = arith.mulf %590, %591 : vector<16x16xf32>
      %593 = arith.addf %588, %592 : vector<16x16xf32>
      %c79 = arith.constant 79 : index
      %594 = memref.load %arg3[%c79] : memref<98xf32, #tpu.memory_space<smem>>
      %595 = vector.extract_strided_slice %573 {offsets = [4, 0], sizes = [16, 16], strides = [1, 1]} : vector<22x16xf32> to vector<16x16xf32>
      %596 = vector.broadcast %594 : f32 to vector<16x16xf32>
      %597 = arith.mulf %595, %596 : vector<16x16xf32>
      %598 = arith.addf %593, %597 : vector<16x16xf32>
      %c86 = arith.constant 86 : index
      %599 = memref.load %arg3[%c86] : memref<98xf32, #tpu.memory_space<smem>>
      %600 = vector.extract_strided_slice %573 {offsets = [5, 0], sizes = [16, 16], strides = [1, 1]} : vector<22x16xf32> to vector<16x16xf32>
      %601 = vector.broadcast %599 : f32 to vector<16x16xf32>
      %602 = arith.mulf %600, %601 : vector<16x16xf32>
      %603 = arith.addf %598, %602 : vector<16x16xf32>
      %c93 = arith.constant 93 : index
      %604 = memref.load %arg3[%c93] : memref<98xf32, #tpu.memory_space<smem>>
      %605 = vector.extract_strided_slice %573 {offsets = [6, 0], sizes = [16, 16], strides = [1, 1]} : vector<22x16xf32> to vector<16x16xf32>
      %606 = vector.broadcast %604 : f32 to vector<16x16xf32>
      %607 = arith.mulf %605, %606 : vector<16x16xf32>
      %608 = arith.addf %603, %607 : vector<16x16xf32>
      %c1_254 = arith.constant 1 : index
      %c0_255 = arith.constant 0 : index
      %c3_256 = arith.constant 3 : index
      %609 = vector.load %arg7[%c1_254, %c0_255, %c3_256] : memref<2x22x22xf32, #tpu.memory_space<vmem>>, vector<1x22x16xf32>
      %610 = vector.shape_cast %609 : vector<1x22x16xf32> to vector<22x16xf32>
      %c52 = arith.constant 52 : index
      %611 = memref.load %arg3[%c52] : memref<98xf32, #tpu.memory_space<smem>>
      %612 = vector.extract_strided_slice %610 {offsets = [0, 0], sizes = [16, 16], strides = [1, 1]} : vector<22x16xf32> to vector<16x16xf32>
      %613 = vector.broadcast %611 : f32 to vector<16x16xf32>
      %614 = arith.mulf %612, %613 : vector<16x16xf32>
      %615 = arith.addf %608, %614 : vector<16x16xf32>
      %c59 = arith.constant 59 : index
      %616 = memref.load %arg3[%c59] : memref<98xf32, #tpu.memory_space<smem>>
      %617 = vector.extract_strided_slice %610 {offsets = [1, 0], sizes = [16, 16], strides = [1, 1]} : vector<22x16xf32> to vector<16x16xf32>
      %618 = vector.broadcast %616 : f32 to vector<16x16xf32>
      %619 = arith.mulf %617, %618 : vector<16x16xf32>
      %620 = arith.addf %615, %619 : vector<16x16xf32>
      %c66 = arith.constant 66 : index
      %621 = memref.load %arg3[%c66] : memref<98xf32, #tpu.memory_space<smem>>
      %622 = vector.extract_strided_slice %610 {offsets = [2, 0], sizes = [16, 16], strides = [1, 1]} : vector<22x16xf32> to vector<16x16xf32>
      %623 = vector.broadcast %621 : f32 to vector<16x16xf32>
      %624 = arith.mulf %622, %623 : vector<16x16xf32>
      %625 = arith.addf %620, %624 : vector<16x16xf32>
      %c73 = arith.constant 73 : index
      %626 = memref.load %arg3[%c73] : memref<98xf32, #tpu.memory_space<smem>>
      %627 = vector.extract_strided_slice %610 {offsets = [3, 0], sizes = [16, 16], strides = [1, 1]} : vector<22x16xf32> to vector<16x16xf32>
      %628 = vector.broadcast %626 : f32 to vector<16x16xf32>
      %629 = arith.mulf %627, %628 : vector<16x16xf32>
      %630 = arith.addf %625, %629 : vector<16x16xf32>
      %c80_257 = arith.constant 80 : index
      %631 = memref.load %arg3[%c80_257] : memref<98xf32, #tpu.memory_space<smem>>
      %632 = vector.extract_strided_slice %610 {offsets = [4, 0], sizes = [16, 16], strides = [1, 1]} : vector<22x16xf32> to vector<16x16xf32>
      %633 = vector.broadcast %631 : f32 to vector<16x16xf32>
      %634 = arith.mulf %632, %633 : vector<16x16xf32>
      %635 = arith.addf %630, %634 : vector<16x16xf32>
      %c87 = arith.constant 87 : index
      %636 = memref.load %arg3[%c87] : memref<98xf32, #tpu.memory_space<smem>>
      %637 = vector.extract_strided_slice %610 {offsets = [5, 0], sizes = [16, 16], strides = [1, 1]} : vector<22x16xf32> to vector<16x16xf32>
      %638 = vector.broadcast %636 : f32 to vector<16x16xf32>
      %639 = arith.mulf %637, %638 : vector<16x16xf32>
      %640 = arith.addf %635, %639 : vector<16x16xf32>
      %c94 = arith.constant 94 : index
      %641 = memref.load %arg3[%c94] : memref<98xf32, #tpu.memory_space<smem>>
      %642 = vector.extract_strided_slice %610 {offsets = [6, 0], sizes = [16, 16], strides = [1, 1]} : vector<22x16xf32> to vector<16x16xf32>
      %643 = vector.broadcast %641 : f32 to vector<16x16xf32>
      %644 = arith.mulf %642, %643 : vector<16x16xf32>
      %645 = arith.addf %640, %644 : vector<16x16xf32>
      %c1_258 = arith.constant 1 : index
      %c0_259 = arith.constant 0 : index
      %c4_260 = arith.constant 4 : index
      %646 = vector.load %arg7[%c1_258, %c0_259, %c4_260] : memref<2x22x22xf32, #tpu.memory_space<vmem>>, vector<1x22x16xf32>
      %647 = vector.shape_cast %646 : vector<1x22x16xf32> to vector<22x16xf32>
      %c53 = arith.constant 53 : index
      %648 = memref.load %arg3[%c53] : memref<98xf32, #tpu.memory_space<smem>>
      %649 = vector.extract_strided_slice %647 {offsets = [0, 0], sizes = [16, 16], strides = [1, 1]} : vector<22x16xf32> to vector<16x16xf32>
      %650 = vector.broadcast %648 : f32 to vector<16x16xf32>
      %651 = arith.mulf %649, %650 : vector<16x16xf32>
      %652 = arith.addf %645, %651 : vector<16x16xf32>
      %c60 = arith.constant 60 : index
      %653 = memref.load %arg3[%c60] : memref<98xf32, #tpu.memory_space<smem>>
      %654 = vector.extract_strided_slice %647 {offsets = [1, 0], sizes = [16, 16], strides = [1, 1]} : vector<22x16xf32> to vector<16x16xf32>
      %655 = vector.broadcast %653 : f32 to vector<16x16xf32>
      %656 = arith.mulf %654, %655 : vector<16x16xf32>
      %657 = arith.addf %652, %656 : vector<16x16xf32>
      %c67 = arith.constant 67 : index
      %658 = memref.load %arg3[%c67] : memref<98xf32, #tpu.memory_space<smem>>
      %659 = vector.extract_strided_slice %647 {offsets = [2, 0], sizes = [16, 16], strides = [1, 1]} : vector<22x16xf32> to vector<16x16xf32>
      %660 = vector.broadcast %658 : f32 to vector<16x16xf32>
      %661 = arith.mulf %659, %660 : vector<16x16xf32>
      %662 = arith.addf %657, %661 : vector<16x16xf32>
      %c74 = arith.constant 74 : index
      %663 = memref.load %arg3[%c74] : memref<98xf32, #tpu.memory_space<smem>>
      %664 = vector.extract_strided_slice %647 {offsets = [3, 0], sizes = [16, 16], strides = [1, 1]} : vector<22x16xf32> to vector<16x16xf32>
      %665 = vector.broadcast %663 : f32 to vector<16x16xf32>
      %666 = arith.mulf %664, %665 : vector<16x16xf32>
      %667 = arith.addf %662, %666 : vector<16x16xf32>
      %c81 = arith.constant 81 : index
      %668 = memref.load %arg3[%c81] : memref<98xf32, #tpu.memory_space<smem>>
      %669 = vector.extract_strided_slice %647 {offsets = [4, 0], sizes = [16, 16], strides = [1, 1]} : vector<22x16xf32> to vector<16x16xf32>
      %670 = vector.broadcast %668 : f32 to vector<16x16xf32>
      %671 = arith.mulf %669, %670 : vector<16x16xf32>
      %672 = arith.addf %667, %671 : vector<16x16xf32>
      %c88 = arith.constant 88 : index
      %673 = memref.load %arg3[%c88] : memref<98xf32, #tpu.memory_space<smem>>
      %674 = vector.extract_strided_slice %647 {offsets = [5, 0], sizes = [16, 16], strides = [1, 1]} : vector<22x16xf32> to vector<16x16xf32>
      %675 = vector.broadcast %673 : f32 to vector<16x16xf32>
      %676 = arith.mulf %674, %675 : vector<16x16xf32>
      %677 = arith.addf %672, %676 : vector<16x16xf32>
      %c95 = arith.constant 95 : index
      %678 = memref.load %arg3[%c95] : memref<98xf32, #tpu.memory_space<smem>>
      %679 = vector.extract_strided_slice %647 {offsets = [6, 0], sizes = [16, 16], strides = [1, 1]} : vector<22x16xf32> to vector<16x16xf32>
      %680 = vector.broadcast %678 : f32 to vector<16x16xf32>
      %681 = arith.mulf %679, %680 : vector<16x16xf32>
      %682 = arith.addf %677, %681 : vector<16x16xf32>
      %c1_261 = arith.constant 1 : index
      %c0_262 = arith.constant 0 : index
      %c5_263 = arith.constant 5 : index
      %683 = vector.load %arg7[%c1_261, %c0_262, %c5_263] : memref<2x22x22xf32, #tpu.memory_space<vmem>>, vector<1x22x16xf32>
      %684 = vector.shape_cast %683 : vector<1x22x16xf32> to vector<22x16xf32>
      %c54 = arith.constant 54 : index
      %685 = memref.load %arg3[%c54] : memref<98xf32, #tpu.memory_space<smem>>
      %686 = vector.extract_strided_slice %684 {offsets = [0, 0], sizes = [16, 16], strides = [1, 1]} : vector<22x16xf32> to vector<16x16xf32>
      %687 = vector.broadcast %685 : f32 to vector<16x16xf32>
      %688 = arith.mulf %686, %687 : vector<16x16xf32>
      %689 = arith.addf %682, %688 : vector<16x16xf32>
      %c61 = arith.constant 61 : index
      %690 = memref.load %arg3[%c61] : memref<98xf32, #tpu.memory_space<smem>>
      %691 = vector.extract_strided_slice %684 {offsets = [1, 0], sizes = [16, 16], strides = [1, 1]} : vector<22x16xf32> to vector<16x16xf32>
      %692 = vector.broadcast %690 : f32 to vector<16x16xf32>
      %693 = arith.mulf %691, %692 : vector<16x16xf32>
      %694 = arith.addf %689, %693 : vector<16x16xf32>
      %c68 = arith.constant 68 : index
      %695 = memref.load %arg3[%c68] : memref<98xf32, #tpu.memory_space<smem>>
      %696 = vector.extract_strided_slice %684 {offsets = [2, 0], sizes = [16, 16], strides = [1, 1]} : vector<22x16xf32> to vector<16x16xf32>
      %697 = vector.broadcast %695 : f32 to vector<16x16xf32>
      %698 = arith.mulf %696, %697 : vector<16x16xf32>
      %699 = arith.addf %694, %698 : vector<16x16xf32>
      %c75 = arith.constant 75 : index
      %700 = memref.load %arg3[%c75] : memref<98xf32, #tpu.memory_space<smem>>
      %701 = vector.extract_strided_slice %684 {offsets = [3, 0], sizes = [16, 16], strides = [1, 1]} : vector<22x16xf32> to vector<16x16xf32>
      %702 = vector.broadcast %700 : f32 to vector<16x16xf32>
      %703 = arith.mulf %701, %702 : vector<16x16xf32>
      %704 = arith.addf %699, %703 : vector<16x16xf32>
      %c82 = arith.constant 82 : index
      %705 = memref.load %arg3[%c82] : memref<98xf32, #tpu.memory_space<smem>>
      %706 = vector.extract_strided_slice %684 {offsets = [4, 0], sizes = [16, 16], strides = [1, 1]} : vector<22x16xf32> to vector<16x16xf32>
      %707 = vector.broadcast %705 : f32 to vector<16x16xf32>
      %708 = arith.mulf %706, %707 : vector<16x16xf32>
      %709 = arith.addf %704, %708 : vector<16x16xf32>
      %c89 = arith.constant 89 : index
      %710 = memref.load %arg3[%c89] : memref<98xf32, #tpu.memory_space<smem>>
      %711 = vector.extract_strided_slice %684 {offsets = [5, 0], sizes = [16, 16], strides = [1, 1]} : vector<22x16xf32> to vector<16x16xf32>
      %712 = vector.broadcast %710 : f32 to vector<16x16xf32>
      %713 = arith.mulf %711, %712 : vector<16x16xf32>
      %714 = arith.addf %709, %713 : vector<16x16xf32>
      %c96_264 = arith.constant 96 : index
      %715 = memref.load %arg3[%c96_264] : memref<98xf32, #tpu.memory_space<smem>>
      %716 = vector.extract_strided_slice %684 {offsets = [6, 0], sizes = [16, 16], strides = [1, 1]} : vector<22x16xf32> to vector<16x16xf32>
      %717 = vector.broadcast %715 : f32 to vector<16x16xf32>
      %718 = arith.mulf %716, %717 : vector<16x16xf32>
      %719 = arith.addf %714, %718 : vector<16x16xf32>
      %c1_265 = arith.constant 1 : index
      %c0_266 = arith.constant 0 : index
      %c6_267 = arith.constant 6 : index
      %720 = vector.load %arg7[%c1_265, %c0_266, %c6_267] : memref<2x22x22xf32, #tpu.memory_space<vmem>>, vector<1x22x16xf32>
      %721 = vector.shape_cast %720 : vector<1x22x16xf32> to vector<22x16xf32>
      %c55 = arith.constant 55 : index
      %722 = memref.load %arg3[%c55] : memref<98xf32, #tpu.memory_space<smem>>
      %723 = vector.extract_strided_slice %721 {offsets = [0, 0], sizes = [16, 16], strides = [1, 1]} : vector<22x16xf32> to vector<16x16xf32>
      %724 = vector.broadcast %722 : f32 to vector<16x16xf32>
      %725 = arith.mulf %723, %724 : vector<16x16xf32>
      %726 = arith.addf %719, %725 : vector<16x16xf32>
      %c62 = arith.constant 62 : index
      %727 = memref.load %arg3[%c62] : memref<98xf32, #tpu.memory_space<smem>>
      %728 = vector.extract_strided_slice %721 {offsets = [1, 0], sizes = [16, 16], strides = [1, 1]} : vector<22x16xf32> to vector<16x16xf32>
      %729 = vector.broadcast %727 : f32 to vector<16x16xf32>
      %730 = arith.mulf %728, %729 : vector<16x16xf32>
      %731 = arith.addf %726, %730 : vector<16x16xf32>
      %c69 = arith.constant 69 : index
      %732 = memref.load %arg3[%c69] : memref<98xf32, #tpu.memory_space<smem>>
      %733 = vector.extract_strided_slice %721 {offsets = [2, 0], sizes = [16, 16], strides = [1, 1]} : vector<22x16xf32> to vector<16x16xf32>
      %734 = vector.broadcast %732 : f32 to vector<16x16xf32>
      %735 = arith.mulf %733, %734 : vector<16x16xf32>
      %736 = arith.addf %731, %735 : vector<16x16xf32>
      %c76 = arith.constant 76 : index
      %737 = memref.load %arg3[%c76] : memref<98xf32, #tpu.memory_space<smem>>
      %738 = vector.extract_strided_slice %721 {offsets = [3, 0], sizes = [16, 16], strides = [1, 1]} : vector<22x16xf32> to vector<16x16xf32>
      %739 = vector.broadcast %737 : f32 to vector<16x16xf32>
      %740 = arith.mulf %738, %739 : vector<16x16xf32>
      %741 = arith.addf %736, %740 : vector<16x16xf32>
      %c83 = arith.constant 83 : index
      %742 = memref.load %arg3[%c83] : memref<98xf32, #tpu.memory_space<smem>>
      %743 = vector.extract_strided_slice %721 {offsets = [4, 0], sizes = [16, 16], strides = [1, 1]} : vector<22x16xf32> to vector<16x16xf32>
      %744 = vector.broadcast %742 : f32 to vector<16x16xf32>
      %745 = arith.mulf %743, %744 : vector<16x16xf32>
      %746 = arith.addf %741, %745 : vector<16x16xf32>
      %c90 = arith.constant 90 : index
      %747 = memref.load %arg3[%c90] : memref<98xf32, #tpu.memory_space<smem>>
      %748 = vector.extract_strided_slice %721 {offsets = [5, 0], sizes = [16, 16], strides = [1, 1]} : vector<22x16xf32> to vector<16x16xf32>
      %749 = vector.broadcast %747 : f32 to vector<16x16xf32>
      %750 = arith.mulf %748, %749 : vector<16x16xf32>
      %751 = arith.addf %746, %750 : vector<16x16xf32>
      %c97 = arith.constant 97 : index
      %752 = memref.load %arg3[%c97] : memref<98xf32, #tpu.memory_space<smem>>
      %753 = vector.extract_strided_slice %721 {offsets = [6, 0], sizes = [16, 16], strides = [1, 1]} : vector<22x16xf32> to vector<16x16xf32>
      %754 = vector.broadcast %752 : f32 to vector<16x16xf32>
      %755 = arith.mulf %753, %754 : vector<16x16xf32>
      %756 = arith.addf %751, %755 : vector<16x16xf32>
      %cst_268 = arith.constant 0.000000e+00 : f32
      %757 = vector.broadcast %cst_268 : f32 to vector<16x16xf32>
      %758 = arith.subf %757, %756 : vector<16x16xf32>
      %759 = math.exp %758 : vector<16x16xf32>
      %cst_269 = arith.constant 1.000000e+00 : f32
      %760 = vector.broadcast %cst_269 : f32 to vector<16x16xf32>
      %761 = arith.addf %760, %759 : vector<16x16xf32>
      %cst_270 = arith.constant 1.000000e+00 : f32
      %762 = vector.broadcast %cst_270 : f32 to vector<16x16xf32>
      %763 = arith.divf %762, %761 : vector<16x16xf32>
      %764 = vector.extract_strided_slice %763 {offsets = [0, 0], sizes = [1, 16], strides = [1, 1]} : vector<16x16xf32> to vector<1x16xf32>
      %c0_271 = arith.constant 0 : index
      %c0_272 = arith.constant 0 : index
      %c0_273 = arith.constant 0 : index
      %765 = vector.load %arg4[%c0_271, %c0_272, %c0_273] : memref<1x1x256xf32, #tpu.memory_space<vmem>>, vector<1x1x16xf32>
      %766 = vector.shape_cast %765 : vector<1x1x16xf32> to vector<1x16xf32>
      %767 = vector.shape_cast %764 : vector<1x16xf32> to vector<1x1x16xf32>
      tpu.vector_store %arg4[%c0_271, %c0_272, %c0_273], %767 {strides = array<i32>} : memref<1x1x256xf32, #tpu.memory_space<vmem>>, vector<1x1x16xf32>,
      %768 = vector.extract_strided_slice %763 {offsets = [1, 0], sizes = [1, 16], strides = [1, 1]} : vector<16x16xf32> to vector<1x16xf32>
      %c0_274 = arith.constant 0 : index
      %c0_275 = arith.constant 0 : index
      %c16_276 = arith.constant 16 : index
      %769 = vector.load %arg4[%c0_274, %c0_275, %c16_276] : memref<1x1x256xf32, #tpu.memory_space<vmem>>, vector<1x1x16xf32>
      %770 = vector.shape_cast %769 : vector<1x1x16xf32> to vector<1x16xf32>
      %771 = vector.shape_cast %768 : vector<1x16xf32> to vector<1x1x16xf32>
      tpu.vector_store %arg4[%c0_274, %c0_275, %c16_276], %771 {strides = array<i32>} : memref<1x1x256xf32, #tpu.memory_space<vmem>>, vector<1x1x16xf32>,
      %772 = vector.extract_strided_slice %763 {offsets = [2, 0], sizes = [1, 16], strides = [1, 1]} : vector<16x16xf32> to vector<1x16xf32>
      %c0_277 = arith.constant 0 : index
      %c0_278 = arith.constant 0 : index
      %c32_279 = arith.constant 32 : index
      %773 = vector.load %arg4[%c0_277, %c0_278, %c32_279] : memref<1x1x256xf32, #tpu.memory_space<vmem>>, vector<1x1x16xf32>
      %774 = vector.shape_cast %773 : vector<1x1x16xf32> to vector<1x16xf32>
      %775 = vector.shape_cast %772 : vector<1x16xf32> to vector<1x1x16xf32>
      tpu.vector_store %arg4[%c0_277, %c0_278, %c32_279], %775 {strides = array<i32>} : memref<1x1x256xf32, #tpu.memory_space<vmem>>, vector<1x1x16xf32>,
      %776 = vector.extract_strided_slice %763 {offsets = [3, 0], sizes = [1, 16], strides = [1, 1]} : vector<16x16xf32> to vector<1x16xf32>
      %c0_280 = arith.constant 0 : index
      %c0_281 = arith.constant 0 : index
      %c48_282 = arith.constant 48 : index
      %777 = vector.load %arg4[%c0_280, %c0_281, %c48_282] : memref<1x1x256xf32, #tpu.memory_space<vmem>>, vector<1x1x16xf32>
      %778 = vector.shape_cast %777 : vector<1x1x16xf32> to vector<1x16xf32>
      %779 = vector.shape_cast %776 : vector<1x16xf32> to vector<1x1x16xf32>
      tpu.vector_store %arg4[%c0_280, %c0_281, %c48_282], %779 {strides = array<i32>} : memref<1x1x256xf32, #tpu.memory_space<vmem>>, vector<1x1x16xf32>,
      %780 = vector.extract_strided_slice %763 {offsets = [4, 0], sizes = [1, 16], strides = [1, 1]} : vector<16x16xf32> to vector<1x16xf32>
      %c0_283 = arith.constant 0 : index
      %c0_284 = arith.constant 0 : index
      %c64_285 = arith.constant 64 : index
      %781 = vector.load %arg4[%c0_283, %c0_284, %c64_285] : memref<1x1x256xf32, #tpu.memory_space<vmem>>, vector<1x1x16xf32>
      %782 = vector.shape_cast %781 : vector<1x1x16xf32> to vector<1x16xf32>
      %783 = vector.shape_cast %780 : vector<1x16xf32> to vector<1x1x16xf32>
      tpu.vector_store %arg4[%c0_283, %c0_284, %c64_285], %783 {strides = array<i32>} : memref<1x1x256xf32, #tpu.memory_space<vmem>>, vector<1x1x16xf32>,
      %784 = vector.extract_strided_slice %763 {offsets = [5, 0], sizes = [1, 16], strides = [1, 1]} : vector<16x16xf32> to vector<1x16xf32>
      %c0_286 = arith.constant 0 : index
      %c0_287 = arith.constant 0 : index
      %c80_288 = arith.constant 80 : index
      %785 = vector.load %arg4[%c0_286, %c0_287, %c80_288] : memref<1x1x256xf32, #tpu.memory_space<vmem>>, vector<1x1x16xf32>
      %786 = vector.shape_cast %785 : vector<1x1x16xf32> to vector<1x16xf32>
      %787 = vector.shape_cast %784 : vector<1x16xf32> to vector<1x1x16xf32>
      tpu.vector_store %arg4[%c0_286, %c0_287, %c80_288], %787 {strides = array<i32>} : memref<1x1x256xf32, #tpu.memory_space<vmem>>, vector<1x1x16xf32>,
      %788 = vector.extract_strided_slice %763 {offsets = [6, 0], sizes = [1, 16], strides = [1, 1]} : vector<16x16xf32> to vector<1x16xf32>
      %c0_289 = arith.constant 0 : index
      %c0_290 = arith.constant 0 : index
      %c96_291 = arith.constant 96 : index
      %789 = vector.load %arg4[%c0_289, %c0_290, %c96_291] : memref<1x1x256xf32, #tpu.memory_space<vmem>>, vector<1x1x16xf32>
      %790 = vector.shape_cast %789 : vector<1x1x16xf32> to vector<1x16xf32>
      %791 = vector.shape_cast %788 : vector<1x16xf32> to vector<1x1x16xf32>
      tpu.vector_store %arg4[%c0_289, %c0_290, %c96_291], %791 {strides = array<i32>} : memref<1x1x256xf32, #tpu.memory_space<vmem>>, vector<1x1x16xf32>,
      %792 = vector.extract_strided_slice %763 {offsets = [7, 0], sizes = [1, 16], strides = [1, 1]} : vector<16x16xf32> to vector<1x16xf32>
      %c0_292 = arith.constant 0 : index
      %c0_293 = arith.constant 0 : index
      %c112_294 = arith.constant 112 : index
      %793 = vector.load %arg4[%c0_292, %c0_293, %c112_294] : memref<1x1x256xf32, #tpu.memory_space<vmem>>, vector<1x1x16xf32>
      %794 = vector.shape_cast %793 : vector<1x1x16xf32> to vector<1x16xf32>
      %795 = vector.shape_cast %792 : vector<1x16xf32> to vector<1x1x16xf32>
      tpu.vector_store %arg4[%c0_292, %c0_293, %c112_294], %795 {strides = array<i32>} : memref<1x1x256xf32, #tpu.memory_space<vmem>>, vector<1x1x16xf32>,
      %796 = vector.extract_strided_slice %763 {offsets = [8, 0], sizes = [1, 16], strides = [1, 1]} : vector<16x16xf32> to vector<1x16xf32>
      %c0_295 = arith.constant 0 : index
      %c0_296 = arith.constant 0 : index
      %c128_297 = arith.constant 128 : index
      %797 = vector.load %arg4[%c0_295, %c0_296, %c128_297] : memref<1x1x256xf32, #tpu.memory_space<vmem>>, vector<1x1x16xf32>
      %798 = vector.shape_cast %797 : vector<1x1x16xf32> to vector<1x16xf32>
      %799 = vector.shape_cast %796 : vector<1x16xf32> to vector<1x1x16xf32>
      tpu.vector_store %arg4[%c0_295, %c0_296, %c128_297], %799 {strides = array<i32>} : memref<1x1x256xf32, #tpu.memory_space<vmem>>, vector<1x1x16xf32>,
      %800 = vector.extract_strided_slice %763 {offsets = [9, 0], sizes = [1, 16], strides = [1, 1]} : vector<16x16xf32> to vector<1x16xf32>
      %c0_298 = arith.constant 0 : index
      %c0_299 = arith.constant 0 : index
      %c144_300 = arith.constant 144 : index
      %801 = vector.load %arg4[%c0_298, %c0_299, %c144_300] : memref<1x1x256xf32, #tpu.memory_space<vmem>>, vector<1x1x16xf32>
      %802 = vector.shape_cast %801 : vector<1x1x16xf32> to vector<1x16xf32>
      %803 = vector.shape_cast %800 : vector<1x16xf32> to vector<1x1x16xf32>
      tpu.vector_store %arg4[%c0_298, %c0_299, %c144_300], %803 {strides = array<i32>} : memref<1x1x256xf32, #tpu.memory_space<vmem>>, vector<1x1x16xf32>,
      %804 = vector.extract_strided_slice %763 {offsets = [10, 0], sizes = [1, 16], strides = [1, 1]} : vector<16x16xf32> to vector<1x16xf32>
      %c0_301 = arith.constant 0 : index
      %c0_302 = arith.constant 0 : index
      %c160_303 = arith.constant 160 : index
      %805 = vector.load %arg4[%c0_301, %c0_302, %c160_303] : memref<1x1x256xf32, #tpu.memory_space<vmem>>, vector<1x1x16xf32>
      %806 = vector.shape_cast %805 : vector<1x1x16xf32> to vector<1x16xf32>
      %807 = vector.shape_cast %804 : vector<1x16xf32> to vector<1x1x16xf32>
      tpu.vector_store %arg4[%c0_301, %c0_302, %c160_303], %807 {strides = array<i32>} : memref<1x1x256xf32, #tpu.memory_space<vmem>>, vector<1x1x16xf32>,
      %808 = vector.extract_strided_slice %763 {offsets = [11, 0], sizes = [1, 16], strides = [1, 1]} : vector<16x16xf32> to vector<1x16xf32>
      %c0_304 = arith.constant 0 : index
      %c0_305 = arith.constant 0 : index
      %c176_306 = arith.constant 176 : index
      %809 = vector.load %arg4[%c0_304, %c0_305, %c176_306] : memref<1x1x256xf32, #tpu.memory_space<vmem>>, vector<1x1x16xf32>
      %810 = vector.shape_cast %809 : vector<1x1x16xf32> to vector<1x16xf32>
      %811 = vector.shape_cast %808 : vector<1x16xf32> to vector<1x1x16xf32>
      tpu.vector_store %arg4[%c0_304, %c0_305, %c176_306], %811 {strides = array<i32>} : memref<1x1x256xf32, #tpu.memory_space<vmem>>, vector<1x1x16xf32>,
      %812 = vector.extract_strided_slice %763 {offsets = [12, 0], sizes = [1, 16], strides = [1, 1]} : vector<16x16xf32> to vector<1x16xf32>
      %c0_307 = arith.constant 0 : index
      %c0_308 = arith.constant 0 : index
      %c192_309 = arith.constant 192 : index
      %813 = vector.load %arg4[%c0_307, %c0_308, %c192_309] : memref<1x1x256xf32, #tpu.memory_space<vmem>>, vector<1x1x16xf32>
      %814 = vector.shape_cast %813 : vector<1x1x16xf32> to vector<1x16xf32>
      %815 = vector.shape_cast %812 : vector<1x16xf32> to vector<1x1x16xf32>
      tpu.vector_store %arg4[%c0_307, %c0_308, %c192_309], %815 {strides = array<i32>} : memref<1x1x256xf32, #tpu.memory_space<vmem>>, vector<1x1x16xf32>,
      %816 = vector.extract_strided_slice %763 {offsets = [13, 0], sizes = [1, 16], strides = [1, 1]} : vector<16x16xf32> to vector<1x16xf32>
      %c0_310 = arith.constant 0 : index
      %c0_311 = arith.constant 0 : index
      %c208_312 = arith.constant 208 : index
      %817 = vector.load %arg4[%c0_310, %c0_311, %c208_312] : memref<1x1x256xf32, #tpu.memory_space<vmem>>, vector<1x1x16xf32>
      %818 = vector.shape_cast %817 : vector<1x1x16xf32> to vector<1x16xf32>
      %819 = vector.shape_cast %816 : vector<1x16xf32> to vector<1x1x16xf32>
      tpu.vector_store %arg4[%c0_310, %c0_311, %c208_312], %819 {strides = array<i32>} : memref<1x1x256xf32, #tpu.memory_space<vmem>>, vector<1x1x16xf32>,
      %820 = vector.extract_strided_slice %763 {offsets = [14, 0], sizes = [1, 16], strides = [1, 1]} : vector<16x16xf32> to vector<1x16xf32>
      %c0_313 = arith.constant 0 : index
      %c0_314 = arith.constant 0 : index
      %c224_315 = arith.constant 224 : index
      %821 = vector.load %arg4[%c0_313, %c0_314, %c224_315] : memref<1x1x256xf32, #tpu.memory_space<vmem>>, vector<1x1x16xf32>
      %822 = vector.shape_cast %821 : vector<1x1x16xf32> to vector<1x16xf32>
      %823 = vector.shape_cast %820 : vector<1x16xf32> to vector<1x1x16xf32>
      tpu.vector_store %arg4[%c0_313, %c0_314, %c224_315], %823 {strides = array<i32>} : memref<1x1x256xf32, #tpu.memory_space<vmem>>, vector<1x1x16xf32>,
      %824 = vector.extract_strided_slice %763 {offsets = [15, 0], sizes = [1, 16], strides = [1, 1]} : vector<16x16xf32> to vector<1x16xf32>
      %c0_316 = arith.constant 0 : index
      %c0_317 = arith.constant 0 : index
      %c240_318 = arith.constant 240 : index
      %825 = vector.load %arg4[%c0_316, %c0_317, %c240_318] : memref<1x1x256xf32, #tpu.memory_space<vmem>>, vector<1x1x16xf32>
      %826 = vector.shape_cast %825 : vector<1x1x16xf32> to vector<1x16xf32>
      %827 = vector.shape_cast %824 : vector<1x16xf32> to vector<1x1x16xf32>
      tpu.vector_store %arg4[%c0_316, %c0_317, %c240_318], %827 {strides = array<i32>} : memref<1x1x256xf32, #tpu.memory_space<vmem>>, vector<1x1x16xf32>,
    } else {
    }
    return
  }
  func.func @transform_0(%arg0: i32, %arg1: i32) -> (i32, i32, i32) {
    %c0_i32 = arith.constant 0 : i32
    %c0_i32_0 = arith.constant 0 : i32
    return %arg0, %arg1, %c0_i32 : i32, i32, i32
  }
  func.func @transform_1(%arg0: i32, %arg1: i32) -> i32 {
    %c0_i32 = arith.constant 0 : i32
    %c0_i32_0 = arith.constant 0 : i32
    return %c0_i32 : i32
  }
  func.func @transform_2(%arg0: i32, %arg1: i32) -> (i32, i32, i32) {
    %c0_i32 = arith.constant 0 : i32
    %c0_i32_0 = arith.constant 0 : i32
    %c0_i32_1 = arith.constant 0 : i32
    return %arg0, %c0_i32, %c0_i32_0 : i32, i32, i32
  }
}

</mosaic_0001>

<llo_original>
// kernel: tpu_custom_call.1
$region0: #{tpu_custom_call.1}
  #allocation0 [shape = 'u32[]', space=smem, size = 0x4, offset = 0x4, fixed_abs, tag = 'smem constant byte address 0x4 - core index']
  #allocation1 [shape = 'u32[144,128]{1,0:T(1,128)}', space=vmem, size = 0x12000, scoped, tag = 'internal scratch']
  #allocation2 [shape = 'f32[1,256]{1,0:T(1,128)}', space=vmem, size = 0x400, scoped, tag = 'scratch operand']
  #allocation3 [shape = 'f32[1,256]{1,0:T(1,128)}', space=vmem, size = 0x400, scoped, tag = 'scratch operand']
  #allocation4 [shape = 'f32[2,22,22]{2,1,0:T(8,128)}', space=vmem, size = 0x6000, scoped, tag = 'scratch operand']
  %s0 = inlined_call_operand.hbm [shape: f32[2,32,256], index: 0, kind: input, shape index: {}]
  %s1 = inlined_call_operand.vmem [shape: f32[98], index: 1, kind: input, shape index: {}]
  %s2 = inlined_call_operand.hbm [shape: f32[2,1,256], index: 2, kind: output, shape index: {}]
  %s3 = sld [smem:[#allocation0]]
  $region57: #{tpu_custom_call.1} parent=0
    _
  %s5 = ssub.s32 1, %s3
  %s6 = scalar_select 0, %s5, %s3
  $region1: #{tpu_custom_call.1} parent=0
    #allocation5 [shape = 'u8[65536]{0}', space=vmem, size = 0x10000, scoped, tag = 'input window, operand 0']
    #allocation6 [shape = 's32[2]{0}', space=sflag, size = 0x8, scoped, tag = 'scoped memory for tpu_custom_call.1']
    #allocation7 [shape = 's32[2]{0}', space=sflag, size = 0x8, scoped, tag = 'scoped memory for tpu_custom_call.1']
    #allocation8 [shape = 's32[2]{0}', space=sflag, size = 0x8, scoped, tag = 'scoped memory for tpu_custom_call.1']
    #allocation9 [shape = 'u8[512]{0}', space=smem, size = 0x200, scoped, tag = 'input window, operand 1, single buffered']
    #allocation10 [shape = 'u8[2048]{0}', space=vmem, size = 0x800, scoped, tag = 'output window, operand 0']
    %7 = vsyncpa [#allocation6], 0
    %s8 = scalar_lea.sflag [#allocation6], 1
    %9 = vsyncpa %s8, 0
    %10 = vsyncpa [#allocation8], 0
    %11 = vsyncpa [#allocation7], 0
    %s12 = scalar_lea.sflag [#allocation7], 1
    %13 = vsyncpa %s12, 0
    loop: start=0, step=1, limit=4
    $region2: #{tpu_custom_call.1} parent=1 // loop_pre_header
      _
    $region3: #{tpu_custom_call.1} parent=1 // loop_header
      %s15 = sphi 0, %s19
      %p16 = scmp.ge.s32.totalorder %s15, 4
      %s22 = sphi 0, %s34
      %s23 = sphi 0, %s30
      %s24 = sphi 0, %s22
      %s25 = sphi 0, %s23
      %s26 = sphi 0, %s24
      %s27 = sphi 0, %s25
      %s39 = sphi 0, %s41
      %s42 = sphi 0, %s39
      %s43 = sphi 0, %s42
      %s59 = sphi 0, %s43
      %s63 = sphi 0, %s63
      %s65 = sphi 0, %s63
      %s66 = sphi 0, %s65
      %s80 = sphi 0, %s66
      %s86 = sphi 0, %s88
      %s89 = sphi 0, %s86
      %s90 = sphi 0, %s89
      %s106 = sphi 0, %s90
    $region4: #{tpu_custom_call.1} parent=1 // loop_header_branch
      %18 = sbr.rel (%p16) target = $region8
    $region5: #{tpu_custom_call.1} parent=1 // loop_body
      %s20 = ssub.s32 %s15, 1
      %s21 = ssub.s32 %s15, 2
      %s28 = sadd.s32 1, %s23
      %p29 = scmp.ge.s32.totalorder %s28, 1
      %s30 = scalar_select %p29, 0, %s28
      %s31 = sadd.s32 1, %s22
      %s32 = scalar_select %p29, %s31, %s22
      %p33 = scmp.ge.s32.totalorder %s32, 2
      %s34 = scalar_select %p33, 0, %s32
      %s35 = ssub.s32 %s22, %s34
      %s36 = ssub.s32 %s23, %s30
      %s37 = sor.u32 %s35, %s36
      %p38 = scmp.eq.s32.totalorder %s37, 0
      %s40 = sadd.s32 %s39, 1
      %s41 = scalar_select %p38, %s39, %s40
      %p44 = pneg %p38
      %p45 = scmp.eq.s32.totalorder %s15, 1
      %p46 = por %p44, %p45
      %p47 = scmp.ne.s32.totalorder %s39, %s42
      %p48 = scmp.eq.s32.totalorder %s15, 0
      %p49 = por %p47, %p48
      %p50 = scmp.ne.s32.totalorder %s39, %s42
      %p51 = scmp.eq.s32.totalorder %s20, 1
      %p52 = por %p50, %p51
      %p53 = scmp.ne.s32.totalorder %s42, %s43
      %p54 = scmp.eq.s32.totalorder %s20, 0
      %p55 = por %p53, %p54
      %p56 = scmp.ne.s32.totalorder %s42, %s43
      %p57 = scmp.eq.s32.totalorder %s21, 1
      %p58 = por %p56, %p57
      %p60 = scmp.ne.s32.totalorder %s43, %s59
      %p61 = scmp.eq.s32.totalorder %s21, 0
      %p62 = por %p60, %p61
      %s64 = sadd.s32 %s63, 1
      %p67 = scmp.eq.s32.totalorder %s15, 1
      %p68 = scmp.ne.s32.totalorder %s63, %s65
      %p69 = scmp.eq.s32.totalorder %s15, 0
      %p70 = por %p68, %p69
      %p71 = scmp.ne.s32.totalorder %s63, %s65
      %p72 = scmp.eq.s32.totalorder %s20, 1
      %p73 = por %p71, %p72
      %p74 = scmp.ne.s32.totalorder %s65, %s66
      %p75 = scmp.eq.s32.totalorder %s20, 0
      %p76 = por %p74, %p75
      %p77 = scmp.ne.s32.totalorder %s65, %s66
      %p78 = scmp.eq.s32.totalorder %s21, 1
      %p79 = por %p77, %p78
      %p81 = scmp.ne.s32.totalorder %s66, %s80
      %p82 = scmp.eq.s32.totalorder %s21, 0
      %p83 = por %p81, %p82
      %s84 = ssub.s32 %s22, %s34
      %p85 = scmp.eq.s32.totalorder %s84, 0
      %s87 = sadd.s32 %s86, 1
      %s88 = scalar_select %p85, %s86, %s87
      %p91 = pneg %p85
      %p92 = scmp.eq.s32.totalorder %s15, 1
      %p93 = por %p91, %p92
      %p94 = scmp.ne.s32.totalorder %s86, %s89
      %p95 = scmp.eq.s32.totalorder %s15, 0
      %p96 = por %p94, %p95
      %p97 = scmp.ne.s32.totalorder %s86, %s89
      %p98 = scmp.eq.s32.totalorder %s20, 1
      %p99 = por %p97, %p98
      %p100 = scmp.ne.s32.totalorder %s89, %s90
      %p101 = scmp.eq.s32.totalorder %s20, 0
      %p102 = por %p100, %p101
      %p103 = scmp.ne.s32.totalorder %s89, %s90
      %p104 = scmp.eq.s32.totalorder %s21, 1
      %p105 = por %p103, %p104
      %p107 = scmp.ne.s32.totalorder %s90, %s106
      %p108 = scmp.eq.s32.totalorder %s21, 0
      %p109 = por %p107, %p108
      %p110 = scmp.le.s32.totalorder 1, %s15
      %p111 = scmp.lt.s32.totalorder %s15, 3
      %p112 = pnand %p110, %p111
      %p113 = pneg %p112
      // Predicated region
      $region9: #{tpu_custom_call.1} parent=5 // pred_check
        _
      $region10: #{tpu_custom_call.1} parent=5 // pred_check_branch
        %115 = sbr.rel (%p112) target = $region12
      $region11: #{tpu_custom_call.1} parent=5 // pred_region
        %s116 = ssub.s32 %s15, 1
        // Predicated region
        $region13: #{tpu_custom_call.1} parent=11 // pred_check
          %p117 = pneg %p76
        $region14: #{tpu_custom_call.1} parent=11 // pred_check_branch
          %119 = sbr.rel (%p117) target = $region16
        $region15: #{tpu_custom_call.1} parent=11 // pred_region
          %s121 = ssub.s32 16, 16
          %122 = vsyncadd [#allocation8], %s121
          %s124 = sshll.u32 %s1, 4
          %s125 = int_to_ptr.vmem [resolvable:$true] %s124
          %127 = dma.vmem_to_smem %s125, 16, [#allocation9], [#allocation8]
        $region16: #{tpu_custom_call.1} parent=11 // pred_fallthru
          _
      $region12: #{tpu_custom_call.1} parent=5 // pred_fallthru
        _
      %p128 = scmp.lt.s32.totalorder %s15, 2
      // Predicated region
      $region17: #{tpu_custom_call.1} parent=5 // pred_check
        %p129 = pneg %p128
      $region18: #{tpu_custom_call.1} parent=5 // pred_check_branch
        %131 = sbr.rel (%p129) target = $region20
      $region19: #{tpu_custom_call.1} parent=5 // pred_region
        // Predicated region
        $region21: #{tpu_custom_call.1} parent=19 // pred_check
          %p132 = pneg %p49
        $region22: #{tpu_custom_call.1} parent=19 // pred_check_branch
          %134 = sbr.rel (%p132) target = $region24
        $region23: #{tpu_custom_call.1} parent=19 // pred_region
          %s135 = sand.u32 %s39, 1
          %s136 = scalar_lea.sflag [#allocation6], %s135
          %s137 = sand.u32 %s39, 1
          %s138 = smul.addr %s137, 64
          %s139 = scalar_lea.vmem [#allocation5], %s138
          %s140 = smul.u32 4, %s23
          %s142 = ssub.s32 1024, 1024
          %143 = vsyncadd %s136, %s142
          %s144 = smul.addr %s140, 2
          %s145 = smul.addr %s22, 8
          %s146 = sadd.s32 %s144, %s145
          %s147 = smul.addr %s146, 128
          %s148 = scalar_lea.hbm %s0, %s147
          %s149 = sshll.u32 %s139, 4
          %s150 = int_to_ptr.vmem [resolvable:$true] %s149
          %155 = dma.hbm_to_vmem [thread:$0]  %s148, 1024, %s150, %s136, 256, 256, 16
        $region24: #{tpu_custom_call.1} parent=19 // pred_fallthru
          _
      $region20: #{tpu_custom_call.1} parent=5 // pred_fallthru
        _
      %p156 = scmp.le.s32.totalorder 1, %s15
      %p157 = scmp.lt.s32.totalorder %s15, 3
      %p158 = pnand %p156, %p157
      %p159 = pneg %p158
      // Predicated region
      $region25: #{tpu_custom_call.1} parent=5 // pred_check
        _
      $region26: #{tpu_custom_call.1} parent=5 // pred_check_branch
        %161 = sbr.rel (%p158) target = $region28
      $region27: #{tpu_custom_call.1} parent=5 // pred_region
        %s162 = ssub.s32 %s15, 1
        %s163 = sand.u32 %s42, 1
        %s164 = scalar_lea.sflag [#allocation6], %s163
        %s165 = sand.u32 %s42, 1
        %s166 = smul.addr %s165, 64
        %s167 = scalar_lea.vmem [#allocation5], %s166
        // Predicated region
        $region29: #{tpu_custom_call.1} parent=27 // pred_check
          %p168 = pneg %p55
        $region30: #{tpu_custom_call.1} parent=27 // pred_check_branch
          %170 = sbr.rel (%p168) target = $region32
        $region31: #{tpu_custom_call.1} parent=27 // pred_region
          %171 = dma.done %s164, 1024
        $region32: #{tpu_custom_call.1} parent=27 // pred_fallthru
          _
        // Predicated region
        $region33: #{tpu_custom_call.1} parent=27 // pred_check
          %p172 = pneg %p76
        $region34: #{tpu_custom_call.1} parent=27 // pred_check_branch
          %174 = sbr.rel (%p172) target = $region36
        $region35: #{tpu_custom_call.1} parent=27 // pred_region
          %175 = dma.done [#allocation8], 16
        $region36: #{tpu_custom_call.1} parent=27 // pred_fallthru
          _
        %176 = sfence
        %s177 = sand.u32 %s42, 1
        %s178 = scalar_lea.sflag [#allocation6], %s177
        %s179 = sand.u32 %s42, 1
        %s180 = smul.addr %s179, 64
        %s181 = scalar_lea.vmem [#allocation5], %s180
        %p182 = pneg %p55
        %p183 = pneg %p52
        %p184 = pneg %p76
        %p185 = pneg %p73
        %p186 = pneg %p102
        %p187 = pneg %p99
        %s188 = sand.u32 %s89, 1
        %s189 = scalar_lea.sflag [#allocation7], %s188
        %s190 = sand.u32 %s89, 1
        %s191 = smul.addr %s190, 2
        %s192 = scalar_lea.vmem [#allocation10], %s191
        %s193 = smul.u32 4, %s25
        %p194 = scmp.eq.s32.totalorder %s25, 0
        // Predicated region
        $region37: #{tpu_custom_call.1} parent=27 // pred_check
          %p195 = pneg %p194
        $region38: #{tpu_custom_call.1} parent=27 // pred_check_branch
          %197 = sbr.rel (%p195) target = $region40
        $region39: #{tpu_custom_call.1} parent=27 // pred_region
          %v198 = vlaneseq
          %vm199 = vcmp.ge.s32.totalorder %v198, 0
          %vm200 = vcmp.lt.s32.totalorder %v198, 256
          %vm201 = vmand %vm199, %vm200
          %202 = vst.msk [vmem:[#allocation2] sm:$0x3] %vm201, 0.0
          %203 = vst.msk [vmem:[#allocation3] sm:$0x3] %vm201, -inf
        $region40: #{tpu_custom_call.1} parent=27 // pred_fallthru
          _
        %s204 = smul.u32 0, 2
        %s205 = smul.addr %s204, 8
        %s206 = scalar_lea.vmem %s167, %s205 [#allocation5]
        %v207 = vld [vmem:[%s206] sm:$0xff]
        %v208 = vld [vmem:[%s206 + $0x8] sm:$0xff]
        %v209 = vadd.f32 %v207, 0.0
        %v210 = vadd.f32 %v208, 0.0
        %s211 = smul.u32 1, 2
        %s212 = smul.addr %s211, 8
        %s213 = scalar_lea.vmem %s167, %s212 [#allocation5]
        %v214 = vld [vmem:[%s213] sm:$0xff]
        %v215 = vld [vmem:[%s213 + $0x8] sm:$0xff]
        %v216 = vadd.f32 %v209, %v214
        %v217 = vadd.f32 %v210, %v215
        %v218 = vmax.f32 %v207, %v214
        %v219 = vmax.f32 %v208, %v215
        %s220 = smul.u32 2, 2
        %s221 = smul.addr %s220, 8
        %s222 = scalar_lea.vmem %s167, %s221 [#allocation5]
        %v223 = vld [vmem:[%s222] sm:$0xff]
        %v224 = vld [vmem:[%s222 + $0x8] sm:$0xff]
        %v225 = vadd.f32 %v216, %v223
        %v226 = vadd.f32 %v217, %v224
        %v227 = vmax.f32 %v218, %v223
        %v228 = vmax.f32 %v219, %v224
        %s229 = smul.u32 3, 2
        %s230 = smul.addr %s229, 8
        %s231 = scalar_lea.vmem %s167, %s230 [#allocation5]
        %v232 = vld [vmem:[%s231] sm:$0xff]
        %v233 = vld [vmem:[%s231 + $0x8] sm:$0xff]
        %v234 = vadd.f32 %v225, %v232
        %v235 = vadd.f32 %v226, %v233
        %v236 = vmax.f32 %v227, %v232
        %v237 = vmax.f32 %v228, %v233
        %v238 = vld [vmem:[#allocation2] sm:$0x3]
        %v239 = vrot.slane %v234, 4
        %v240 = vadd.f32 %v234, %v239
        %v241 = vrot.slane %v240, 2
        %v242 = vadd.f32 %v240, %v241
        %v243 = vrot.slane %v242, 1
        %v244 = vadd.f32 %v242, %v243
        %v245 = vrot.slane %v235, 4
        %v246 = vadd.f32 %v235, %v245
        %v247 = vrot.slane %v246, 2
        %v248 = vadd.f32 %v246, %v247
        %v249 = vrot.slane %v248, 1
        %v250 = vadd.f32 %v248, %v249
        %v253 = vcombine.low %v244, %v250
        %v255 = vunpack.c.l.s4 1966171168
        %v256 = vunpack.c.0.s8 %v255
        %v257 = vlaneseq
        %v258 = vshrl.u32 %v257, 7
        %v259 = vsub.s32 %v256, %v258
        %v260 = vrot.slane %v253, %v259
        %v262 = vunpack.c.l.s4 1966171168
        %v263 = vunpack.c.0.s8 %v262
        %v264 = vlaneseq
        %v265 = vshrl.u32 %v264, 7
        %v266 = vsub.s32 %v263, %v265
        %v267 = vrot.slane %v260, %v266
        %v269 = vadd.f32 %v238, %v267
        %v270 = vlaneseq
        %vm271 = vcmp.ge.s32.totalorder %v270, 0
        %vm272 = vcmp.lt.s32.totalorder %v270, 256
        %vm273 = vmand %vm271, %vm272
        %274 = vst.msk [vmem:[#allocation2] sm:$0x3] %vm273, %v269
        %v275 = vld [vmem:[#allocation3] sm:$0x3]
        %v276 = vrot.slane %v236, 4
        %v277 = vmax.f32 %v236, %v276
        %v278 = vrot.slane %v277, 2
        %v279 = vmax.f32 %v277, %v278
        %v280 = vrot.slane %v279, 1
        %v281 = vmax.f32 %v279, %v280
        %v282 = vrot.slane %v237, 4
        %v283 = vmax.f32 %v237, %v282
        %v284 = vrot.slane %v283, 2
        %v285 = vmax.f32 %v283, %v284
        %v286 = vrot.slane %v285, 1
        %v287 = vmax.f32 %v285, %v286
        %v290 = vcombine.low %v281, %v287
        %v292 = vunpack.c.l.s4 1966171168
        %v293 = vunpack.c.0.s8 %v292
        %v294 = vlaneseq
        %v295 = vshrl.u32 %v294, 7
        %v296 = vsub.s32 %v293, %v295
        %v297 = vrot.slane %v290, %v296
        %v299 = vunpack.c.l.s4 1966171168
        %v300 = vunpack.c.0.s8 %v299
        %v301 = vlaneseq
        %v302 = vshrl.u32 %v301, 7
        %v303 = vsub.s32 %v300, %v302
        %v304 = vrot.slane %v297, %v303
        %v306 = vmax.f32 %v275, %v304
        %307 = vst.msk [vmem:[#allocation3] sm:$0x3] %vm273, %v306
        // Predicated region
        $region41: #{tpu_custom_call.1} parent=27 // pred_check
          %p308 = pneg %p194
        $region42: #{tpu_custom_call.1} parent=27 // pred_check_branch
          %310 = sbr.rel (%p308) target = $region44
        $region43: #{tpu_custom_call.1} parent=27 // pred_region
          %vm311 = vcmask 174080
          %312 = vst.msk [vmem:[#allocation4] sm:$0x7] %vm311, 0.0
          %313 = vst.msk [vmem:[#allocation4 + $0x13] sm:$0x7] %vm311, 0.0
          %vm314 = vcmask 23552
          %315 = vst.msk [vmem:[#allocation4] sm:$0xff] %vm314, 0.0
          %316 = vst.msk [vmem:[#allocation4 + $0x8] sm:$0xff] %vm314, 0.0
          %vm317 = vcmask 21504
          %318 = vst.msk [vmem:[#allocation4 + $0x10] sm:$0x3f] %vm317, 0.0
          %vm319 = vcmask 179352
          %320 = vst.msk [vmem:[#allocation4] sm:$0xff] %vm319, 0.0
          %321 = vst.msk [vmem:[#allocation4 + $0x8] sm:$0xff] %vm319, 0.0
          %vm322 = vcmask 177304
          %323 = vst.msk [vmem:[#allocation4 + $0x10] sm:$0x3f] %vm322, 0.0
          %s324 = scalar_lea.vmem [#allocation4], 24
          %325 = vst.msk [vmem:[%s324] sm:$0x7] %vm311, 0.0
          %326 = vst.msk [vmem:[%s324 + $0x13] sm:$0x7] %vm311, 0.0
          %327 = vst.msk [vmem:[%s324] sm:$0xff] %vm314, 0.0
          %328 = vst.msk [vmem:[%s324 + $0x8] sm:$0xff] %vm314, 0.0
          %329 = vst.msk [vmem:[%s324 + $0x10] sm:$0x3f] %vm317, 0.0
          %330 = vst.msk [vmem:[%s324] sm:$0xff] %vm319, 0.0
          %331 = vst.msk [vmem:[%s324 + $0x8] sm:$0xff] %vm319, 0.0
          %332 = vst.msk [vmem:[%s324 + $0x10] sm:$0x3f] %vm322, 0.0
          %v333 = vld [vmem:[#allocation2] sm:$0x1]
          %v334 = vmul.f32 %v333, 0.03125
          %v336 = vlaneseq
          %v337 = vshrl.u32 %v336, 7
          %v338 = vsub.s32 0, %v337
          %v339 = vrot.slane %v334, %v338
          %340 = vrot.lane.b32.xlu0 %v339, 3
          %v341 = vpop.permute.xlu0 %340
          %vm343 = vcmask 147480
          %344 = vst.msk [vmem:[#allocation4 + $0x3] sm:$0x1] %vm343, %v341
          %v345 = vld [vmem:[#allocation3] sm:$0x1]
          %v347 = vlaneseq
          %v348 = vshrl.u32 %v347, 7
          %v349 = vsub.s32 0, %v348
          %v350 = vrot.slane %v345, %v349
          %351 = vrot.lane.b32.xlu0 %v350, 3
          %v352 = vpop.permute.xlu0 %351
          %354 = vst.msk [vmem:[%s324 + $0x3] sm:$0x1] %vm343, %v352
          %v355 = vld [vmem:[#allocation2] sm:$0x1]
          %v356 = vmul.f32 %v355, 0.03125
          %v358 = vlaneseq
          %v359 = vshrl.u32 %v358, 7
          %v360 = vsub.s32 0, %v359
          %v361 = vrot.slane %v356, %v360
          %362 = vrot.lane.b32.xlu0 %v361, 115
          %v363 = vpop.permute.xlu0 %362
          %365 = vst.msk [vmem:[#allocation4 + $0x4] sm:$0x1] %vm343, %v363
          %v366 = vld [vmem:[#allocation3] sm:$0x1]
          %v368 = vlaneseq
          %v369 = vshrl.u32 %v368, 7
          %v370 = vsub.s32 0, %v369
          %v371 = vrot.slane %v366, %v370
          %372 = vrot.lane.b32.xlu0 %v371, 115
          %v373 = vpop.permute.xlu0 %372
          %375 = vst.msk [vmem:[%s324 + $0x4] sm:$0x1] %vm343, %v373
          %v376 = vld [vmem:[#allocation2] sm:$0x1]
          %v377 = vmul.f32 %v376, 0.03125
          %v379 = vlaneseq
          %v380 = vshrl.u32 %v379, 7
          %v381 = vsub.s32 0, %v380
          %v382 = vrot.slane %v377, %v381
          %383 = vrot.lane.b32.xlu0 %v382, 99
          %v384 = vpop.permute.xlu0 %383
          %386 = vst.msk [vmem:[#allocation4 + $0x5] sm:$0x1] %vm343, %v384
          %v387 = vld [vmem:[#allocation3] sm:$0x1]
          %v389 = vlaneseq
          %v390 = vshrl.u32 %v389, 7
          %v391 = vsub.s32 0, %v390
          %v392 = vrot.slane %v387, %v391
          %393 = vrot.lane.b32.xlu0 %v392, 99
          %v394 = vpop.permute.xlu0 %393
          %396 = vst.msk [vmem:[%s324 + $0x5] sm:$0x1] %vm343, %v394
          %v397 = vld [vmem:[#allocation2] sm:$0x1]
          %v398 = vmul.f32 %v397, 0.03125
          %v400 = vlaneseq
          %v401 = vshrl.u32 %v400, 7
          %v402 = vsub.s32 0, %v401
          %v403 = vrot.slane %v398, %v402
          %404 = vrot.lane.b32.xlu0 %v403, 83
          %v405 = vpop.permute.xlu0 %404
          %407 = vst.msk [vmem:[#allocation4 + $0x6] sm:$0x1] %vm343, %v405
          %v408 = vld [vmem:[#allocation3] sm:$0x1]
          %v410 = vlaneseq
          %v411 = vshrl.u32 %v410, 7
          %v412 = vsub.s32 0, %v411
          %v413 = vrot.slane %v408, %v412
          %414 = vrot.lane.b32.xlu0 %v413, 83
          %v415 = vpop.permute.xlu0 %414
          %417 = vst.msk [vmem:[%s324 + $0x6] sm:$0x1] %vm343, %v415
          %v418 = vld [vmem:[#allocation2] sm:$0x1]
          %v419 = vmul.f32 %v418, 0.03125
          %v421 = vlaneseq
          %v422 = vshrl.u32 %v421, 7
          %v423 = vsub.s32 0, %v422
          %v424 = vrot.slane %v419, %v423
          %425 = vrot.lane.b32.xlu0 %v424, 67
          %v426 = vpop.permute.xlu0 %425
          %428 = vst.msk [vmem:[#allocation4 + $0x7] sm:$0x1] %vm343, %v426
          %v429 = vld [vmem:[#allocation3] sm:$0x1]
          %v431 = vlaneseq
          %v432 = vshrl.u32 %v431, 7
          %v433 = vsub.s32 0, %v432
          %v434 = vrot.slane %v429, %v433
          %435 = vrot.lane.b32.xlu0 %v434, 67
          %v436 = vpop.permute.xlu0 %435
          %438 = vst.msk [vmem:[%s324 + $0x7] sm:$0x1] %vm343, %v436
          %v439 = vld [vmem:[#allocation2] sm:$0x1]
          %v440 = vmul.f32 %v439, 0.03125
          %v442 = vlaneseq
          %v443 = vshrl.u32 %v442, 7
          %v444 = vsub.s32 0, %v443
          %v445 = vrot.slane %v440, %v444
          %446 = vrot.lane.b32.xlu0 %v445, 51
          %v447 = vpop.permute.xlu0 %446
          %449 = vst.msk [vmem:[#allocation4 + $0x8] sm:$0x1] %vm343, %v447
          %v450 = vld [vmem:[#allocation3] sm:$0x1]
          %v452 = vlaneseq
          %v453 = vshrl.u32 %v452, 7
          %v454 = vsub.s32 0, %v453
          %v455 = vrot.slane %v450, %v454
          %456 = vrot.lane.b32.xlu0 %v455, 51
          %v457 = vpop.permute.xlu0 %456
          %459 = vst.msk [vmem:[%s324 + $0x8] sm:$0x1] %vm343, %v457
          %v460 = vld [vmem:[#allocation2] sm:$0x1]
          %v461 = vmul.f32 %v460, 0.03125
          %v463 = vlaneseq
          %v464 = vshrl.u32 %v463, 7
          %v465 = vsub.s32 0, %v464
          %v466 = vrot.slane %v461, %v465
          %467 = vrot.lane.b32.xlu0 %v466, 35
          %v468 = vpop.permute.xlu0 %467
          %470 = vst.msk [vmem:[#allocation4 + $0x9] sm:$0x1] %vm343, %v468
          %v471 = vld [vmem:[#allocation3] sm:$0x1]
          %v473 = vlaneseq
          %v474 = vshrl.u32 %v473, 7
          %v475 = vsub.s32 0, %v474
          %v476 = vrot.slane %v471, %v475
          %477 = vrot.lane.b32.xlu0 %v476, 35
          %v478 = vpop.permute.xlu0 %477
          %480 = vst.msk [vmem:[%s324 + $0x9] sm:$0x1] %vm343, %v478
          %v481 = vld [vmem:[#allocation2] sm:$0x1]
          %v482 = vmul.f32 %v481, 0.03125
          %v484 = vlaneseq
          %v485 = vshrl.u32 %v484, 7
          %v486 = vsub.s32 0, %v485
          %v487 = vrot.slane %v482, %v486
          %488 = vrot.lane.b32.xlu0 %v487, 19
          %v489 = vpop.permute.xlu0 %488
          %491 = vst.msk [vmem:[#allocation4 + $0xa] sm:$0x1] %vm343, %v489
          %v492 = vld [vmem:[#allocation3] sm:$0x1]
          %v494 = vlaneseq
          %v495 = vshrl.u32 %v494, 7
          %v496 = vsub.s32 0, %v495
          %v497 = vrot.slane %v492, %v496
          %498 = vrot.lane.b32.xlu0 %v497, 19
          %v499 = vpop.permute.xlu0 %498
          %501 = vst.msk [vmem:[%s324 + $0xa] sm:$0x1] %vm343, %v499
          %v502 = vld [vmem:[#allocation2 + $0x1] sm:$0x1]
          %v503 = vmul.f32 %v502, 0.03125
          %v505 = vlaneseq
          %v506 = vshrl.u32 %v505, 7
          %v507 = vsub.s32 0, %v506
          %v508 = vrot.slane %v503, %v507
          %509 = vrot.lane.b32.xlu0 %v508, 3
          %v510 = vpop.permute.xlu0 %509
          %512 = vst.msk [vmem:[#allocation4 + $0xb] sm:$0x1] %vm343, %v510
          %v513 = vld [vmem:[#allocation3 + $0x1] sm:$0x1]
          %v515 = vlaneseq
          %v516 = vshrl.u32 %v515, 7
          %v517 = vsub.s32 0, %v516
          %v518 = vrot.slane %v513, %v517
          %519 = vrot.lane.b32.xlu0 %v518, 3
          %v520 = vpop.permute.xlu0 %519
          %522 = vst.msk [vmem:[%s324 + $0xb] sm:$0x1] %vm343, %v520
          %v523 = vld [vmem:[#allocation2 + $0x1] sm:$0x1]
          %v524 = vmul.f32 %v523, 0.03125
          %v526 = vlaneseq
          %v527 = vshrl.u32 %v526, 7
          %v528 = vsub.s32 0, %v527
          %v529 = vrot.slane %v524, %v528
          %530 = vrot.lane.b32.xlu0 %v529, 115
          %v531 = vpop.permute.xlu0 %530
          %533 = vst.msk [vmem:[#allocation4 + $0xc] sm:$0x1] %vm343, %v531
          %v534 = vld [vmem:[#allocation3 + $0x1] sm:$0x1]
          %v536 = vlaneseq
          %v537 = vshrl.u32 %v536, 7
          %v538 = vsub.s32 0, %v537
          %v539 = vrot.slane %v534, %v538
          %540 = vrot.lane.b32.xlu0 %v539, 115
          %v541 = vpop.permute.xlu0 %540
          %543 = vst.msk [vmem:[%s324 + $0xc] sm:$0x1] %vm343, %v541
          %v544 = vld [vmem:[#allocation2 + $0x1] sm:$0x1]
          %v545 = vmul.f32 %v544, 0.03125
          %v547 = vlaneseq
          %v548 = vshrl.u32 %v547, 7
          %v549 = vsub.s32 0, %v548
          %v550 = vrot.slane %v545, %v549
          %551 = vrot.lane.b32.xlu0 %v550, 99
          %v552 = vpop.permute.xlu0 %551
          %554 = vst.msk [vmem:[#allocation4 + $0xd] sm:$0x1] %vm343, %v552
          %v555 = vld [vmem:[#allocation3 + $0x1] sm:$0x1]
          %v557 = vlaneseq
          %v558 = vshrl.u32 %v557, 7
          %v559 = vsub.s32 0, %v558
          %v560 = vrot.slane %v555, %v559
          %561 = vrot.lane.b32.xlu0 %v560, 99
          %v562 = vpop.permute.xlu0 %561
          %564 = vst.msk [vmem:[%s324 + $0xd] sm:$0x1] %vm343, %v562
          %v565 = vld [vmem:[#allocation2 + $0x1] sm:$0x1]
          %v566 = vmul.f32 %v565, 0.03125
          %v568 = vlaneseq
          %v569 = vshrl.u32 %v568, 7
          %v570 = vsub.s32 0, %v569
          %v571 = vrot.slane %v566, %v570
          %572 = vrot.lane.b32.xlu0 %v571, 83
          %v573 = vpop.permute.xlu0 %572
          %575 = vst.msk [vmem:[#allocation4 + $0xe] sm:$0x1] %vm343, %v573
          %v576 = vld [vmem:[#allocation3 + $0x1] sm:$0x1]
          %v578 = vlaneseq
          %v579 = vshrl.u32 %v578, 7
          %v580 = vsub.s32 0, %v579
          %v581 = vrot.slane %v576, %v580
          %582 = vrot.lane.b32.xlu0 %v581, 83
          %v583 = vpop.permute.xlu0 %582
          %585 = vst.msk [vmem:[%s324 + $0xe] sm:$0x1] %vm343, %v583
          %v586 = vld [vmem:[#allocation2 + $0x1] sm:$0x1]
          %v587 = vmul.f32 %v586, 0.03125
          %v589 = vlaneseq
          %v590 = vshrl.u32 %v589, 7
          %v591 = vsub.s32 0, %v590
          %v592 = vrot.slane %v587, %v591
          %593 = vrot.lane.b32.xlu0 %v592, 67
          %v594 = vpop.permute.xlu0 %593
          %596 = vst.msk [vmem:[#allocation4 + $0xf] sm:$0x1] %vm343, %v594
          %v597 = vld [vmem:[#allocation3 + $0x1] sm:$0x1]
          %v599 = vlaneseq
          %v600 = vshrl.u32 %v599, 7
          %v601 = vsub.s32 0, %v600
          %v602 = vrot.slane %v597, %v601
          %603 = vrot.lane.b32.xlu0 %v602, 67
          %v604 = vpop.permute.xlu0 %603
          %606 = vst.msk [vmem:[%s324 + $0xf] sm:$0x1] %vm343, %v604
          %v607 = vld [vmem:[#allocation2 + $0x1] sm:$0x1]
          %v608 = vmul.f32 %v607, 0.03125
          %v610 = vlaneseq
          %v611 = vshrl.u32 %v610, 7
          %v612 = vsub.s32 0, %v611
          %v613 = vrot.slane %v608, %v612
          %614 = vrot.lane.b32.xlu0 %v613, 51
          %v615 = vpop.permute.xlu0 %614
          %617 = vst.msk [vmem:[#allocation4 + $0x10] sm:$0x1] %vm343, %v615
          %v618 = vld [vmem:[#allocation3 + $0x1] sm:$0x1]
          %v620 = vlaneseq
          %v621 = vshrl.u32 %v620, 7
          %v622 = vsub.s32 0, %v621
          %v623 = vrot.slane %v618, %v622
          %624 = vrot.lane.b32.xlu0 %v623, 51
          %v625 = vpop.permute.xlu0 %624
          %627 = vst.msk [vmem:[%s324 + $0x10] sm:$0x1] %vm343, %v625
          %v628 = vld [vmem:[#allocation2 + $0x1] sm:$0x1]
          %v629 = vmul.f32 %v628, 0.03125
          %v631 = vlaneseq
          %v632 = vshrl.u32 %v631, 7
          %v633 = vsub.s32 0, %v632
          %v634 = vrot.slane %v629, %v633
          %635 = vrot.lane.b32.xlu0 %v634, 35
          %v636 = vpop.permute.xlu0 %635
          %638 = vst.msk [vmem:[#allocation4 + $0x11] sm:$0x1] %vm343, %v636
          %v639 = vld [vmem:[#allocation3 + $0x1] sm:$0x1]
          %v641 = vlaneseq
          %v642 = vshrl.u32 %v641, 7
          %v643 = vsub.s32 0, %v642
          %v644 = vrot.slane %v639, %v643
          %645 = vrot.lane.b32.xlu0 %v644, 35
          %v646 = vpop.permute.xlu0 %645
          %648 = vst.msk [vmem:[%s324 + $0x11] sm:$0x1] %vm343, %v646
          %v649 = vld [vmem:[#allocation2 + $0x1] sm:$0x1]
          %v650 = vmul.f32 %v649, 0.03125
          %v652 = vlaneseq
          %v653 = vshrl.u32 %v652, 7
          %v654 = vsub.s32 0, %v653
          %v655 = vrot.slane %v650, %v654
          %656 = vrot.lane.b32.xlu0 %v655, 19
          %v657 = vpop.permute.xlu0 %656
          %659 = vst.msk [vmem:[#allocation4 + $0x12] sm:$0x1] %vm343, %v657
          %v660 = vld [vmem:[#allocation3 + $0x1] sm:$0x1]
          %v662 = vlaneseq
          %v663 = vshrl.u32 %v662, 7
          %v664 = vsub.s32 0, %v663
          %v665 = vrot.slane %v660, %v664
          %666 = vrot.lane.b32.xlu0 %v665, 19
          %v667 = vpop.permute.xlu0 %666
          %669 = vst.msk [vmem:[%s324 + $0x12] sm:$0x1] %vm343, %v667
          %v670 = vld [vmem:[#allocation4] sm:$0xff]
          %v671 = vld [vmem:[#allocation4 + $0x8] sm:$0xff]
          %v672 = vld [vmem:[#allocation4 + $0x10] sm:$0x3f]
          %s673 = sld [smem:[#allocation9]]
          %v674 = vstv %s673
          %v675 = vmul.f32 %v670, %v674
          %v676 = vmul.f32 %v671, %v674
          %v677 = vadd.f32 %v675, 0.0
          %v678 = vadd.f32 %v676, 0.0
          %s679 = sld [smem:[#allocation9 + $0x7]]
          %v680 = vstv %s679
          %v681 = vmul.f32 %v670, %v680
          %v682 = vmul.f32 %v671, %v680
          %v683 = vmul.f32 %v672, %v680
          %vm687 = vcmask 1046528
          %v688 = vrot.slane %v681, 1
          %v689 = vrot.slane %v682, 1
          %v690 = vsel %vm687, %v688, %v689
          %v691 = vrot.slane %v683, 1
          %v692 = vsel %vm687, %v689, %v691
          %v695 = vadd.f32 %v677, %v690
          %v696 = vadd.f32 %v678, %v692
          %s697 = sld [smem:[#allocation9 + $0xe]]
          %v698 = vstv %s697
          %v699 = vmul.f32 %v670, %v698
          %v700 = vmul.f32 %v671, %v698
          %v701 = vmul.f32 %v672, %v698
          %vm705 = vcmask 1045504
          %v706 = vrot.slane %v699, 2
          %v707 = vrot.slane %v700, 2
          %v708 = vsel %vm705, %v706, %v707
          %v709 = vrot.slane %v701, 2
          %v710 = vsel %vm705, %v707, %v709
          %v713 = vadd.f32 %v695, %v708
          %v714 = vadd.f32 %v696, %v710
          %s715 = sld [smem:[#allocation9 + $0x15]]
          %v716 = vstv %s715
          %v717 = vmul.f32 %v670, %v716
          %v718 = vmul.f32 %v671, %v716
          %v719 = vmul.f32 %v672, %v716
          %vm723 = vcmask 1044480
          %v724 = vrot.slane %v717, 3
          %v725 = vrot.slane %v718, 3
          %v726 = vsel %vm723, %v724, %v725
          %v727 = vrot.slane %v719, 3
          %v728 = vsel %vm723, %v725, %v727
          %v731 = vadd.f32 %v713, %v726
          %v732 = vadd.f32 %v714, %v728
          %s733 = sld [smem:[#allocation9 + $0x1c]]
          %v734 = vstv %s733
          %v735 = vmul.f32 %v670, %v734
          %v736 = vmul.f32 %v671, %v734
          %v737 = vmul.f32 %v672, %v734
          %vm741 = vcmask 1043456
          %v742 = vrot.slane %v735, 4
          %v743 = vrot.slane %v736, 4
          %v744 = vsel %vm741, %v742, %v743
          %v745 = vrot.slane %v737, 4
          %v746 = vsel %vm741, %v743, %v745
          %v749 = vadd.f32 %v731, %v744
          %v750 = vadd.f32 %v732, %v746
          %s751 = sld [smem:[#allocation9 + $0x23]]
          %v752 = vstv %s751
          %v753 = vmul.f32 %v670, %v752
          %v754 = vmul.f32 %v671, %v752
          %v755 = vmul.f32 %v672, %v752
          %vm759 = vcmask 1042432
          %v760 = vrot.slane %v753, 5
          %v761 = vrot.slane %v754, 5
          %v762 = vsel %vm759, %v760, %v761
          %v763 = vrot.slane %v755, 5
          %v764 = vsel %vm759, %v761, %v763
          %v767 = vadd.f32 %v749, %v762
          %v768 = vadd.f32 %v750, %v764
          %s769 = sld [smem:[#allocation9 + $0x2a]]
          %v770 = vstv %s769
          %v771 = vmul.f32 %v670, %v770
          %v772 = vmul.f32 %v671, %v770
          %v773 = vmul.f32 %v672, %v770
          %vm777 = vcmask 1041408
          %v778 = vrot.slane %v771, 6
          %v779 = vrot.slane %v772, 6
          %v780 = vsel %vm777, %v778, %v779
          %v781 = vrot.slane %v773, 6
          %v782 = vsel %vm777, %v779, %v781
          %v785 = vadd.f32 %v767, %v780
          %v786 = vadd.f32 %v768, %v782
          %s787 = sld [smem:[#allocation9 + $0x1]]
          %v788 = vstv %s787
          %v789 = vmul.f32 %v670, %v788
          %v790 = vmul.f32 %v671, %v788
          %793 = vrot.lane.b32.xlu0 %v789, 127
          %v794 = vpop.permute.xlu0 %793
          %795 = vrot.lane.b32.xlu0 %v790, 127
          %v796 = vpop.permute.xlu0 %795
          %v799 = vadd.f32 %v785, %v794
          %v800 = vadd.f32 %v786, %v796
          %s801 = sld [smem:[#allocation9 + $0x8]]
          %v802 = vstv %s801
          %v803 = vmul.f32 %v670, %v802
          %v804 = vmul.f32 %v671, %v802
          %v805 = vmul.f32 %v672, %v802
          %v809 = vrot.slane %v803, 1
          %v810 = vrot.slane %v804, 1
          %v811 = vsel %vm687, %v809, %v810
          %v812 = vrot.slane %v805, 1
          %v813 = vsel %vm687, %v810, %v812
          %814 = vrot.lane.b32.xlu0 %v811, 127
          %v815 = vpop.permute.xlu0 %814
          %816 = vrot.lane.b32.xlu0 %v813, 127
          %v817 = vpop.permute.xlu0 %816
          %v820 = vadd.f32 %v799, %v815
          %v821 = vadd.f32 %v800, %v817
          %s822 = sld [smem:[#allocation9 + $0xf]]
          %v823 = vstv %s822
          %v824 = vmul.f32 %v670, %v823
          %v825 = vmul.f32 %v671, %v823
          %v826 = vmul.f32 %v672, %v823
          %v830 = vrot.slane %v824, 2
          %v831 = vrot.slane %v825, 2
          %v832 = vsel %vm705, %v830, %v831
          %v833 = vrot.slane %v826, 2
          %v834 = vsel %vm705, %v831, %v833
          %835 = vrot.lane.b32.xlu0 %v832, 127
          %v836 = vpop.permute.xlu0 %835
          %837 = vrot.lane.b32.xlu0 %v834, 127
          %v838 = vpop.permute.xlu0 %837
          %v841 = vadd.f32 %v820, %v836
          %v842 = vadd.f32 %v821, %v838
          %s843 = sld [smem:[#allocation9 + $0x16]]
          %v844 = vstv %s843
          %v845 = vmul.f32 %v670, %v844
          %v846 = vmul.f32 %v671, %v844
          %v847 = vmul.f32 %v672, %v844
          %v851 = vrot.slane %v845, 3
          %v852 = vrot.slane %v846, 3
          %v853 = vsel %vm723, %v851, %v852
          %v854 = vrot.slane %v847, 3
          %v855 = vsel %vm723, %v852, %v854
          %856 = vrot.lane.b32.xlu0 %v853, 127
          %v857 = vpop.permute.xlu0 %856
          %858 = vrot.lane.b32.xlu0 %v855, 127
          %v859 = vpop.permute.xlu0 %858
          %v862 = vadd.f32 %v841, %v857
          %v863 = vadd.f32 %v842, %v859
          %s864 = sld [smem:[#allocation9 + $0x1d]]
          %v865 = vstv %s864
          %v866 = vmul.f32 %v670, %v865
          %v867 = vmul.f32 %v671, %v865
          %v868 = vmul.f32 %v672, %v865
          %v872 = vrot.slane %v866, 4
          %v873 = vrot.slane %v867, 4
          %v874 = vsel %vm741, %v872, %v873
          %v875 = vrot.slane %v868, 4
          %v876 = vsel %vm741, %v873, %v875
          %877 = vrot.lane.b32.xlu0 %v874, 127
          %v878 = vpop.permute.xlu0 %877
          %879 = vrot.lane.b32.xlu0 %v876, 127
          %v880 = vpop.permute.xlu0 %879
          %v883 = vadd.f32 %v862, %v878
          %v884 = vadd.f32 %v863, %v880
          %s885 = sld [smem:[#allocation9 + $0x24]]
          %v886 = vstv %s885
          %v887 = vmul.f32 %v670, %v886
          %v888 = vmul.f32 %v671, %v886
          %v889 = vmul.f32 %v672, %v886
          %v893 = vrot.slane %v887, 5
          %v894 = vrot.slane %v888, 5
          %v895 = vsel %vm759, %v893, %v894
          %v896 = vrot.slane %v889, 5
          %v897 = vsel %vm759, %v894, %v896
          %898 = vrot.lane.b32.xlu0 %v895, 127
          %v899 = vpop.permute.xlu0 %898
          %900 = vrot.lane.b32.xlu0 %v897, 127
          %v901 = vpop.permute.xlu0 %900
          %v904 = vadd.f32 %v883, %v899
          %v905 = vadd.f32 %v884, %v901
          %s906 = sld [smem:[#allocation9 + $0x2b]]
          %v907 = vstv %s906
          %v908 = vmul.f32 %v670, %v907
          %v909 = vmul.f32 %v671, %v907
          %v910 = vmul.f32 %v672, %v907
          %v914 = vrot.slane %v908, 6
          %v915 = vrot.slane %v909, 6
          %v916 = vsel %vm777, %v914, %v915
          %v917 = vrot.slane %v910, 6
          %v918 = vsel %vm777, %v915, %v917
          %919 = vrot.lane.b32.xlu0 %v916, 127
          %v920 = vpop.permute.xlu0 %919
          %921 = vrot.lane.b32.xlu0 %v918, 127
          %v922 = vpop.permute.xlu0 %921
          %v925 = vadd.f32 %v904, %v920
          %v926 = vadd.f32 %v905, %v922
          %s927 = sld [smem:[#allocation9 + $0x2]]
          %v928 = vstv %s927
          %v929 = vmul.f32 %v670, %v928
          %v930 = vmul.f32 %v671, %v928
          %933 = vrot.lane.b32.xlu0 %v929, 126
          %v934 = vpop.permute.xlu0 %933
          %935 = vrot.lane.b32.xlu0 %v930, 126
          %v936 = vpop.permute.xlu0 %935
          %v939 = vadd.f32 %v925, %v934
          %v940 = vadd.f32 %v926, %v936
          %s941 = sld [smem:[#allocation9 + $0x9]]
          %v942 = vstv %s941
          %v943 = vmul.f32 %v670, %v942
          %v944 = vmul.f32 %v671, %v942
          %v945 = vmul.f32 %v672, %v942
          %v949 = vrot.slane %v943, 1
          %v950 = vrot.slane %v944, 1
          %v951 = vsel %vm687, %v949, %v950
          %v952 = vrot.slane %v945, 1
          %v953 = vsel %vm687, %v950, %v952
          %954 = vrot.lane.b32.xlu0 %v951, 126
          %v955 = vpop.permute.xlu0 %954
          %956 = vrot.lane.b32.xlu0 %v953, 126
          %v957 = vpop.permute.xlu0 %956
          %v960 = vadd.f32 %v939, %v955
          %v961 = vadd.f32 %v940, %v957
          %s962 = sld [smem:[#allocation9 + $0x10]]
          %v963 = vstv %s962
          %v964 = vmul.f32 %v670, %v963
          %v965 = vmul.f32 %v671, %v963
          %v966 = vmul.f32 %v672, %v963
          %v970 = vrot.slane %v964, 2
          %v971 = vrot.slane %v965, 2
          %v972 = vsel %vm705, %v970, %v971
          %v973 = vrot.slane %v966, 2
          %v974 = vsel %vm705, %v971, %v973
          %975 = vrot.lane.b32.xlu0 %v972, 126
          %v976 = vpop.permute.xlu0 %975
          %977 = vrot.lane.b32.xlu0 %v974, 126
          %v978 = vpop.permute.xlu0 %977
          %v981 = vadd.f32 %v960, %v976
          %v982 = vadd.f32 %v961, %v978
          %s983 = sld [smem:[#allocation9 + $0x17]]
          %v984 = vstv %s983
          %v985 = vmul.f32 %v670, %v984
          %v986 = vmul.f32 %v671, %v984
          %v987 = vmul.f32 %v672, %v984
          %v991 = vrot.slane %v985, 3
          %v992 = vrot.slane %v986, 3
          %v993 = vsel %vm723, %v991, %v992
          %v994 = vrot.slane %v987, 3
          %v995 = vsel %vm723, %v992, %v994
          %996 = vrot.lane.b32.xlu0 %v993, 126
          %v997 = vpop.permute.xlu0 %996
          %998 = vrot.lane.b32.xlu0 %v995, 126
          %v999 = vpop.permute.xlu0 %998
          %v1002 = vadd.f32 %v981, %v997
          %v1003 = vadd.f32 %v982, %v999
          %s1004 = sld [smem:[#allocation9 + $0x1e]]
          %v1005 = vstv %s1004
          %v1006 = vmul.f32 %v670, %v1005
          %v1007 = vmul.f32 %v671, %v1005
          %v1008 = vmul.f32 %v672, %v1005
          %v1012 = vrot.slane %v1006, 4
          %v1013 = vrot.slane %v1007, 4
          %v1014 = vsel %vm741, %v1012, %v1013
          %v1015 = vrot.slane %v1008, 4
          %v1016 = vsel %vm741, %v1013, %v1015
          %1017 = vrot.lane.b32.xlu0 %v1014, 126
          %v1018 = vpop.permute.xlu0 %1017
          %1019 = vrot.lane.b32.xlu0 %v1016, 126
          %v1020 = vpop.permute.xlu0 %1019
          %v1023 = vadd.f32 %v1002, %v1018
          %v1024 = vadd.f32 %v1003, %v1020
          %s1025 = sld [smem:[#allocation9 + $0x25]]
          %v1026 = vstv %s1025
          %v1027 = vmul.f32 %v670, %v1026
          %v1028 = vmul.f32 %v671, %v1026
          %v1029 = vmul.f32 %v672, %v1026
          %v1033 = vrot.slane %v1027, 5
          %v1034 = vrot.slane %v1028, 5
          %v1035 = vsel %vm759, %v1033, %v1034
          %v1036 = vrot.slane %v1029, 5
          %v1037 = vsel %vm759, %v1034, %v1036
          %1038 = vrot.lane.b32.xlu0 %v1035, 126
          %v1039 = vpop.permute.xlu0 %1038
          %1040 = vrot.lane.b32.xlu0 %v1037, 126
          %v1041 = vpop.permute.xlu0 %1040
          %v1044 = vadd.f32 %v1023, %v1039
          %v1045 = vadd.f32 %v1024, %v1041
          %s1046 = sld [smem:[#allocation9 + $0x2c]]
          %v1047 = vstv %s1046
          %v1048 = vmul.f32 %v670, %v1047
          %v1049 = vmul.f32 %v671, %v1047
          %v1050 = vmul.f32 %v672, %v1047
          %v1054 = vrot.slane %v1048, 6
          %v1055 = vrot.slane %v1049, 6
          %v1056 = vsel %vm777, %v1054, %v1055
          %v1057 = vrot.slane %v1050, 6
          %v1058 = vsel %vm777, %v1055, %v1057
          %1059 = vrot.lane.b32.xlu0 %v1056, 126
          %v1060 = vpop.permute.xlu0 %1059
          %1061 = vrot.lane.b32.xlu0 %v1058, 126
          %v1062 = vpop.permute.xlu0 %1061
          %v1065 = vadd.f32 %v1044, %v1060
          %v1066 = vadd.f32 %v1045, %v1062
          %s1067 = sld [smem:[#allocation9 + $0x3]]
          %v1068 = vstv %s1067
          %v1069 = vmul.f32 %v670, %v1068
          %v1070 = vmul.f32 %v671, %v1068
          %1073 = vrot.lane.b32.xlu0 %v1069, 125
          %v1074 = vpop.permute.xlu0 %1073
          %1075 = vrot.lane.b32.xlu0 %v1070, 125
          %v1076 = vpop.permute.xlu0 %1075
          %v1079 = vadd.f32 %v1065, %v1074
          %v1080 = vadd.f32 %v1066, %v1076
          %s1081 = sld [smem:[#allocation9 + $0xa]]
          %v1082 = vstv %s1081
          %v1083 = vmul.f32 %v670, %v1082
          %v1084 = vmul.f32 %v671, %v1082
          %v1085 = vmul.f32 %v672, %v1082
          %v1089 = vrot.slane %v1083, 1
          %v1090 = vrot.slane %v1084, 1
          %v1091 = vsel %vm687, %v1089, %v1090
          %v1092 = vrot.slane %v1085, 1
          %v1093 = vsel %vm687, %v1090, %v1092
          %1094 = vrot.lane.b32.xlu0 %v1091, 125
          %v1095 = vpop.permute.xlu0 %1094
          %1096 = vrot.lane.b32.xlu0 %v1093, 125
          %v1097 = vpop.permute.xlu0 %1096
          %v1100 = vadd.f32 %v1079, %v1095
          %v1101 = vadd.f32 %v1080, %v1097
          %s1102 = sld [smem:[#allocation9 + $0x11]]
          %v1103 = vstv %s1102
          %v1104 = vmul.f32 %v670, %v1103
          %v1105 = vmul.f32 %v671, %v1103
          %v1106 = vmul.f32 %v672, %v1103
          %v1110 = vrot.slane %v1104, 2
          %v1111 = vrot.slane %v1105, 2
          %v1112 = vsel %vm705, %v1110, %v1111
          %v1113 = vrot.slane %v1106, 2
          %v1114 = vsel %vm705, %v1111, %v1113
          %1115 = vrot.lane.b32.xlu0 %v1112, 125
          %v1116 = vpop.permute.xlu0 %1115
          %1117 = vrot.lane.b32.xlu0 %v1114, 125
          %v1118 = vpop.permute.xlu0 %1117
          %v1121 = vadd.f32 %v1100, %v1116
          %v1122 = vadd.f32 %v1101, %v1118
          %s1123 = sld [smem:[#allocation9 + $0x18]]
          %v1124 = vstv %s1123
          %v1125 = vmul.f32 %v670, %v1124
          %v1126 = vmul.f32 %v671, %v1124
          %v1127 = vmul.f32 %v672, %v1124
          %v1131 = vrot.slane %v1125, 3
          %v1132 = vrot.slane %v1126, 3
          %v1133 = vsel %vm723, %v1131, %v1132
          %v1134 = vrot.slane %v1127, 3
          %v1135 = vsel %vm723, %v1132, %v1134
          %1136 = vrot.lane.b32.xlu0 %v1133, 125
          %v1137 = vpop.permute.xlu0 %1136
          %1138 = vrot.lane.b32.xlu0 %v1135, 125
          %v1139 = vpop.permute.xlu0 %1138
          %v1142 = vadd.f32 %v1121, %v1137
          %v1143 = vadd.f32 %v1122, %v1139
          %s1144 = sld [smem:[#allocation9 + $0x1f]]
          %v1145 = vstv %s1144
          %v1146 = vmul.f32 %v670, %v1145
          %v1147 = vmul.f32 %v671, %v1145
          %v1148 = vmul.f32 %v672, %v1145
          %v1152 = vrot.slane %v1146, 4
          %v1153 = vrot.slane %v1147, 4
          %v1154 = vsel %vm741, %v1152, %v1153
          %v1155 = vrot.slane %v1148, 4
          %v1156 = vsel %vm741, %v1153, %v1155
          %1157 = vrot.lane.b32.xlu0 %v1154, 125
          %v1158 = vpop.permute.xlu0 %1157
          %1159 = vrot.lane.b32.xlu0 %v1156, 125
          %v1160 = vpop.permute.xlu0 %1159
          %v1163 = vadd.f32 %v1142, %v1158
          %v1164 = vadd.f32 %v1143, %v1160
          %s1165 = sld [smem:[#allocation9 + $0x26]]
          %v1166 = vstv %s1165
          %v1167 = vmul.f32 %v670, %v1166
          %v1168 = vmul.f32 %v671, %v1166
          %v1169 = vmul.f32 %v672, %v1166
          %v1173 = vrot.slane %v1167, 5
          %v1174 = vrot.slane %v1168, 5
          %v1175 = vsel %vm759, %v1173, %v1174
          %v1176 = vrot.slane %v1169, 5
          %v1177 = vsel %vm759, %v1174, %v1176
          %1178 = vrot.lane.b32.xlu0 %v1175, 125
          %v1179 = vpop.permute.xlu0 %1178
          %1180 = vrot.lane.b32.xlu0 %v1177, 125
          %v1181 = vpop.permute.xlu0 %1180
          %v1184 = vadd.f32 %v1163, %v1179
          %v1185 = vadd.f32 %v1164, %v1181
          %s1186 = sld [smem:[#allocation9 + $0x2d]]
          %v1187 = vstv %s1186
          %v1188 = vmul.f32 %v670, %v1187
          %v1189 = vmul.f32 %v671, %v1187
          %v1190 = vmul.f32 %v672, %v1187
          %v1194 = vrot.slane %v1188, 6
          %v1195 = vrot.slane %v1189, 6
          %v1196 = vsel %vm777, %v1194, %v1195
          %v1197 = vrot.slane %v1190, 6
          %v1198 = vsel %vm777, %v1195, %v1197
          %1199 = vrot.lane.b32.xlu0 %v1196, 125
          %v1200 = vpop.permute.xlu0 %1199
          %1201 = vrot.lane.b32.xlu0 %v1198, 125
          %v1202 = vpop.permute.xlu0 %1201
          %v1205 = vadd.f32 %v1184, %v1200
          %v1206 = vadd.f32 %v1185, %v1202
          %s1207 = sld [smem:[#allocation9 + $0x4]]
          %v1208 = vstv %s1207
          %v1209 = vmul.f32 %v670, %v1208
          %v1210 = vmul.f32 %v671, %v1208
          %1213 = vrot.lane.b32.xlu0 %v1209, 124
          %v1214 = vpop.permute.xlu0 %1213
          %1215 = vrot.lane.b32.xlu0 %v1210, 124
          %v1216 = vpop.permute.xlu0 %1215
          %v1219 = vadd.f32 %v1205, %v1214
          %v1220 = vadd.f32 %v1206, %v1216
          %s1221 = sld [smem:[#allocation9 + $0xb]]
          %v1222 = vstv %s1221
          %v1223 = vmul.f32 %v670, %v1222
          %v1224 = vmul.f32 %v671, %v1222
          %v1225 = vmul.f32 %v672, %v1222
          %v1229 = vrot.slane %v1223, 1
          %v1230 = vrot.slane %v1224, 1
          %v1231 = vsel %vm687, %v1229, %v1230
          %v1232 = vrot.slane %v1225, 1
          %v1233 = vsel %vm687, %v1230, %v1232
          %1234 = vrot.lane.b32.xlu0 %v1231, 124
          %v1235 = vpop.permute.xlu0 %1234
          %1236 = vrot.lane.b32.xlu0 %v1233, 124
          %v1237 = vpop.permute.xlu0 %1236
          %v1240 = vadd.f32 %v1219, %v1235
          %v1241 = vadd.f32 %v1220, %v1237
          %s1242 = sld [smem:[#allocation9 + $0x12]]
          %v1243 = vstv %s1242
          %v1244 = vmul.f32 %v670, %v1243
          %v1245 = vmul.f32 %v671, %v1243
          %v1246 = vmul.f32 %v672, %v1243
          %v1250 = vrot.slane %v1244, 2
          %v1251 = vrot.slane %v1245, 2
          %v1252 = vsel %vm705, %v1250, %v1251
          %v1253 = vrot.slane %v1246, 2
          %v1254 = vsel %vm705, %v1251, %v1253
          %1255 = vrot.lane.b32.xlu0 %v1252, 124
          %v1256 = vpop.permute.xlu0 %1255
          %1257 = vrot.lane.b32.xlu0 %v1254, 124
          %v1258 = vpop.permute.xlu0 %1257
          %v1261 = vadd.f32 %v1240, %v1256
          %v1262 = vadd.f32 %v1241, %v1258
          %s1263 = sld [smem:[#allocation9 + $0x19]]
          %v1264 = vstv %s1263
          %v1265 = vmul.f32 %v670, %v1264
          %v1266 = vmul.f32 %v671, %v1264
          %v1267 = vmul.f32 %v672, %v1264
          %v1271 = vrot.slane %v1265, 3
          %v1272 = vrot.slane %v1266, 3
          %v1273 = vsel %vm723, %v1271, %v1272
          %v1274 = vrot.slane %v1267, 3
          %v1275 = vsel %vm723, %v1272, %v1274
          %1276 = vrot.lane.b32.xlu0 %v1273, 124
          %v1277 = vpop.permute.xlu0 %1276
          %1278 = vrot.lane.b32.xlu0 %v1275, 124
          %v1279 = vpop.permute.xlu0 %1278
          %v1282 = vadd.f32 %v1261, %v1277
          %v1283 = vadd.f32 %v1262, %v1279
          %s1284 = sld [smem:[#allocation9 + $0x20]]
          %v1285 = vstv %s1284
          %v1286 = vmul.f32 %v670, %v1285
          %v1287 = vmul.f32 %v671, %v1285
          %v1288 = vmul.f32 %v672, %v1285
          %v1292 = vrot.slane %v1286, 4
          %v1293 = vrot.slane %v1287, 4
          %v1294 = vsel %vm741, %v1292, %v1293
          %v1295 = vrot.slane %v1288, 4
          %v1296 = vsel %vm741, %v1293, %v1295
          %1297 = vrot.lane.b32.xlu0 %v1294, 124
          %v1298 = vpop.permute.xlu0 %1297
          %1299 = vrot.lane.b32.xlu0 %v1296, 124
          %v1300 = vpop.permute.xlu0 %1299
          %v1303 = vadd.f32 %v1282, %v1298
          %v1304 = vadd.f32 %v1283, %v1300
          %s1305 = sld [smem:[#allocation9 + $0x27]]
          %v1306 = vstv %s1305
          %v1307 = vmul.f32 %v670, %v1306
          %v1308 = vmul.f32 %v671, %v1306
          %v1309 = vmul.f32 %v672, %v1306
          %v1313 = vrot.slane %v1307, 5
          %v1314 = vrot.slane %v1308, 5
          %v1315 = vsel %vm759, %v1313, %v1314
          %v1316 = vrot.slane %v1309, 5
          %v1317 = vsel %vm759, %v1314, %v1316
          %1318 = vrot.lane.b32.xlu0 %v1315, 124
          %v1319 = vpop.permute.xlu0 %1318
          %1320 = vrot.lane.b32.xlu0 %v1317, 124
          %v1321 = vpop.permute.xlu0 %1320
          %v1324 = vadd.f32 %v1303, %v1319
          %v1325 = vadd.f32 %v1304, %v1321
          %s1326 = sld [smem:[#allocation9 + $0x2e]]
          %v1327 = vstv %s1326
          %v1328 = vmul.f32 %v670, %v1327
          %v1329 = vmul.f32 %v671, %v1327
          %v1330 = vmul.f32 %v672, %v1327
          %v1334 = vrot.slane %v1328, 6
          %v1335 = vrot.slane %v1329, 6
          %v1336 = vsel %vm777, %v1334, %v1335
          %v1337 = vrot.slane %v1330, 6
          %v1338 = vsel %vm777, %v1335, %v1337
          %1339 = vrot.lane.b32.xlu0 %v1336, 124
          %v1340 = vpop.permute.xlu0 %1339
          %1341 = vrot.lane.b32.xlu0 %v1338, 124
          %v1342 = vpop.permute.xlu0 %1341
          %v1345 = vadd.f32 %v1324, %v1340
          %v1346 = vadd.f32 %v1325, %v1342
          %s1347 = sld [smem:[#allocation9 + $0x5]]
          %v1348 = vstv %s1347
          %v1349 = vmul.f32 %v670, %v1348
          %v1350 = vmul.f32 %v671, %v1348
          %1353 = vrot.lane.b32.xlu0 %v1349, 123
          %v1354 = vpop.permute.xlu0 %1353
          %1355 = vrot.lane.b32.xlu0 %v1350, 123
          %v1356 = vpop.permute.xlu0 %1355
          %v1359 = vadd.f32 %v1345, %v1354
          %v1360 = vadd.f32 %v1346, %v1356
          %s1361 = sld [smem:[#allocation9 + $0xc]]
          %v1362 = vstv %s1361
          %v1363 = vmul.f32 %v670, %v1362
          %v1364 = vmul.f32 %v671, %v1362
          %v1365 = vmul.f32 %v672, %v1362
          %v1369 = vrot.slane %v1363, 1
          %v1370 = vrot.slane %v1364, 1
          %v1371 = vsel %vm687, %v1369, %v1370
          %v1372 = vrot.slane %v1365, 1
          %v1373 = vsel %vm687, %v1370, %v1372
          %1374 = vrot.lane.b32.xlu0 %v1371, 123
          %v1375 = vpop.permute.xlu0 %1374
          %1376 = vrot.lane.b32.xlu0 %v1373, 123
          %v1377 = vpop.permute.xlu0 %1376
          %v1380 = vadd.f32 %v1359, %v1375
          %v1381 = vadd.f32 %v1360, %v1377
          %s1382 = sld [smem:[#allocation9 + $0x13]]
          %v1383 = vstv %s1382
          %v1384 = vmul.f32 %v670, %v1383
          %v1385 = vmul.f32 %v671, %v1383
          %v1386 = vmul.f32 %v672, %v1383
          %v1390 = vrot.slane %v1384, 2
          %v1391 = vrot.slane %v1385, 2
          %v1392 = vsel %vm705, %v1390, %v1391
          %v1393 = vrot.slane %v1386, 2
          %v1394 = vsel %vm705, %v1391, %v1393
          %1395 = vrot.lane.b32.xlu0 %v1392, 123
          %v1396 = vpop.permute.xlu0 %1395
          %1397 = vrot.lane.b32.xlu0 %v1394, 123
          %v1398 = vpop.permute.xlu0 %1397
          %v1401 = vadd.f32 %v1380, %v1396
          %v1402 = vadd.f32 %v1381, %v1398
          %s1403 = sld [smem:[#allocation9 + $0x1a]]
          %v1404 = vstv %s1403
          %v1405 = vmul.f32 %v670, %v1404
          %v1406 = vmul.f32 %v671, %v1404
          %v1407 = vmul.f32 %v672, %v1404
          %v1411 = vrot.slane %v1405, 3
          %v1412 = vrot.slane %v1406, 3
          %v1413 = vsel %vm723, %v1411, %v1412
          %v1414 = vrot.slane %v1407, 3
          %v1415 = vsel %vm723, %v1412, %v1414
          %1416 = vrot.lane.b32.xlu0 %v1413, 123
          %v1417 = vpop.permute.xlu0 %1416
          %1418 = vrot.lane.b32.xlu0 %v1415, 123
          %v1419 = vpop.permute.xlu0 %1418
          %v1422 = vadd.f32 %v1401, %v1417
          %v1423 = vadd.f32 %v1402, %v1419
          %s1424 = sld [smem:[#allocation9 + $0x21]]
          %v1425 = vstv %s1424
          %v1426 = vmul.f32 %v670, %v1425
          %v1427 = vmul.f32 %v671, %v1425
          %v1428 = vmul.f32 %v672, %v1425
          %v1432 = vrot.slane %v1426, 4
          %v1433 = vrot.slane %v1427, 4
          %v1434 = vsel %vm741, %v1432, %v1433
          %v1435 = vrot.slane %v1428, 4
          %v1436 = vsel %vm741, %v1433, %v1435
          %1437 = vrot.lane.b32.xlu0 %v1434, 123
          %v1438 = vpop.permute.xlu0 %1437
          %1439 = vrot.lane.b32.xlu0 %v1436, 123
          %v1440 = vpop.permute.xlu0 %1439
          %v1443 = vadd.f32 %v1422, %v1438
          %v1444 = vadd.f32 %v1423, %v1440
          %s1445 = sld [smem:[#allocation9 + $0x28]]
          %v1446 = vstv %s1445
          %v1447 = vmul.f32 %v670, %v1446
          %v1448 = vmul.f32 %v671, %v1446
          %v1449 = vmul.f32 %v672, %v1446
          %v1453 = vrot.slane %v1447, 5
          %v1454 = vrot.slane %v1448, 5
          %v1455 = vsel %vm759, %v1453, %v1454
          %v1456 = vrot.slane %v1449, 5
          %v1457 = vsel %vm759, %v1454, %v1456
          %1458 = vrot.lane.b32.xlu0 %v1455, 123
          %v1459 = vpop.permute.xlu0 %1458
          %1460 = vrot.lane.b32.xlu0 %v1457, 123
          %v1461 = vpop.permute.xlu0 %1460
          %v1464 = vadd.f32 %v1443, %v1459
          %v1465 = vadd.f32 %v1444, %v1461
          %s1466 = sld [smem:[#allocation9 + $0x2f]]
          %v1467 = vstv %s1466
          %v1468 = vmul.f32 %v670, %v1467
          %v1469 = vmul.f32 %v671, %v1467
          %v1470 = vmul.f32 %v672, %v1467
          %v1474 = vrot.slane %v1468, 6
          %v1475 = vrot.slane %v1469, 6
          %v1476 = vsel %vm777, %v1474, %v1475
          %v1477 = vrot.slane %v1470, 6
          %v1478 = vsel %vm777, %v1475, %v1477
          %1479 = vrot.lane.b32.xlu0 %v1476, 123
          %v1480 = vpop.permute.xlu0 %1479
          %1481 = vrot.lane.b32.xlu0 %v1478, 123
          %v1482 = vpop.permute.xlu0 %1481
          %v1485 = vadd.f32 %v1464, %v1480
          %v1486 = vadd.f32 %v1465, %v1482
          %s1487 = sld [smem:[#allocation9 + $0x6]]
          %v1488 = vstv %s1487
          %v1489 = vmul.f32 %v670, %v1488
          %v1490 = vmul.f32 %v671, %v1488
          %1493 = vrot.lane.b32.xlu0 %v1489, 122
          %v1494 = vpop.permute.xlu0 %1493
          %1495 = vrot.lane.b32.xlu0 %v1490, 122
          %v1496 = vpop.permute.xlu0 %1495
          %v1499 = vadd.f32 %v1485, %v1494
          %v1500 = vadd.f32 %v1486, %v1496
          %s1501 = sld [smem:[#allocation9 + $0xd]]
          %v1502 = vstv %s1501
          %v1503 = vmul.f32 %v670, %v1502
          %v1504 = vmul.f32 %v671, %v1502
          %v1505 = vmul.f32 %v672, %v1502
          %v1509 = vrot.slane %v1503, 1
          %v1510 = vrot.slane %v1504, 1
          %v1511 = vsel %vm687, %v1509, %v1510
          %v1512 = vrot.slane %v1505, 1
          %v1513 = vsel %vm687, %v1510, %v1512
          %1514 = vrot.lane.b32.xlu0 %v1511, 122
          %v1515 = vpop.permute.xlu0 %1514
          %1516 = vrot.lane.b32.xlu0 %v1513, 122
          %v1517 = vpop.permute.xlu0 %1516
          %v1520 = vadd.f32 %v1499, %v1515
          %v1521 = vadd.f32 %v1500, %v1517
          %s1522 = sld [smem:[#allocation9 + $0x14]]
          %v1523 = vstv %s1522
          %v1524 = vmul.f32 %v670, %v1523
          %v1525 = vmul.f32 %v671, %v1523
          %v1526 = vmul.f32 %v672, %v1523
          %v1530 = vrot.slane %v1524, 2
          %v1531 = vrot.slane %v1525, 2
          %v1532 = vsel %vm705, %v1530, %v1531
          %v1533 = vrot.slane %v1526, 2
          %v1534 = vsel %vm705, %v1531, %v1533
          %1535 = vrot.lane.b32.xlu0 %v1532, 122
          %v1536 = vpop.permute.xlu0 %1535
          %1537 = vrot.lane.b32.xlu0 %v1534, 122
          %v1538 = vpop.permute.xlu0 %1537
          %v1541 = vadd.f32 %v1520, %v1536
          %v1542 = vadd.f32 %v1521, %v1538
          %s1543 = sld [smem:[#allocation9 + $0x1b]]
          %v1544 = vstv %s1543
          %v1545 = vmul.f32 %v670, %v1544
          %v1546 = vmul.f32 %v671, %v1544
          %v1547 = vmul.f32 %v672, %v1544
          %v1551 = vrot.slane %v1545, 3
          %v1552 = vrot.slane %v1546, 3
          %v1553 = vsel %vm723, %v1551, %v1552
          %v1554 = vrot.slane %v1547, 3
          %v1555 = vsel %vm723, %v1552, %v1554
          %1556 = vrot.lane.b32.xlu0 %v1553, 122
          %v1557 = vpop.permute.xlu0 %1556
          %1558 = vrot.lane.b32.xlu0 %v1555, 122
          %v1559 = vpop.permute.xlu0 %1558
          %v1562 = vadd.f32 %v1541, %v1557
          %v1563 = vadd.f32 %v1542, %v1559
          %s1564 = sld [smem:[#allocation9 + $0x22]]
          %v1565 = vstv %s1564
          %v1566 = vmul.f32 %v670, %v1565
          %v1567 = vmul.f32 %v671, %v1565
          %v1568 = vmul.f32 %v672, %v1565
          %v1572 = vrot.slane %v1566, 4
          %v1573 = vrot.slane %v1567, 4
          %v1574 = vsel %vm741, %v1572, %v1573
          %v1575 = vrot.slane %v1568, 4
          %v1576 = vsel %vm741, %v1573, %v1575
          %1577 = vrot.lane.b32.xlu0 %v1574, 122
          %v1578 = vpop.permute.xlu0 %1577
          %1579 = vrot.lane.b32.xlu0 %v1576, 122
          %v1580 = vpop.permute.xlu0 %1579
          %v1583 = vadd.f32 %v1562, %v1578
          %v1584 = vadd.f32 %v1563, %v1580
          %s1585 = sld [smem:[#allocation9 + $0x29]]
          %v1586 = vstv %s1585
          %v1587 = vmul.f32 %v670, %v1586
          %v1588 = vmul.f32 %v671, %v1586
          %v1589 = vmul.f32 %v672, %v1586
          %v1593 = vrot.slane %v1587, 5
          %v1594 = vrot.slane %v1588, 5
          %v1595 = vsel %vm759, %v1593, %v1594
          %v1596 = vrot.slane %v1589, 5
          %v1597 = vsel %vm759, %v1594, %v1596
          %1598 = vrot.lane.b32.xlu0 %v1595, 122
          %v1599 = vpop.permute.xlu0 %1598
          %1600 = vrot.lane.b32.xlu0 %v1597, 122
          %v1601 = vpop.permute.xlu0 %1600
          %v1604 = vadd.f32 %v1583, %v1599
          %v1605 = vadd.f32 %v1584, %v1601
          %s1606 = sld [smem:[#allocation9 + $0x30]]
          %v1607 = vstv %s1606
          %v1608 = vmul.f32 %v670, %v1607
          %v1609 = vmul.f32 %v671, %v1607
          %v1610 = vmul.f32 %v672, %v1607
          %v1614 = vrot.slane %v1608, 6
          %v1615 = vrot.slane %v1609, 6
          %v1616 = vsel %vm777, %v1614, %v1615
          %v1617 = vrot.slane %v1610, 6
          %v1618 = vsel %vm777, %v1615, %v1617
          %1619 = vrot.lane.b32.xlu0 %v1616, 122
          %v1620 = vpop.permute.xlu0 %1619
          %1621 = vrot.lane.b32.xlu0 %v1618, 122
          %v1622 = vpop.permute.xlu0 %1621
          %v1625 = vadd.f32 %v1604, %v1620
          %v1626 = vadd.f32 %v1605, %v1622
          %v1627 = vld [vmem:[%s324] sm:$0xff]
          %v1628 = vld [vmem:[%s324 + $0x8] sm:$0xff]
          %v1629 = vld [vmem:[%s324 + $0x10] sm:$0x3f]
          %s1630 = sld [smem:[#allocation9 + $0x31]]
          %v1631 = vstv %s1630
          %v1632 = vmul.f32 %v1627, %v1631
          %v1633 = vmul.f32 %v1628, %v1631
          %v1634 = vadd.f32 %v1625, %v1632
          %v1635 = vadd.f32 %v1626, %v1633
          %s1636 = sld [smem:[#allocation9 + $0x38]]
          %v1637 = vstv %s1636
          %v1638 = vmul.f32 %v1627, %v1637
          %v1639 = vmul.f32 %v1628, %v1637
          %v1640 = vmul.f32 %v1629, %v1637
          %v1644 = vrot.slane %v1638, 1
          %v1645 = vrot.slane %v1639, 1
          %v1646 = vsel %vm687, %v1644, %v1645
          %v1647 = vrot.slane %v1640, 1
          %v1648 = vsel %vm687, %v1645, %v1647
          %v1651 = vadd.f32 %v1634, %v1646
          %v1652 = vadd.f32 %v1635, %v1648
          %s1653 = sld [smem:[#allocation9 + $0x3f]]
          %v1654 = vstv %s1653
          %v1655 = vmul.f32 %v1627, %v1654
          %v1656 = vmul.f32 %v1628, %v1654
          %v1657 = vmul.f32 %v1629, %v1654
          %v1661 = vrot.slane %v1655, 2
          %v1662 = vrot.slane %v1656, 2
          %v1663 = vsel %vm705, %v1661, %v1662
          %v1664 = vrot.slane %v1657, 2
          %v1665 = vsel %vm705, %v1662, %v1664
          %v1668 = vadd.f32 %v1651, %v1663
          %v1669 = vadd.f32 %v1652, %v1665
          %s1670 = sld [smem:[#allocation9 + $0x46]]
          %v1671 = vstv %s1670
          %v1672 = vmul.f32 %v1627, %v1671
          %v1673 = vmul.f32 %v1628, %v1671
          %v1674 = vmul.f32 %v1629, %v1671
          %v1678 = vrot.slane %v1672, 3
          %v1679 = vrot.slane %v1673, 3
          %v1680 = vsel %vm723, %v1678, %v1679
          %v1681 = vrot.slane %v1674, 3
          %v1682 = vsel %vm723, %v1679, %v1681
          %v1685 = vadd.f32 %v1668, %v1680
          %v1686 = vadd.f32 %v1669, %v1682
          %s1687 = sld [smem:[#allocation9 + $0x4d]]
          %v1688 = vstv %s1687
          %v1689 = vmul.f32 %v1627, %v1688
          %v1690 = vmul.f32 %v1628, %v1688
          %v1691 = vmul.f32 %v1629, %v1688
          %v1695 = vrot.slane %v1689, 4
          %v1696 = vrot.slane %v1690, 4
          %v1697 = vsel %vm741, %v1695, %v1696
          %v1698 = vrot.slane %v1691, 4
          %v1699 = vsel %vm741, %v1696, %v1698
          %v1702 = vadd.f32 %v1685, %v1697
          %v1703 = vadd.f32 %v1686, %v1699
          %s1704 = sld [smem:[#allocation9 + $0x54]]
          %v1705 = vstv %s1704
          %v1706 = vmul.f32 %v1627, %v1705
          %v1707 = vmul.f32 %v1628, %v1705
          %v1708 = vmul.f32 %v1629, %v1705
          %v1712 = vrot.slane %v1706, 5
          %v1713 = vrot.slane %v1707, 5
          %v1714 = vsel %vm759, %v1712, %v1713
          %v1715 = vrot.slane %v1708, 5
          %v1716 = vsel %vm759, %v1713, %v1715
          %v1719 = vadd.f32 %v1702, %v1714
          %v1720 = vadd.f32 %v1703, %v1716
          %s1721 = sld [smem:[#allocation9 + $0x5b]]
          %v1722 = vstv %s1721
          %v1723 = vmul.f32 %v1627, %v1722
          %v1724 = vmul.f32 %v1628, %v1722
          %v1725 = vmul.f32 %v1629, %v1722
          %v1729 = vrot.slane %v1723, 6
          %v1730 = vrot.slane %v1724, 6
          %v1731 = vsel %vm777, %v1729, %v1730
          %v1732 = vrot.slane %v1725, 6
          %v1733 = vsel %vm777, %v1730, %v1732
          %v1736 = vadd.f32 %v1719, %v1731
          %v1737 = vadd.f32 %v1720, %v1733
          %s1738 = sld [smem:[#allocation9 + $0x32]]
          %v1739 = vstv %s1738
          %v1740 = vmul.f32 %v1627, %v1739
          %v1741 = vmul.f32 %v1628, %v1739
          %1744 = vrot.lane.b32.xlu0 %v1740, 127
          %v1745 = vpop.permute.xlu0 %1744
          %1746 = vrot.lane.b32.xlu0 %v1741, 127
          %v1747 = vpop.permute.xlu0 %1746
          %v1750 = vadd.f32 %v1736, %v1745
          %v1751 = vadd.f32 %v1737, %v1747
          %s1752 = sld [smem:[#allocation9 + $0x39]]
          %v1753 = vstv %s1752
          %v1754 = vmul.f32 %v1627, %v1753
          %v1755 = vmul.f32 %v1628, %v1753
          %v1756 = vmul.f32 %v1629, %v1753
          %v1760 = vrot.slane %v1754, 1
          %v1761 = vrot.slane %v1755, 1
          %v1762 = vsel %vm687, %v1760, %v1761
          %v1763 = vrot.slane %v1756, 1
          %v1764 = vsel %vm687, %v1761, %v1763
          %1765 = vrot.lane.b32.xlu0 %v1762, 127
          %v1766 = vpop.permute.xlu0 %1765
          %1767 = vrot.lane.b32.xlu0 %v1764, 127
          %v1768 = vpop.permute.xlu0 %1767
          %v1771 = vadd.f32 %v1750, %v1766
          %v1772 = vadd.f32 %v1751, %v1768
          %s1773 = sld [smem:[#allocation9 + $0x40]]
          %v1774 = vstv %s1773
          %v1775 = vmul.f32 %v1627, %v1774
          %v1776 = vmul.f32 %v1628, %v1774
          %v1777 = vmul.f32 %v1629, %v1774
          %v1781 = vrot.slane %v1775, 2
          %v1782 = vrot.slane %v1776, 2
          %v1783 = vsel %vm705, %v1781, %v1782
          %v1784 = vrot.slane %v1777, 2
          %v1785 = vsel %vm705, %v1782, %v1784
          %1786 = vrot.lane.b32.xlu0 %v1783, 127
          %v1787 = vpop.permute.xlu0 %1786
          %1788 = vrot.lane.b32.xlu0 %v1785, 127
          %v1789 = vpop.permute.xlu0 %1788
          %v1792 = vadd.f32 %v1771, %v1787
          %v1793 = vadd.f32 %v1772, %v1789
          %s1794 = sld [smem:[#allocation9 + $0x47]]
          %v1795 = vstv %s1794
          %v1796 = vmul.f32 %v1627, %v1795
          %v1797 = vmul.f32 %v1628, %v1795
          %v1798 = vmul.f32 %v1629, %v1795
          %v1802 = vrot.slane %v1796, 3
          %v1803 = vrot.slane %v1797, 3
          %v1804 = vsel %vm723, %v1802, %v1803
          %v1805 = vrot.slane %v1798, 3
          %v1806 = vsel %vm723, %v1803, %v1805
          %1807 = vrot.lane.b32.xlu0 %v1804, 127
          %v1808 = vpop.permute.xlu0 %1807
          %1809 = vrot.lane.b32.xlu0 %v1806, 127
          %v1810 = vpop.permute.xlu0 %1809
          %v1813 = vadd.f32 %v1792, %v1808
          %v1814 = vadd.f32 %v1793, %v1810
          %s1815 = sld [smem:[#allocation9 + $0x4e]]
          %v1816 = vstv %s1815
          %v1817 = vmul.f32 %v1627, %v1816
          %v1818 = vmul.f32 %v1628, %v1816
          %v1819 = vmul.f32 %v1629, %v1816
          %v1823 = vrot.slane %v1817, 4
          %v1824 = vrot.slane %v1818, 4
          %v1825 = vsel %vm741, %v1823, %v1824
          %v1826 = vrot.slane %v1819, 4
          %v1827 = vsel %vm741, %v1824, %v1826
          %1828 = vrot.lane.b32.xlu0 %v1825, 127
          %v1829 = vpop.permute.xlu0 %1828
          %1830 = vrot.lane.b32.xlu0 %v1827, 127
          %v1831 = vpop.permute.xlu0 %1830
          %v1834 = vadd.f32 %v1813, %v1829
          %v1835 = vadd.f32 %v1814, %v1831
          %s1836 = sld [smem:[#allocation9 + $0x55]]
          %v1837 = vstv %s1836
          %v1838 = vmul.f32 %v1627, %v1837
          %v1839 = vmul.f32 %v1628, %v1837
          %v1840 = vmul.f32 %v1629, %v1837
          %v1844 = vrot.slane %v1838, 5
          %v1845 = vrot.slane %v1839, 5
          %v1846 = vsel %vm759, %v1844, %v1845
          %v1847 = vrot.slane %v1840, 5
          %v1848 = vsel %vm759, %v1845, %v1847
          %1849 = vrot.lane.b32.xlu0 %v1846, 127
          %v1850 = vpop.permute.xlu0 %1849
          %1851 = vrot.lane.b32.xlu0 %v1848, 127
          %v1852 = vpop.permute.xlu0 %1851
          %v1855 = vadd.f32 %v1834, %v1850
          %v1856 = vadd.f32 %v1835, %v1852
          %s1857 = sld [smem:[#allocation9 + $0x5c]]
          %v1858 = vstv %s1857
          %v1859 = vmul.f32 %v1627, %v1858
          %v1860 = vmul.f32 %v1628, %v1858
          %v1861 = vmul.f32 %v1629, %v1858
          %v1865 = vrot.slane %v1859, 6
          %v1866 = vrot.slane %v1860, 6
          %v1867 = vsel %vm777, %v1865, %v1866
          %v1868 = vrot.slane %v1861, 6
          %v1869 = vsel %vm777, %v1866, %v1868
          %1870 = vrot.lane.b32.xlu0 %v1867, 127
          %v1871 = vpop.permute.xlu0 %1870
          %1872 = vrot.lane.b32.xlu0 %v1869, 127
          %v1873 = vpop.permute.xlu0 %1872
          %v1876 = vadd.f32 %v1855, %v1871
          %v1877 = vadd.f32 %v1856, %v1873
          %s1878 = sld [smem:[#allocation9 + $0x33]]
          %v1879 = vstv %s1878
          %v1880 = vmul.f32 %v1627, %v1879
          %v1881 = vmul.f32 %v1628, %v1879
          %1884 = vrot.lane.b32.xlu0 %v1880, 126
          %v1885 = vpop.permute.xlu0 %1884
          %1886 = vrot.lane.b32.xlu0 %v1881, 126
          %v1887 = vpop.permute.xlu0 %1886
          %v1890 = vadd.f32 %v1876, %v1885
          %v1891 = vadd.f32 %v1877, %v1887
          %s1892 = sld [smem:[#allocation9 + $0x3a]]
          %v1893 = vstv %s1892
          %v1894 = vmul.f32 %v1627, %v1893
          %v1895 = vmul.f32 %v1628, %v1893
          %v1896 = vmul.f32 %v1629, %v1893
          %v1900 = vrot.slane %v1894, 1
          %v1901 = vrot.slane %v1895, 1
          %v1902 = vsel %vm687, %v1900, %v1901
          %v1903 = vrot.slane %v1896, 1
          %v1904 = vsel %vm687, %v1901, %v1903
          %1905 = vrot.lane.b32.xlu0 %v1902, 126
          %v1906 = vpop.permute.xlu0 %1905
          %1907 = vrot.lane.b32.xlu0 %v1904, 126
          %v1908 = vpop.permute.xlu0 %1907
          %v1911 = vadd.f32 %v1890, %v1906
          %v1912 = vadd.f32 %v1891, %v1908
          %s1913 = sld [smem:[#allocation9 + $0x41]]
          %v1914 = vstv %s1913
          %v1915 = vmul.f32 %v1627, %v1914
          %v1916 = vmul.f32 %v1628, %v1914
          %v1917 = vmul.f32 %v1629, %v1914
          %v1921 = vrot.slane %v1915, 2
          %v1922 = vrot.slane %v1916, 2
          %v1923 = vsel %vm705, %v1921, %v1922
          %v1924 = vrot.slane %v1917, 2
          %v1925 = vsel %vm705, %v1922, %v1924
          %1926 = vrot.lane.b32.xlu0 %v1923, 126
          %v1927 = vpop.permute.xlu0 %1926
          %1928 = vrot.lane.b32.xlu0 %v1925, 126
          %v1929 = vpop.permute.xlu0 %1928
          %v1932 = vadd.f32 %v1911, %v1927
          %v1933 = vadd.f32 %v1912, %v1929
          %s1934 = sld [smem:[#allocation9 + $0x48]]
          %v1935 = vstv %s1934
          %v1936 = vmul.f32 %v1627, %v1935
          %v1937 = vmul.f32 %v1628, %v1935
          %v1938 = vmul.f32 %v1629, %v1935
          %v1942 = vrot.slane %v1936, 3
          %v1943 = vrot.slane %v1937, 3
          %v1944 = vsel %vm723, %v1942, %v1943
          %v1945 = vrot.slane %v1938, 3
          %v1946 = vsel %vm723, %v1943, %v1945
          %1947 = vrot.lane.b32.xlu0 %v1944, 126
          %v1948 = vpop.permute.xlu0 %1947
          %1949 = vrot.lane.b32.xlu0 %v1946, 126
          %v1950 = vpop.permute.xlu0 %1949
          %v1953 = vadd.f32 %v1932, %v1948
          %v1954 = vadd.f32 %v1933, %v1950
          %s1955 = sld [smem:[#allocation9 + $0x4f]]
          %v1956 = vstv %s1955
          %v1957 = vmul.f32 %v1627, %v1956
          %v1958 = vmul.f32 %v1628, %v1956
          %v1959 = vmul.f32 %v1629, %v1956
          %v1963 = vrot.slane %v1957, 4
          %v1964 = vrot.slane %v1958, 4
          %v1965 = vsel %vm741, %v1963, %v1964
          %v1966 = vrot.slane %v1959, 4
          %v1967 = vsel %vm741, %v1964, %v1966
          %1968 = vrot.lane.b32.xlu0 %v1965, 126
          %v1969 = vpop.permute.xlu0 %1968
          %1970 = vrot.lane.b32.xlu0 %v1967, 126
          %v1971 = vpop.permute.xlu0 %1970
          %v1974 = vadd.f32 %v1953, %v1969
          %v1975 = vadd.f32 %v1954, %v1971
          %s1976 = sld [smem:[#allocation9 + $0x56]]
          %v1977 = vstv %s1976
          %v1978 = vmul.f32 %v1627, %v1977
          %v1979 = vmul.f32 %v1628, %v1977
          %v1980 = vmul.f32 %v1629, %v1977
          %v1984 = vrot.slane %v1978, 5
          %v1985 = vrot.slane %v1979, 5
          %v1986 = vsel %vm759, %v1984, %v1985
          %v1987 = vrot.slane %v1980, 5
          %v1988 = vsel %vm759, %v1985, %v1987
          %1989 = vrot.lane.b32.xlu0 %v1986, 126
          %v1990 = vpop.permute.xlu0 %1989
          %1991 = vrot.lane.b32.xlu0 %v1988, 126
          %v1992 = vpop.permute.xlu0 %1991
          %v1995 = vadd.f32 %v1974, %v1990
          %v1996 = vadd.f32 %v1975, %v1992
          %s1997 = sld [smem:[#allocation9 + $0x5d]]
          %v1998 = vstv %s1997
          %v1999 = vmul.f32 %v1627, %v1998
          %v2000 = vmul.f32 %v1628, %v1998
          %v2001 = vmul.f32 %v1629, %v1998
          %v2005 = vrot.slane %v1999, 6
          %v2006 = vrot.slane %v2000, 6
          %v2007 = vsel %vm777, %v2005, %v2006
          %v2008 = vrot.slane %v2001, 6
          %v2009 = vsel %vm777, %v2006, %v2008
          %2010 = vrot.lane.b32.xlu0 %v2007, 126
          %v2011 = vpop.permute.xlu0 %2010
          %2012 = vrot.lane.b32.xlu0 %v2009, 126
          %v2013 = vpop.permute.xlu0 %2012
          %v2016 = vadd.f32 %v1995, %v2011
          %v2017 = vadd.f32 %v1996, %v2013
          %s2018 = sld [smem:[#allocation9 + $0x34]]
          %v2019 = vstv %s2018
          %v2020 = vmul.f32 %v1627, %v2019
          %v2021 = vmul.f32 %v1628, %v2019
          %2024 = vrot.lane.b32.xlu0 %v2020, 125
          %v2025 = vpop.permute.xlu0 %2024
          %2026 = vrot.lane.b32.xlu0 %v2021, 125
          %v2027 = vpop.permute.xlu0 %2026
          %v2030 = vadd.f32 %v2016, %v2025
          %v2031 = vadd.f32 %v2017, %v2027
          %s2032 = sld [smem:[#allocation9 + $0x3b]]
          %v2033 = vstv %s2032
          %v2034 = vmul.f32 %v1627, %v2033
          %v2035 = vmul.f32 %v1628, %v2033
          %v2036 = vmul.f32 %v1629, %v2033
          %v2040 = vrot.slane %v2034, 1
          %v2041 = vrot.slane %v2035, 1
          %v2042 = vsel %vm687, %v2040, %v2041
          %v2043 = vrot.slane %v2036, 1
          %v2044 = vsel %vm687, %v2041, %v2043
          %2045 = vrot.lane.b32.xlu0 %v2042, 125
          %v2046 = vpop.permute.xlu0 %2045
          %2047 = vrot.lane.b32.xlu0 %v2044, 125
          %v2048 = vpop.permute.xlu0 %2047
          %v2051 = vadd.f32 %v2030, %v2046
          %v2052 = vadd.f32 %v2031, %v2048
          %s2053 = sld [smem:[#allocation9 + $0x42]]
          %v2054 = vstv %s2053
          %v2055 = vmul.f32 %v1627, %v2054
          %v2056 = vmul.f32 %v1628, %v2054
          %v2057 = vmul.f32 %v1629, %v2054
          %v2061 = vrot.slane %v2055, 2
          %v2062 = vrot.slane %v2056, 2
          %v2063 = vsel %vm705, %v2061, %v2062
          %v2064 = vrot.slane %v2057, 2
          %v2065 = vsel %vm705, %v2062, %v2064
          %2066 = vrot.lane.b32.xlu0 %v2063, 125
          %v2067 = vpop.permute.xlu0 %2066
          %2068 = vrot.lane.b32.xlu0 %v2065, 125
          %v2069 = vpop.permute.xlu0 %2068
          %v2072 = vadd.f32 %v2051, %v2067
          %v2073 = vadd.f32 %v2052, %v2069
          %s2074 = sld [smem:[#allocation9 + $0x49]]
          %v2075 = vstv %s2074
          %v2076 = vmul.f32 %v1627, %v2075
          %v2077 = vmul.f32 %v1628, %v2075
          %v2078 = vmul.f32 %v1629, %v2075
          %v2082 = vrot.slane %v2076, 3
          %v2083 = vrot.slane %v2077, 3
          %v2084 = vsel %vm723, %v2082, %v2083
          %v2085 = vrot.slane %v2078, 3
          %v2086 = vsel %vm723, %v2083, %v2085
          %2087 = vrot.lane.b32.xlu0 %v2084, 125
          %v2088 = vpop.permute.xlu0 %2087
          %2089 = vrot.lane.b32.xlu0 %v2086, 125
          %v2090 = vpop.permute.xlu0 %2089
          %v2093 = vadd.f32 %v2072, %v2088
          %v2094 = vadd.f32 %v2073, %v2090
          %s2095 = sld [smem:[#allocation9 + $0x50]]
          %v2096 = vstv %s2095
          %v2097 = vmul.f32 %v1627, %v2096
          %v2098 = vmul.f32 %v1628, %v2096
          %v2099 = vmul.f32 %v1629, %v2096
          %v2103 = vrot.slane %v2097, 4
          %v2104 = vrot.slane %v2098, 4
          %v2105 = vsel %vm741, %v2103, %v2104
          %v2106 = vrot.slane %v2099, 4
          %v2107 = vsel %vm741, %v2104, %v2106
          %2108 = vrot.lane.b32.xlu0 %v2105, 125
          %v2109 = vpop.permute.xlu0 %2108
          %2110 = vrot.lane.b32.xlu0 %v2107, 125
          %v2111 = vpop.permute.xlu0 %2110
          %v2114 = vadd.f32 %v2093, %v2109
          %v2115 = vadd.f32 %v2094, %v2111
          %s2116 = sld [smem:[#allocation9 + $0x57]]
          %v2117 = vstv %s2116
          %v2118 = vmul.f32 %v1627, %v2117
          %v2119 = vmul.f32 %v1628, %v2117
          %v2120 = vmul.f32 %v1629, %v2117
          %v2124 = vrot.slane %v2118, 5
          %v2125 = vrot.slane %v2119, 5
          %v2126 = vsel %vm759, %v2124, %v2125
          %v2127 = vrot.slane %v2120, 5
          %v2128 = vsel %vm759, %v2125, %v2127
          %2129 = vrot.lane.b32.xlu0 %v2126, 125
          %v2130 = vpop.permute.xlu0 %2129
          %2131 = vrot.lane.b32.xlu0 %v2128, 125
          %v2132 = vpop.permute.xlu0 %2131
          %v2135 = vadd.f32 %v2114, %v2130
          %v2136 = vadd.f32 %v2115, %v2132
          %s2137 = sld [smem:[#allocation9 + $0x5e]]
          %v2138 = vstv %s2137
          %v2139 = vmul.f32 %v1627, %v2138
          %v2140 = vmul.f32 %v1628, %v2138
          %v2141 = vmul.f32 %v1629, %v2138
          %v2145 = vrot.slane %v2139, 6
          %v2146 = vrot.slane %v2140, 6
          %v2147 = vsel %vm777, %v2145, %v2146
          %v2148 = vrot.slane %v2141, 6
          %v2149 = vsel %vm777, %v2146, %v2148
          %2150 = vrot.lane.b32.xlu0 %v2147, 125
          %v2151 = vpop.permute.xlu0 %2150
          %2152 = vrot.lane.b32.xlu0 %v2149, 125
          %v2153 = vpop.permute.xlu0 %2152
          %v2156 = vadd.f32 %v2135, %v2151
          %v2157 = vadd.f32 %v2136, %v2153
          %s2158 = sld [smem:[#allocation9 + $0x35]]
          %v2159 = vstv %s2158
          %v2160 = vmul.f32 %v1627, %v2159
          %v2161 = vmul.f32 %v1628, %v2159
          %2164 = vrot.lane.b32.xlu0 %v2160, 124
          %v2165 = vpop.permute.xlu0 %2164
          %2166 = vrot.lane.b32.xlu0 %v2161, 124
          %v2167 = vpop.permute.xlu0 %2166
          %v2170 = vadd.f32 %v2156, %v2165
          %v2171 = vadd.f32 %v2157, %v2167
          %s2172 = sld [smem:[#allocation9 + $0x3c]]
          %v2173 = vstv %s2172
          %v2174 = vmul.f32 %v1627, %v2173
          %v2175 = vmul.f32 %v1628, %v2173
          %v2176 = vmul.f32 %v1629, %v2173
          %v2180 = vrot.slane %v2174, 1
          %v2181 = vrot.slane %v2175, 1
          %v2182 = vsel %vm687, %v2180, %v2181
          %v2183 = vrot.slane %v2176, 1
          %v2184 = vsel %vm687, %v2181, %v2183
          %2185 = vrot.lane.b32.xlu0 %v2182, 124
          %v2186 = vpop.permute.xlu0 %2185
          %2187 = vrot.lane.b32.xlu0 %v2184, 124
          %v2188 = vpop.permute.xlu0 %2187
          %v2191 = vadd.f32 %v2170, %v2186
          %v2192 = vadd.f32 %v2171, %v2188
          %s2193 = sld [smem:[#allocation9 + $0x43]]
          %v2194 = vstv %s2193
          %v2195 = vmul.f32 %v1627, %v2194
          %v2196 = vmul.f32 %v1628, %v2194
          %v2197 = vmul.f32 %v1629, %v2194
          %v2201 = vrot.slane %v2195, 2
          %v2202 = vrot.slane %v2196, 2
          %v2203 = vsel %vm705, %v2201, %v2202
          %v2204 = vrot.slane %v2197, 2
          %v2205 = vsel %vm705, %v2202, %v2204
          %2206 = vrot.lane.b32.xlu0 %v2203, 124
          %v2207 = vpop.permute.xlu0 %2206
          %2208 = vrot.lane.b32.xlu0 %v2205, 124
          %v2209 = vpop.permute.xlu0 %2208
          %v2212 = vadd.f32 %v2191, %v2207
          %v2213 = vadd.f32 %v2192, %v2209
          %s2214 = sld [smem:[#allocation9 + $0x4a]]
          %v2215 = vstv %s2214
          %v2216 = vmul.f32 %v1627, %v2215
          %v2217 = vmul.f32 %v1628, %v2215
          %v2218 = vmul.f32 %v1629, %v2215
          %v2222 = vrot.slane %v2216, 3
          %v2223 = vrot.slane %v2217, 3
          %v2224 = vsel %vm723, %v2222, %v2223
          %v2225 = vrot.slane %v2218, 3
          %v2226 = vsel %vm723, %v2223, %v2225
          %2227 = vrot.lane.b32.xlu0 %v2224, 124
          %v2228 = vpop.permute.xlu0 %2227
          %2229 = vrot.lane.b32.xlu0 %v2226, 124
          %v2230 = vpop.permute.xlu0 %2229
          %v2233 = vadd.f32 %v2212, %v2228
          %v2234 = vadd.f32 %v2213, %v2230
          %s2235 = sld [smem:[#allocation9 + $0x51]]
          %v2236 = vstv %s2235
          %v2237 = vmul.f32 %v1627, %v2236
          %v2238 = vmul.f32 %v1628, %v2236
          %v2239 = vmul.f32 %v1629, %v2236
          %v2243 = vrot.slane %v2237, 4
          %v2244 = vrot.slane %v2238, 4
          %v2245 = vsel %vm741, %v2243, %v2244
          %v2246 = vrot.slane %v2239, 4
          %v2247 = vsel %vm741, %v2244, %v2246
          %2248 = vrot.lane.b32.xlu0 %v2245, 124
          %v2249 = vpop.permute.xlu0 %2248
          %2250 = vrot.lane.b32.xlu0 %v2247, 124
          %v2251 = vpop.permute.xlu0 %2250
          %v2254 = vadd.f32 %v2233, %v2249
          %v2255 = vadd.f32 %v2234, %v2251
          %s2256 = sld [smem:[#allocation9 + $0x58]]
          %v2257 = vstv %s2256
          %v2258 = vmul.f32 %v1627, %v2257
          %v2259 = vmul.f32 %v1628, %v2257
          %v2260 = vmul.f32 %v1629, %v2257
          %v2264 = vrot.slane %v2258, 5
          %v2265 = vrot.slane %v2259, 5
          %v2266 = vsel %vm759, %v2264, %v2265
          %v2267 = vrot.slane %v2260, 5
          %v2268 = vsel %vm759, %v2265, %v2267
          %2269 = vrot.lane.b32.xlu0 %v2266, 124
          %v2270 = vpop.permute.xlu0 %2269
          %2271 = vrot.lane.b32.xlu0 %v2268, 124
          %v2272 = vpop.permute.xlu0 %2271
          %v2275 = vadd.f32 %v2254, %v2270
          %v2276 = vadd.f32 %v2255, %v2272
          %s2277 = sld [smem:[#allocation9 + $0x5f]]
          %v2278 = vstv %s2277
          %v2279 = vmul.f32 %v1627, %v2278
          %v2280 = vmul.f32 %v1628, %v2278
          %v2281 = vmul.f32 %v1629, %v2278
          %v2285 = vrot.slane %v2279, 6
          %v2286 = vrot.slane %v2280, 6
          %v2287 = vsel %vm777, %v2285, %v2286
          %v2288 = vrot.slane %v2281, 6
          %v2289 = vsel %vm777, %v2286, %v2288
          %2290 = vrot.lane.b32.xlu0 %v2287, 124
          %v2291 = vpop.permute.xlu0 %2290
          %2292 = vrot.lane.b32.xlu0 %v2289, 124
          %v2293 = vpop.permute.xlu0 %2292
          %v2296 = vadd.f32 %v2275, %v2291
          %v2297 = vadd.f32 %v2276, %v2293
          %s2298 = sld [smem:[#allocation9 + $0x36]]
          %v2299 = vstv %s2298
          %v2300 = vmul.f32 %v1627, %v2299
          %v2301 = vmul.f32 %v1628, %v2299
          %2304 = vrot.lane.b32.xlu0 %v2300, 123
          %v2305 = vpop.permute.xlu0 %2304
          %2306 = vrot.lane.b32.xlu0 %v2301, 123
          %v2307 = vpop.permute.xlu0 %2306
          %v2310 = vadd.f32 %v2296, %v2305
          %v2311 = vadd.f32 %v2297, %v2307
          %s2312 = sld [smem:[#allocation9 + $0x3d]]
          %v2313 = vstv %s2312
          %v2314 = vmul.f32 %v1627, %v2313
          %v2315 = vmul.f32 %v1628, %v2313
          %v2316 = vmul.f32 %v1629, %v2313
          %v2320 = vrot.slane %v2314, 1
          %v2321 = vrot.slane %v2315, 1
          %v2322 = vsel %vm687, %v2320, %v2321
          %v2323 = vrot.slane %v2316, 1
          %v2324 = vsel %vm687, %v2321, %v2323
          %2325 = vrot.lane.b32.xlu0 %v2322, 123
          %v2326 = vpop.permute.xlu0 %2325
          %2327 = vrot.lane.b32.xlu0 %v2324, 123
          %v2328 = vpop.permute.xlu0 %2327
          %v2331 = vadd.f32 %v2310, %v2326
          %v2332 = vadd.f32 %v2311, %v2328
          %s2333 = sld [smem:[#allocation9 + $0x44]]
          %v2334 = vstv %s2333
          %v2335 = vmul.f32 %v1627, %v2334
          %v2336 = vmul.f32 %v1628, %v2334
          %v2337 = vmul.f32 %v1629, %v2334
          %v2341 = vrot.slane %v2335, 2
          %v2342 = vrot.slane %v2336, 2
          %v2343 = vsel %vm705, %v2341, %v2342
          %v2344 = vrot.slane %v2337, 2
          %v2345 = vsel %vm705, %v2342, %v2344
          %2346 = vrot.lane.b32.xlu0 %v2343, 123
          %v2347 = vpop.permute.xlu0 %2346
          %2348 = vrot.lane.b32.xlu0 %v2345, 123
          %v2349 = vpop.permute.xlu0 %2348
          %v2352 = vadd.f32 %v2331, %v2347
          %v2353 = vadd.f32 %v2332, %v2349
          %s2354 = sld [smem:[#allocation9 + $0x4b]]
          %v2355 = vstv %s2354
          %v2356 = vmul.f32 %v1627, %v2355
          %v2357 = vmul.f32 %v1628, %v2355
          %v2358 = vmul.f32 %v1629, %v2355
          %v2362 = vrot.slane %v2356, 3
          %v2363 = vrot.slane %v2357, 3
          %v2364 = vsel %vm723, %v2362, %v2363
          %v2365 = vrot.slane %v2358, 3
          %v2366 = vsel %vm723, %v2363, %v2365
          %2367 = vrot.lane.b32.xlu0 %v2364, 123
          %v2368 = vpop.permute.xlu0 %2367
          %2369 = vrot.lane.b32.xlu0 %v2366, 123
          %v2370 = vpop.permute.xlu0 %2369
          %v2373 = vadd.f32 %v2352, %v2368
          %v2374 = vadd.f32 %v2353, %v2370
          %s2375 = sld [smem:[#allocation9 + $0x52]]
          %v2376 = vstv %s2375
          %v2377 = vmul.f32 %v1627, %v2376
          %v2378 = vmul.f32 %v1628, %v2376
          %v2379 = vmul.f32 %v1629, %v2376
          %v2383 = vrot.slane %v2377, 4
          %v2384 = vrot.slane %v2378, 4
          %v2385 = vsel %vm741, %v2383, %v2384
          %v2386 = vrot.slane %v2379, 4
          %v2387 = vsel %vm741, %v2384, %v2386
          %2388 = vrot.lane.b32.xlu0 %v2385, 123
          %v2389 = vpop.permute.xlu0 %2388
          %2390 = vrot.lane.b32.xlu0 %v2387, 123
          %v2391 = vpop.permute.xlu0 %2390
          %v2394 = vadd.f32 %v2373, %v2389
          %v2395 = vadd.f32 %v2374, %v2391
          %s2396 = sld [smem:[#allocation9 + $0x59]]
          %v2397 = vstv %s2396
          %v2398 = vmul.f32 %v1627, %v2397
          %v2399 = vmul.f32 %v1628, %v2397
          %v2400 = vmul.f32 %v1629, %v2397
          %v2404 = vrot.slane %v2398, 5
          %v2405 = vrot.slane %v2399, 5
          %v2406 = vsel %vm759, %v2404, %v2405
          %v2407 = vrot.slane %v2400, 5
          %v2408 = vsel %vm759, %v2405, %v2407
          %2409 = vrot.lane.b32.xlu0 %v2406, 123
          %v2410 = vpop.permute.xlu0 %2409
          %2411 = vrot.lane.b32.xlu0 %v2408, 123
          %v2412 = vpop.permute.xlu0 %2411
          %v2415 = vadd.f32 %v2394, %v2410
          %v2416 = vadd.f32 %v2395, %v2412
          %s2417 = sld [smem:[#allocation9 + $0x60]]
          %v2418 = vstv %s2417
          %v2419 = vmul.f32 %v1627, %v2418
          %v2420 = vmul.f32 %v1628, %v2418
          %v2421 = vmul.f32 %v1629, %v2418
          %v2425 = vrot.slane %v2419, 6
          %v2426 = vrot.slane %v2420, 6
          %v2427 = vsel %vm777, %v2425, %v2426
          %v2428 = vrot.slane %v2421, 6
          %v2429 = vsel %vm777, %v2426, %v2428
          %2430 = vrot.lane.b32.xlu0 %v2427, 123
          %v2431 = vpop.permute.xlu0 %2430
          %2432 = vrot.lane.b32.xlu0 %v2429, 123
          %v2433 = vpop.permute.xlu0 %2432
          %v2436 = vadd.f32 %v2415, %v2431
          %v2437 = vadd.f32 %v2416, %v2433
          %s2438 = sld [smem:[#allocation9 + $0x37]]
          %v2439 = vstv %s2438
          %v2440 = vmul.f32 %v1627, %v2439
          %v2441 = vmul.f32 %v1628, %v2439
          %2444 = vrot.lane.b32.xlu0 %v2440, 122
          %v2445 = vpop.permute.xlu0 %2444
          %2446 = vrot.lane.b32.xlu0 %v2441, 122
          %v2447 = vpop.permute.xlu0 %2446
          %v2450 = vadd.f32 %v2436, %v2445
          %v2451 = vadd.f32 %v2437, %v2447
          %s2452 = sld [smem:[#allocation9 + $0x3e]]
          %v2453 = vstv %s2452
          %v2454 = vmul.f32 %v1627, %v2453
          %v2455 = vmul.f32 %v1628, %v2453
          %v2456 = vmul.f32 %v1629, %v2453
          %v2460 = vrot.slane %v2454, 1
          %v2461 = vrot.slane %v2455, 1
          %v2462 = vsel %vm687, %v2460, %v2461
          %v2463 = vrot.slane %v2456, 1
          %v2464 = vsel %vm687, %v2461, %v2463
          %2465 = vrot.lane.b32.xlu0 %v2462, 122
          %v2466 = vpop.permute.xlu0 %2465
          %2467 = vrot.lane.b32.xlu0 %v2464, 122
          %v2468 = vpop.permute.xlu0 %2467
          %v2471 = vadd.f32 %v2450, %v2466
          %v2472 = vadd.f32 %v2451, %v2468
          %s2473 = sld [smem:[#allocation9 + $0x45]]
          %v2474 = vstv %s2473
          %v2475 = vmul.f32 %v1627, %v2474
          %v2476 = vmul.f32 %v1628, %v2474
          %v2477 = vmul.f32 %v1629, %v2474
          %v2481 = vrot.slane %v2475, 2
          %v2482 = vrot.slane %v2476, 2
          %v2483 = vsel %vm705, %v2481, %v2482
          %v2484 = vrot.slane %v2477, 2
          %v2485 = vsel %vm705, %v2482, %v2484
          %2486 = vrot.lane.b32.xlu0 %v2483, 122
          %v2487 = vpop.permute.xlu0 %2486
          %2488 = vrot.lane.b32.xlu0 %v2485, 122
          %v2489 = vpop.permute.xlu0 %2488
          %v2492 = vadd.f32 %v2471, %v2487
          %v2493 = vadd.f32 %v2472, %v2489
          %s2494 = sld [smem:[#allocation9 + $0x4c]]
          %v2495 = vstv %s2494
          %v2496 = vmul.f32 %v1627, %v2495
          %v2497 = vmul.f32 %v1628, %v2495
          %v2498 = vmul.f32 %v1629, %v2495
          %v2502 = vrot.slane %v2496, 3
          %v2503 = vrot.slane %v2497, 3
          %v2504 = vsel %vm723, %v2502, %v2503
          %v2505 = vrot.slane %v2498, 3
          %v2506 = vsel %vm723, %v2503, %v2505
          %2507 = vrot.lane.b32.xlu0 %v2504, 122
          %v2508 = vpop.permute.xlu0 %2507
          %2509 = vrot.lane.b32.xlu0 %v2506, 122
          %v2510 = vpop.permute.xlu0 %2509
          %v2513 = vadd.f32 %v2492, %v2508
          %v2514 = vadd.f32 %v2493, %v2510
          %s2515 = sld [smem:[#allocation9 + $0x53]]
          %v2516 = vstv %s2515
          %v2517 = vmul.f32 %v1627, %v2516
          %v2518 = vmul.f32 %v1628, %v2516
          %v2519 = vmul.f32 %v1629, %v2516
          %v2523 = vrot.slane %v2517, 4
          %v2524 = vrot.slane %v2518, 4
          %v2525 = vsel %vm741, %v2523, %v2524
          %v2526 = vrot.slane %v2519, 4
          %v2527 = vsel %vm741, %v2524, %v2526
          %2528 = vrot.lane.b32.xlu0 %v2525, 122
          %v2529 = vpop.permute.xlu0 %2528
          %2530 = vrot.lane.b32.xlu0 %v2527, 122
          %v2531 = vpop.permute.xlu0 %2530
          %v2534 = vadd.f32 %v2513, %v2529
          %v2535 = vadd.f32 %v2514, %v2531
          %s2536 = sld [smem:[#allocation9 + $0x5a]]
          %v2537 = vstv %s2536
          %v2538 = vmul.f32 %v1627, %v2537
          %v2539 = vmul.f32 %v1628, %v2537
          %v2540 = vmul.f32 %v1629, %v2537
          %v2544 = vrot.slane %v2538, 5
          %v2545 = vrot.slane %v2539, 5
          %v2546 = vsel %vm759, %v2544, %v2545
          %v2547 = vrot.slane %v2540, 5
          %v2548 = vsel %vm759, %v2545, %v2547
          %2549 = vrot.lane.b32.xlu0 %v2546, 122
          %v2550 = vpop.permute.xlu0 %2549
          %2551 = vrot.lane.b32.xlu0 %v2548, 122
          %v2552 = vpop.permute.xlu0 %2551
          %v2555 = vadd.f32 %v2534, %v2550
          %v2556 = vadd.f32 %v2535, %v2552
          %s2557 = sld [smem:[#allocation9 + $0x61]]
          %v2558 = vstv %s2557
          %v2559 = vmul.f32 %v1627, %v2558
          %v2560 = vmul.f32 %v1628, %v2558
          %v2561 = vmul.f32 %v1629, %v2558
          %v2565 = vrot.slane %v2559, 6
          %v2566 = vrot.slane %v2560, 6
          %v2567 = vsel %vm777, %v2565, %v2566
          %v2568 = vrot.slane %v2561, 6
          %v2569 = vsel %vm777, %v2566, %v2568
          %2570 = vrot.lane.b32.xlu0 %v2567, 122
          %v2571 = vpop.permute.xlu0 %2570
          %2572 = vrot.lane.b32.xlu0 %v2569, 122
          %v2573 = vpop.permute.xlu0 %2572
          %v2576 = vadd.f32 %v2555, %v2571
          %v2577 = vadd.f32 %v2556, %v2573
          %v2578 = vsub.f32 0.0, %v2576
          %v2579 = vsub.f32 0.0, %v2577
          %v2580 = vmul.f32 %v2578, 1.442695
          %v2581 = vpow.pop %v2580
          %v2582 = vmul.f32 %v2579, 1.442695
          %v2583 = vpow.pop %v2582
          %v2584 = vadd.f32 %v2581, 1.0
          %v2585 = vadd.f32 %v2583, 1.0
          %v2586 = vrcp.pop %v2584
          %v2587 = vmul.f32 1.0, %v2586
          %v2588 = vrcp.pop %v2585
          %v2589 = vmul.f32 1.0, %v2588
          %vm2590 = vcmp.lt.s32.totalorder %v270, 16
          %vm2591 = vmand %vm271, %vm2590
          %2592 = vst.msk [vmem:[%s192] sm:$0x1] %vm2591, %v2587
          %v2595 = vunpack.c.l.s4 1966171168
          %v2596 = vunpack.c.0.s8 %v2595
          %v2597 = vlaneseq
          %v2598 = vshrl.u32 %v2597, 7
          %v2599 = vsub.s32 %v2596, %v2598
          %v2600 = vrot.slane %v2587, %v2599
          %v2601 = vcombine.high %v2600, %v2600
          %v2603 = vunpack.c.l.s4 1966171168
          %v2604 = vunpack.c.0.s8 %v2603
          %v2605 = vlaneseq
          %v2606 = vshrl.u32 %v2605, 7
          %v2607 = vsub.s32 %v2604, %v2606
          %v2608 = vrot.slane %v2600, %v2607
          %v2610 = vunpack.c.l.s4 1966171168
          %v2611 = vunpack.c.0.s8 %v2610
          %v2612 = vlaneseq
          %v2613 = vshrl.u32 %v2612, 7
          %v2614 = vsub.s32 %v2611, %v2613
          %v2615 = vrot.slane %v2601, %v2614
          %2616 = vrot.lane.b32.xlu0 %v2615, 16
          %v2617 = vpop.permute.xlu0 %2616
          %vm2619 = vcmp.ge.s32.totalorder %v270, 16
          %vm2620 = vcmp.lt.s32.totalorder %v270, 32
          %vm2621 = vmand %vm2619, %vm2620
          %2622 = vst.msk [vmem:[%s192] sm:$0x1] %vm2621, %v2617
          %v2623 = vcombine.high %v2608, %v2608
          %2624 = vrot.lane.b32.xlu0 %v2623, 32
          %v2625 = vpop.permute.xlu0 %2624
          %vm2627 = vcmp.ge.s32.totalorder %v270, 32
          %vm2628 = vcmp.lt.s32.totalorder %v270, 48
          %vm2629 = vmand %vm2627, %vm2628
          %2630 = vst.msk [vmem:[%s192] sm:$0x1] %vm2629, %v2625
          %v2631 = vcombine.high %v2615, %v2615
          %2632 = vrot.lane.b32.xlu0 %v2631, 48
          %v2633 = vpop.permute.xlu0 %2632
          %vm2635 = vcmp.ge.s32.totalorder %v270, 48
          %vm2636 = vcmp.lt.s32.totalorder %v270, 64
          %vm2637 = vmand %vm2635, %vm2636
          %2638 = vst.msk [vmem:[%s192] sm:$0x1] %vm2637, %v2633
          %v2639 = vcombine.high %v2587, %v2587
          %v2641 = vunpack.c.l.s4 1966171168
          %v2642 = vunpack.c.0.s8 %v2641
          %v2643 = vlaneseq
          %v2644 = vshrl.u32 %v2643, 7
          %v2645 = vsub.s32 %v2642, %v2644
          %v2646 = vrot.slane %v2639, %v2645
          %v2648 = vunpack.c.l.s4 1966171168
          %v2649 = vunpack.c.0.s8 %v2648
          %v2650 = vlaneseq
          %v2651 = vshrl.u32 %v2650, 7
          %v2652 = vsub.s32 %v2649, %v2651
          %v2653 = vrot.slane %v2646, %v2652
          %2654 = vrot.lane.b32.xlu0 %v2653, 64
          %v2655 = vpop.permute.xlu0 %2654
          %vm2657 = vcmp.ge.s32.totalorder %v270, 64
          %vm2658 = vcmp.lt.s32.totalorder %v270, 80
          %vm2659 = vmand %vm2657, %vm2658
          %2660 = vst.msk [vmem:[%s192] sm:$0x1] %vm2659, %v2655
          %v2661 = vcombine.high %v2646, %v2646
          %v2663 = vunpack.c.l.s4 1966171168
          %v2664 = vunpack.c.0.s8 %v2663
          %v2665 = vlaneseq
          %v2666 = vshrl.u32 %v2665, 7
          %v2667 = vsub.s32 %v2664, %v2666
          %v2668 = vrot.slane %v2661, %v2667
          %2669 = vrot.lane.b32.xlu0 %v2668, 80
          %v2670 = vpop.permute.xlu0 %2669
          %vm2672 = vcmp.ge.s32.totalorder %v270, 80
          %vm2673 = vcmp.lt.s32.totalorder %v270, 96
          %vm2674 = vmand %vm2672, %vm2673
          %2675 = vst.msk [vmem:[%s192] sm:$0x1] %vm2674, %v2670
          %v2676 = vcombine.high %v2653, %v2653
          %2677 = vrot.lane.b32.xlu0 %v2676, 96
          %v2678 = vpop.permute.xlu0 %2677
          %vm2680 = vcmp.ge.s32.totalorder %v270, 96
          %vm2681 = vcmp.lt.s32.totalorder %v270, 112
          %vm2682 = vmand %vm2680, %vm2681
          %2683 = vst.msk [vmem:[%s192] sm:$0x1] %vm2682, %v2678
          %v2684 = vcombine.high %v2668, %v2668
          %2685 = vrot.lane.b32.xlu0 %v2684, 112
          %v2686 = vpop.permute.xlu0 %2685
          %vm2688 = vcmp.ge.s32.totalorder %v270, 112
          %vm2689 = vcmp.lt.s32.totalorder %v270, 128
          %vm2690 = vmand %vm2688, %vm2689
          %2691 = vst.msk [vmem:[%s192] sm:$0x1] %vm2690, %v2686
          %2692 = vst.msk [vmem:[%s192 + $0x1] sm:$0x1] %vm2591, %v2589
          %v2695 = vunpack.c.l.s4 1966171168
          %v2696 = vunpack.c.0.s8 %v2695
          %v2697 = vlaneseq
          %v2698 = vshrl.u32 %v2697, 7
          %v2699 = vsub.s32 %v2696, %v2698
          %v2700 = vrot.slane %v2589, %v2699
          %v2701 = vcombine.high %v2700, %v2700
          %v2703 = vunpack.c.l.s4 1966171168
          %v2704 = vunpack.c.0.s8 %v2703
          %v2705 = vlaneseq
          %v2706 = vshrl.u32 %v2705, 7
          %v2707 = vsub.s32 %v2704, %v2706
          %v2708 = vrot.slane %v2700, %v2707
          %v2710 = vunpack.c.l.s4 1966171168
          %v2711 = vunpack.c.0.s8 %v2710
          %v2712 = vlaneseq
          %v2713 = vshrl.u32 %v2712, 7
          %v2714 = vsub.s32 %v2711, %v2713
          %v2715 = vrot.slane %v2701, %v2714
          %2716 = vrot.lane.b32.xlu0 %v2715, 16
          %v2717 = vpop.permute.xlu0 %2716
          %2719 = vst.msk [vmem:[%s192 + $0x1] sm:$0x1] %vm2621, %v2717
          %v2720 = vcombine.high %v2708, %v2708
          %2721 = vrot.lane.b32.xlu0 %v2720, 32
          %v2722 = vpop.permute.xlu0 %2721
          %2724 = vst.msk [vmem:[%s192 + $0x1] sm:$0x1] %vm2629, %v2722
          %v2725 = vcombine.high %v2715, %v2715
          %2726 = vrot.lane.b32.xlu0 %v2725, 48
          %v2727 = vpop.permute.xlu0 %2726
          %2729 = vst.msk [vmem:[%s192 + $0x1] sm:$0x1] %vm2637, %v2727
          %v2730 = vcombine.high %v2589, %v2589
          %v2732 = vunpack.c.l.s4 1966171168
          %v2733 = vunpack.c.0.s8 %v2732
          %v2734 = vlaneseq
          %v2735 = vshrl.u32 %v2734, 7
          %v2736 = vsub.s32 %v2733, %v2735
          %v2737 = vrot.slane %v2730, %v2736
          %v2739 = vunpack.c.l.s4 1966171168
          %v2740 = vunpack.c.0.s8 %v2739
          %v2741 = vlaneseq
          %v2742 = vshrl.u32 %v2741, 7
          %v2743 = vsub.s32 %v2740, %v2742
          %v2744 = vrot.slane %v2737, %v2743
          %2745 = vrot.lane.b32.xlu0 %v2744, 64
          %v2746 = vpop.permute.xlu0 %2745
          %2748 = vst.msk [vmem:[%s192 + $0x1] sm:$0x1] %vm2659, %v2746
          %v2749 = vcombine.high %v2737, %v2737
          %v2751 = vunpack.c.l.s4 1966171168
          %v2752 = vunpack.c.0.s8 %v2751
          %v2753 = vlaneseq
          %v2754 = vshrl.u32 %v2753, 7
          %v2755 = vsub.s32 %v2752, %v2754
          %v2756 = vrot.slane %v2749, %v2755
          %2757 = vrot.lane.b32.xlu0 %v2756, 80
          %v2758 = vpop.permute.xlu0 %2757
          %2760 = vst.msk [vmem:[%s192 + $0x1] sm:$0x1] %vm2674, %v2758
          %v2761 = vcombine.high %v2744, %v2744
          %2762 = vrot.lane.b32.xlu0 %v2761, 96
          %v2763 = vpop.permute.xlu0 %2762
          %2765 = vst.msk [vmem:[%s192 + $0x1] sm:$0x1] %vm2682, %v2763
          %v2766 = vcombine.high %v2756, %v2756
          %2767 = vrot.lane.b32.xlu0 %v2766, 112
          %v2768 = vpop.permute.xlu0 %2767
          %2770 = vst.msk [vmem:[%s192 + $0x1] sm:$0x1] %vm2690, %v2768
        $region44: #{tpu_custom_call.1} parent=27 // pred_fallthru
          _
        %s2771 = sand.u32 %s89, 1
        %s2772 = scalar_lea.sflag [#allocation7], %s2771
        %s2773 = sand.u32 %s89, 1
        %s2774 = smul.addr %s2773, 2
        %s2775 = scalar_lea.vmem [#allocation10], %s2774
        // Predicated region
        $region45: #{tpu_custom_call.1} parent=27 // pred_check
          %p2776 = pneg %p99
        $region46: #{tpu_custom_call.1} parent=27 // pred_check_branch
          %2778 = sbr.rel (%p2776) target = $region48
        $region47: #{tpu_custom_call.1} parent=27 // pred_region
          %s2780 = ssub.s32 32, 32
          %2781 = vsyncadd %s2772, %s2780
          %s2782 = smul.addr %s24, 2
          %s2783 = smul.addr %s2782, 16
          %s2784 = scalar_lea.hbm %s2, %s2783
          %s2786 = sshll.u32 %s2775, 4
          %s2787 = int_to_ptr.vmem [resolvable:$true] %s2786
          %2789 = dma.vmem_to_hbm [thread:$0]  %s2787, 32, %s2784, %s2772
        $region48: #{tpu_custom_call.1} parent=27 // pred_fallthru
          _
      $region28: #{tpu_custom_call.1} parent=5 // pred_fallthru
        _
      %p2790 = scmp.le.s32.totalorder 2, %s15
      // Predicated region
      $region49: #{tpu_custom_call.1} parent=5 // pred_check
        %p2791 = pneg %p2790
      $region50: #{tpu_custom_call.1} parent=5 // pred_check_branch
        %2793 = sbr.rel (%p2791) target = $region52
      $region51: #{tpu_custom_call.1} parent=5 // pred_region
        %s2794 = ssub.s32 %s15, 2
        // Predicated region
        $region53: #{tpu_custom_call.1} parent=51 // pred_check
          %p2795 = pneg %p105
        $region54: #{tpu_custom_call.1} parent=51 // pred_check_branch
          %2797 = sbr.rel (%p2795) target = $region56
        $region55: #{tpu_custom_call.1} parent=51 // pred_region
          %s2798 = sand.u32 %s90, 1
          %s2799 = scalar_lea.sflag [#allocation7], %s2798
          %s2800 = sand.u32 %s90, 1
          %s2801 = smul.addr %s2800, 2
          %s2802 = scalar_lea.vmem [#allocation10], %s2801
          %2803 = dma.done %s2799, 32
        $region56: #{tpu_custom_call.1} parent=51 // pred_fallthru
          _
      $region52: #{tpu_custom_call.1} parent=5 // pred_fallthru
        _
    $region6: #{tpu_custom_call.1} parent=1 // loop_footer
      %s19 = sadd.s32 1, %s15
    $region7: #{tpu_custom_call.1} parent=1 // loop_footer_branch
      %14 = sbr.rel target = $region3
    $region8: #{tpu_custom_call.1} parent=1 // loop_exit
      _
    %2804 = vsyncpa [#allocation6], 1
    %s2805 = scalar_lea.sflag [#allocation6], 1
    %2806 = vsyncpa %s2805, 1
    %2807 = vsyncpa [#allocation7], 1
    %s2808 = scalar_lea.sflag [#allocation7], 1
    %2809 = vsyncpa %s2808, 1
    %2810 = vsyncpa [#allocation8], 1
    %s2811 = scalar_lea.sflag [#allocation8], 1
    %2812 = vsyncpa %s2811, 1

</llo_original>
